<compile_context>
chip_gen: v7x
topology: tpu7x:2x2x1
jax: 0.10.0
libtpu: 0.0.40
codegen_flags: <defaults>
</compile_context>

<pallas_src>
import functools

import jax
import jax.numpy as jnp
from jax import lax
from jax.experimental import pallas as pl
from jax.experimental.pallas import tpu as pltpu


# ------------------------------ fused kernel --------------------------------

def _make_stgcn_kernel(cfg):
    """Returns a kernel closure for the full STGCN forward on one batch block."""
    Kt, Ks, Ko = cfg["Kt"], cfg["Ks"], cfg["Ko"]
    N, T0, n_st, Bb = cfg["N"], cfg["T"], cfg["n_st"], cfg["Bb"]

    def temporal_glu(xf3, t_cur, kt, w_ref, b_ref):
        """Causal temporal conv (kernel (kt,1)) + GLU.

        xf3: (Bb, t_cur*N, Cin), frame-major rows per batch element.
        w_ref: (kt, Cin, 2*Cout) fused [p | q] taps; the 1x1 residual align is
        pre-folded into tap kt-1 of the p half.  b_ref: (1, 2*Cout).
        Returns ((Bb, t_out*N, Cout), t_out).
        """
        t_out = t_cur - kt + 1
        rows = t_out * N
        c_in = xf3.shape[-1]
        c_out = w_ref.shape[2] // 2
        m = Bb * rows
        xb = xf3.astype(jnp.bfloat16)                 # MXU operands in bf16
        acc = jnp.dot(xb[:, :rows, :].reshape(m, c_in), w_ref[0],
                      preferred_element_type=jnp.float32)
        for k in range(1, kt):                        # static unroll over taps
            x_k = xb[:, k * N:k * N + rows, :].reshape(m, c_in)
            acc = acc + jnp.dot(x_k, w_ref[k],
                                preferred_element_type=jnp.float32)
        acc = acc + b_ref[...]
        # (p + aligned residual) * sigmoid(q); residual already inside p.
        y = acc[:, :c_out] * jax.nn.sigmoid(acc[:, c_out:])
        return y.reshape(Bb, rows, c_out), t_out

    def cheb_graph_conv(xf3, t_cur, gso_ref, gaw_ref, gab_ref, gw_ref, gb_ref):
        """Chebyshev graph conv (+bias; residual folded into gw[0]) + ReLU."""
        rows = t_cur * N
        m = Bb * rows
        c_in = xf3.shape[-1]
        c_g = gaw_ref.shape[1]
        bt = Bb * t_cur
        dn = (((2,), (1,)), ((0,), (0,)))             # per-frame gso @ x

        def dot_w(x3_f32, w2):                        # (bt,N,c_g) @ (c_g,c_g)
            return jnp.dot(x3_f32.reshape(m, c_g).astype(jnp.bfloat16), w2,
                           preferred_element_type=jnp.float32)

        def gso_apply(gso_b, x3):                     # batched (N,N)@(N,c_g)
            return lax.dot_general(gso_b, x3.astype(jnp.bfloat16), dn,
                                   preferred_element_type=jnp.float32)

        x2 = xf3.reshape(m, c_in).astype(jnp.bfloat16)
        xa = jnp.dot(x2, gaw_ref[...],
                     preferred_element_type=jnp.float32) + gab_ref[...]
        # k = 0 term; the `+ xa` residual is folded into gw[0] (+= I) at init.
        acc = jnp.dot(xa.astype(jnp.bfloat16), gw_ref[0],
                      preferred_element_type=jnp.float32)
        if Ks >= 2:
            gso_b = jnp.broadcast_to(gso_ref[...], (bt, N, N))  # bf16, hoisted
            t_km2 = xa.reshape(bt, N, c_g)                      # T_0 (f32)
            t_km1 = gso_apply(gso_b, t_km2)                     # T_1 (f32)
            acc = acc + dot_w(t_km1, gw_ref[1])
            for kk in range(2, Ks):                             # static unroll
                t_k = 2.0 * gso_apply(gso_b, t_km1) - t_km2
                acc = acc + dot_w(t_k, gw_ref[kk])
                t_km2, t_km1 = t_km1, t_k
        y = jnp.maximum(acc + gb_ref[...], 0.0)
        return y.reshape(Bb, rows, c_g)

    def layer_norm(xf3, t_cur, g_ref, b_ref, eps=1e-5):
        """nn.LayerNorm([N, C]) per (batch, frame) on row-flattened data."""
        c = xf3.shape[-1]
        x4 = xf3.reshape(Bb * t_cur, N, c)
        denom = 1.0 / float(N * c)
        mu = jnp.sum(jnp.sum(x4, axis=2, keepdims=True),
                     axis=1, keepdims=True) * denom
        xc = x4 - mu
        var = jnp.sum(jnp.sum(xc * xc, axis=2, keepdims=True),
                      axis=1, keepdims=True) * denom
        inv = lax.rsqrt(var + eps)
        y = xc * inv * g_ref[...][None] + b_ref[...][None]
        return y.reshape(Bb, t_cur * N, c)

    def kernel(*refs):
        out_ref = refs[-1]
        it = iter(refs[:-1])
        x_ref = next(it)
        gso_ref = next(it)

        xf = x_ref[...].astype(jnp.float32)           # (Bb, T*N, C0)
        t_cur = T0

        for _ in range(n_st):
            (wt1, bt1, gaw, gab, gw, gb,
             wt2, bt2, lng, lnb) = (next(it) for _ in range(10))
            xf, t_cur = temporal_glu(xf, t_cur, Kt, wt1, bt1)
            xf = cheb_graph_conv(xf, t_cur, gso_ref, gaw, gab, gw, gb)
            xf, t_cur = temporal_glu(xf, t_cur, Kt, wt2, bt2)
            xf = layer_norm(xf, t_cur, lng, lnb)      # dropout = identity

        if Ko > 1:
            (wto, bto, olng, olnb,
             f1w, f1b, f2w, f2b) = (next(it) for _ in range(8))
            xf, t_cur = temporal_glu(xf, t_cur, Ko, wto, bto)   # time dim -> 1
            xf = layer_norm(xf, t_cur, olng, olnb)
            m = Bb * t_cur * N
            h2 = xf.reshape(m, xf.shape[-1]).astype(jnp.bfloat16)
            h = jnp.maximum(
                jnp.dot(h2, f1w[...],
                        preferred_element_type=jnp.float32) + f1b[...], 0.0)
            y = jnp.dot(h.astype(jnp.bfloat16), f2w[...],
                        preferred_element_type=jnp.float32) + f2b[...]
            xf = y.reshape(Bb, t_cur * N, y.shape[-1])
        # TODO(synk): Ko == 0 head (fc1/ReLU/fc2 on a zero-length time axis)
        # and the Ko == 1 pass-through are degenerate configs, not lowered.

        out_ref[...] = xf.astype(out_ref.dtype)

    return kernel


def _const_index_map(ndim, b):
    return (0,) * ndim


def _pick_batch_block(batch):
    """Largest block <= min(8, batch//2) dividing batch (keeps grid >= 2)."""
    cap = max(1, min(8, batch // 2))
    for bb in range(cap, 0, -1):
        if batch % bb == 0:
            return bb
    return 1


# ------------------------------ model wrapper --------------------------------

def stgcn_cheb_graph_conv(x_nchw, params, batch_block=None):
    cfg = params["cfg"]
    flat = params["flat"]
    gso = params["gso"]
    N, T, Ko, end_c = cfg["N"], cfg["T"], cfg["Ko"], cfg["end_c"]
    B, c0 = x_nchw.shape[0], x_nchw.shape[1]

    if Ko <= 1:
        # TODO(synk): Ko <= 1 output paths not lowered (degenerate time axis).
        raise NotImplementedError("only Ko > 1 is implemented")

    Bb = _pick_batch_block(B) if batch_block is None else batch_block
    assert B % Bb == 0, (B, Bb)
    cfg = dict(cfg, Bb=Bb)

    # PyTorch NCHW (B, C, T, N) -> row-flattened frame-major (B, T*N, C).
    x = jnp.transpose(x_nchw, (0, 2, 3, 1)).reshape(B, T * N, c0)

    t_final = 1
    # Weights/gso have constant block indices across the grid (loaded once).
    in_specs = [pl.BlockSpec((Bb, T * N, c0), lambda b: (b, 0, 0)),
                pl.BlockSpec(gso.shape,
                             functools.partial(_const_index_map, gso.ndim))]
    for a in flat:
        in_specs.append(
            pl.BlockSpec(a.shape, functools.partial(_const_index_map, a.ndim)))

    out = pl.pallas_call(
        _make_stgcn_kernel(cfg),
        out_shape=jax.ShapeDtypeStruct((B, t_final * N, end_c), x.dtype),
        grid=(B // Bb,),
        in_specs=in_specs,
        out_specs=pl.BlockSpec((Bb, t_final * N, end_c), lambda b: (b, 0, 0)),
        compiler_params=pltpu.CompilerParams(
            dimension_semantics=("parallel",),     # 2-way TC split on v7x
            vmem_limit_bytes=32 * 1024 * 1024),    # explicit scoped-VMEM limit
    )(x, gso, *flat)

    # back to NCHW: (B, T_out, N, C_out) -> (B, C_out, T_out, N)
    return jnp.transpose(out.reshape(B, t_final, N, end_c), (0, 3, 1, 2))


# ------------------------------ parameter init -------------------------------

def init_params(key, Kt, Ks, blocks, T, n_vertex,
                dtype=jnp.float32, mm_dtype=jnp.bfloat16):
    n_st = len(blocks) - 3
    Ko = T - n_st * 2 * (Kt - 1)
    keys = iter(jax.random.split(key, 256))

    def nrm(shape, scale=0.1):
        return scale * jax.random.normal(next(keys), shape, dtype=jnp.float32)

    # symmetric graph-shift operator (stand-in for the precomputed gso arg)
    a = jax.random.uniform(next(keys), (n_vertex, n_vertex), dtype=jnp.float32)
    gso = (a + a.T) / (2.0 * n_vertex)

    def align_mats(c_in, c_out):
        # c_in > c_out: learned 1x1 conv; c_in <= c_out: zero-pad channels.
        if c_in > c_out:
            return nrm((c_in, c_out)), nrm((1, c_out))
        w = jnp.zeros((c_in, c_out), jnp.float32).at[:, :c_in].set(
            jnp.eye(c_in, dtype=jnp.float32))
        return w, jnp.zeros((1, c_out), jnp.float32)

    def temporal_mats(c_in, c_out, k):
        # Fused GLU taps, columns [p | q]; the 1x1 residual align (and bias)
        # are folded into tap k-1 of the p half -> no in-kernel residual dot.
        wp, wq = nrm((k, c_in, c_out)), nrm((k, c_in, c_out))
        bp, bq = nrm((1, c_out)), nrm((1, c_out))
        aw, ab = align_mats(c_in, c_out)
        wp = wp.at[k - 1].add(aw)
        bp = bp + ab
        w = jnp.concatenate([wp, wq], axis=-1)            # (k, c_in, 2*c_out)
        b = jnp.concatenate([bp, bq], axis=-1)            # (1, 2*c_out)
        return [w.astype(mm_dtype), b.astype(dtype)]

    flat = []
    for l in range(n_st):
        c_prev = blocks[l][-1]
        ch = blocks[l + 1]
        flat += temporal_mats(c_prev, ch[0], Kt)              # temporal conv 1
        gaw, gab = align_mats(ch[0], ch[1])                   # graph conv
        gw = nrm((Ks, ch[1], ch[1]))
        gw = gw.at[0].add(jnp.eye(ch[1], dtype=jnp.float32))  # fold + residual
        gb = nrm((1, ch[1]))
        flat += [gaw.astype(mm_dtype), gab.astype(dtype),
                 gw.astype(mm_dtype), gb.astype(dtype)]
        flat += temporal_mats(ch[1], ch[2], Kt)               # temporal conv 2
        flat += [jnp.ones((n_vertex, ch[2]), dtype),          # layer norm
                 jnp.zeros((n_vertex, ch[2]), dtype)]

    end_c = blocks[-1][0]
    if Ko > 1:
        cho = blocks[-2]
        flat += temporal_mats(blocks[-3][-1], cho[0], Ko)
        flat += [jnp.ones((n_vertex, cho[0]), dtype),
                 jnp.zeros((n_vertex, cho[0]), dtype)]
        flat += [nrm((cho[0], cho[1])).astype(mm_dtype),
                 nrm((1, cho[1])).astype(dtype),
                 nrm((cho[1], end_c)).astype(mm_dtype),
                 nrm((1, end_c)).astype(dtype)]
    # TODO(synk): Ko == 0 fc-only head parameters not built (path not lowered).

    cfg = {"Kt": Kt, "Ks": Ks, "Ko": Ko, "N": n_vertex, "T": T,
           "n_st": n_st, "end_c": end_c}
    return {"cfg": cfg, "flat": flat, "gso": gso.astype(mm_dtype)}


# ----------------------------------- main ------------------------------------

if __name__ == "__main__":
    Kt, Ks, T, n_vertex = 3, 3, 8, 16
    blocks = [[2], [16, 8, 16], [32, 32], [1]]        # one ST block -> Ko = 4
    # act_func='glu', graph_conv_type='cheb_graph_conv', bias=True, droprate=0.5

    key = jax.random.PRNGKey(0)
    k_param, k_x = jax.random.split(key)
    params = init_params(k_param, Kt, Ks, blocks, T, n_vertex)

    B = 4                                             # Bb=2 -> grid=(2,)
    x = jax.random.normal(k_x, (B, blocks[0][0], T, n_vertex),
                          dtype=jnp.float32)

    fwd = jax.jit(lambda xx: stgcn_cheb_graph_conv(xx, params))
    y = jax.block_until_ready(fwd(x))

    assert y.shape == (B, blocks[-1][0], 1, n_vertex), y.shape
    assert bool(jnp.all(jnp.isfinite(y)))
    print("KERNEL_OK")
</pallas_src>

<mosaic_0001>
module attributes {stable_mosaic.version = 11 : i64} {
  func.func @kernel(%arg0: i32, %arg1: memref<2x128x2xf32, #tpu.memory_space<vmem>>, %arg2: memref<16x16xbf16, #tpu.memory_space<vmem>>, %arg3: memref<3x2x32xbf16, #tpu.memory_space<vmem>>, %arg4: memref<1x32xf32, #tpu.memory_space<vmem>>, %arg5: memref<16x8xbf16, #tpu.memory_space<vmem>>, %arg6: memref<1x8xf32, #tpu.memory_space<vmem>>, %arg7: memref<3x8x8xbf16, #tpu.memory_space<vmem>>, %arg8: memref<1x8xf32, #tpu.memory_space<vmem>>, %arg9: memref<3x8x32xbf16, #tpu.memory_space<vmem>>, %arg10: memref<1x32xf32, #tpu.memory_space<vmem>>, %arg11: memref<16x16xf32, #tpu.memory_space<vmem>>, %arg12: memref<16x16xf32, #tpu.memory_space<vmem>>, %arg13: memref<4x16x64xbf16, #tpu.memory_space<vmem>>, %arg14: memref<1x64xf32, #tpu.memory_space<vmem>>, %arg15: memref<16x32xf32, #tpu.memory_space<vmem>>, %arg16: memref<16x32xf32, #tpu.memory_space<vmem>>, %arg17: memref<32x32xbf16, #tpu.memory_space<vmem>>, %arg18: memref<1x32xf32, #tpu.memory_space<vmem>>, %arg19: memref<32x1xbf16, #tpu.memory_space<vmem>>, %arg20: memref<1x1xf32, #tpu.memory_space<vmem>>, %arg21: memref<2x16x1xf32, #tpu.memory_space<vmem>>) attributes {dimension_semantics = [#tpu.dimension_semantics<parallel>], iteration_bounds = array<i64: 2>, scalar_prefetch = 0 : i64, scratch_operands = 0 : i64, tpu.core_type = #tpu.core_type<tc>, window_params = [{transform_indices = @transform_0, window_bounds = array<i64: 2, 128, 2>}, {pipeline_mode = #tpu.pipeline_mode<synchronous>, transform_indices = @transform_1, window_bounds = array<i64: 16, 16>}, {pipeline_mode = #tpu.pipeline_mode<synchronous>, transform_indices = @transform_2, window_bounds = array<i64: 3, 2, 32>}, {pipeline_mode = #tpu.pipeline_mode<synchronous>, transform_indices = @transform_3, window_bounds = array<i64: 1, 32>}, {pipeline_mode = #tpu.pipeline_mode<synchronous>, transform_indices = @transform_4, window_bounds = array<i64: 16, 8>}, {pipeline_mode = #tpu.pipeline_mode<synchronous>, transform_indices = @transform_5, window_bounds = array<i64: 1, 8>}, {pipeline_mode = #tpu.pipeline_mode<synchronous>, transform_indices = @transform_6, window_bounds = array<i64: 3, 8, 8>}, {pipeline_mode = #tpu.pipeline_mode<synchronous>, transform_indices = @transform_7, window_bounds = array<i64: 1, 8>}, {pipeline_mode = #tpu.pipeline_mode<synchronous>, transform_indices = @transform_8, window_bounds = array<i64: 3, 8, 32>}, {pipeline_mode = #tpu.pipeline_mode<synchronous>, transform_indices = @transform_9, window_bounds = array<i64: 1, 32>}, {pipeline_mode = #tpu.pipeline_mode<synchronous>, transform_indices = @transform_10, window_bounds = array<i64: 16, 16>}, {pipeline_mode = #tpu.pipeline_mode<synchronous>, transform_indices = @transform_11, window_bounds = array<i64: 16, 16>}, {pipeline_mode = #tpu.pipeline_mode<synchronous>, transform_indices = @transform_12, window_bounds = array<i64: 4, 16, 64>}, {pipeline_mode = #tpu.pipeline_mode<synchronous>, transform_indices = @transform_13, window_bounds = array<i64: 1, 64>}, {pipeline_mode = #tpu.pipeline_mode<synchronous>, transform_indices = @transform_14, window_bounds = array<i64: 16, 32>}, {pipeline_mode = #tpu.pipeline_mode<synchronous>, transform_indices = @transform_15, window_bounds = array<i64: 16, 32>}, {pipeline_mode = #tpu.pipeline_mode<synchronous>, transform_indices = @transform_16, window_bounds = array<i64: 32, 32>}, {pipeline_mode = #tpu.pipeline_mode<synchronous>, transform_indices = @transform_17, window_bounds = array<i64: 1, 32>}, {pipeline_mode = #tpu.pipeline_mode<synchronous>, transform_indices = @transform_18, window_bounds = array<i64: 32, 1>}, {pipeline_mode = #tpu.pipeline_mode<synchronous>, transform_indices = @transform_19, window_bounds = array<i64: 1, 1>}, {transform_indices = @transform_20, window_bounds = array<i64: 2, 16, 1>}]} {
    %c0 = arith.constant 0 : index
    %c0_0 = arith.constant 0 : index
    %c0_1 = arith.constant 0 : index
    %0 = vector.load %arg1[%c0, %c0_0, %c0_1] : memref<2x128x2xf32, #tpu.memory_space<vmem>>, vector<2x128x2xf32>
    %1 = arith.truncf %0 : vector<2x128x2xf32> to vector<2x128x2xbf16>
    %2 = vector.extract_strided_slice %1 {offsets = [0, 0, 0], sizes = [2, 96, 2], strides = [1, 1, 1]} : vector<2x128x2xbf16> to vector<2x96x2xbf16>
    %3 = vector.shape_cast %2 : vector<2x96x2xbf16> to vector<192x2xbf16>
    %c0_2 = arith.constant 0 : index
    %c0_3 = arith.constant 0 : index
    %c0_4 = arith.constant 0 : index
    %4 = vector.load %arg3[%c0_2, %c0_3, %c0_4] : memref<3x2x32xbf16, #tpu.memory_space<vmem>>, vector<1x2x32xbf16>
    %5 = vector.shape_cast %4 : vector<1x2x32xbf16> to vector<2x32xbf16>
    %cst = arith.constant dense<0.000000e+00> : vector<192x32xf32>
    %6 = tpu.matmul %3, %5, %cst {dimension_numbers = #tpu.dot_dimension_numbers<[1], [0], [0], [1], [0, 0, 1, 1], [], []>} : vector<192x2xbf16>, vector<2x32xbf16>, vector<192x32xf32> -> vector<192x32xf32>
    %7 = vector.extract_strided_slice %1 {offsets = [0, 16, 0], sizes = [2, 96, 2], strides = [1, 1, 1]} : vector<2x128x2xbf16> to vector<2x96x2xbf16>
    %8 = vector.shape_cast %7 : vector<2x96x2xbf16> to vector<192x2xbf16>
    %c1 = arith.constant 1 : index
    %c0_5 = arith.constant 0 : index
    %c0_6 = arith.constant 0 : index
    %9 = vector.load %arg3[%c1, %c0_5, %c0_6] : memref<3x2x32xbf16, #tpu.memory_space<vmem>>, vector<1x2x32xbf16>
    %10 = vector.shape_cast %9 : vector<1x2x32xbf16> to vector<2x32xbf16>
    %cst_7 = arith.constant dense<0.000000e+00> : vector<192x32xf32>
    %11 = tpu.matmul %8, %10, %cst_7 {dimension_numbers = #tpu.dot_dimension_numbers<[1], [0], [0], [1], [0, 0, 1, 1], [], []>} : vector<192x2xbf16>, vector<2x32xbf16>, vector<192x32xf32> -> vector<192x32xf32>
    %12 = arith.addf %6, %11 : vector<192x32xf32>
    %13 = vector.extract_strided_slice %1 {offsets = [0, 32, 0], sizes = [2, 96, 2], strides = [1, 1, 1]} : vector<2x128x2xbf16> to vector<2x96x2xbf16>
    %14 = vector.shape_cast %13 : vector<2x96x2xbf16> to vector<192x2xbf16>
    %c2 = arith.constant 2 : index
    %c0_8 = arith.constant 0 : index
    %c0_9 = arith.constant 0 : index
    %15 = vector.load %arg3[%c2, %c0_8, %c0_9] : memref<3x2x32xbf16, #tpu.memory_space<vmem>>, vector<1x2x32xbf16>
    %16 = vector.shape_cast %15 : vector<1x2x32xbf16> to vector<2x32xbf16>
    %cst_10 = arith.constant dense<0.000000e+00> : vector<192x32xf32>
    %17 = tpu.matmul %14, %16, %cst_10 {dimension_numbers = #tpu.dot_dimension_numbers<[1], [0], [0], [1], [0, 0, 1, 1], [], []>} : vector<192x2xbf16>, vector<2x32xbf16>, vector<192x32xf32> -> vector<192x32xf32>
    %18 = arith.addf %12, %17 : vector<192x32xf32>
    %c0_11 = arith.constant 0 : index
    %c0_12 = arith.constant 0 : index
    %19 = vector.load %arg4[%c0_11, %c0_12] : memref<1x32xf32, #tpu.memory_space<vmem>>, vector<1x32xf32>
    %20 = vector.broadcast %19 : vector<1x32xf32> to vector<192x32xf32>
    %21 = arith.addf %18, %20 : vector<192x32xf32>
    %22 = vector.extract_strided_slice %21 {offsets = [0, 0], sizes = [192, 16], strides = [1, 1]} : vector<192x32xf32> to vector<192x16xf32>
    %23 = vector.extract_strided_slice %21 {offsets = [0, 16], sizes = [192, 16], strides = [1, 1]} : vector<192x32xf32> to vector<192x16xf32>
    %24 = arith.negf %23 : vector<192x16xf32>
    %25 = math.exp %24 : vector<192x16xf32>
    %cst_13 = arith.constant 1.000000e+00 : f32
    %26 = vector.broadcast %cst_13 : f32 to vector<192x16xf32>
    %27 = arith.addf %26, %25 : vector<192x16xf32>
    %28 = arith.divf %26, %27 : vector<192x16xf32>
    %29 = arith.mulf %22, %28 : vector<192x16xf32>
    %30 = vector.shape_cast %29 : vector<192x16xf32> to vector<2x96x16xf32>
    %31 = vector.shape_cast %30 : vector<2x96x16xf32> to vector<192x16xf32>
    %32 = arith.truncf %31 : vector<192x16xf32> to vector<192x16xbf16>
    %c0_14 = arith.constant 0 : index
    %c0_15 = arith.constant 0 : index
    %33 = vector.load %arg5[%c0_14, %c0_15] : memref<16x8xbf16, #tpu.memory_space<vmem>>, vector<16x8xbf16>
    %cst_16 = arith.constant dense<0.000000e+00> : vector<192x8xf32>
    %34 = tpu.matmul %32, %33, %cst_16 {dimension_numbers = #tpu.dot_dimension_numbers<[1], [0], [0], [1], [0, 0, 1, 1], [], []>} : vector<192x16xbf16>, vector<16x8xbf16>, vector<192x8xf32> -> vector<192x8xf32>
    %c0_17 = arith.constant 0 : index
    %c0_18 = arith.constant 0 : index
    %35 = vector.load %arg6[%c0_17, %c0_18] : memref<1x8xf32, #tpu.memory_space<vmem>>, vector<1x8xf32>
    %36 = vector.broadcast %35 : vector<1x8xf32> to vector<192x8xf32>
    %37 = arith.addf %34, %36 : vector<192x8xf32>
    %38 = arith.truncf %37 : vector<192x8xf32> to vector<192x8xbf16>
    %c0_19 = arith.constant 0 : index
    %c0_20 = arith.constant 0 : index
    %c0_21 = arith.constant 0 : index
    %39 = vector.load %arg7[%c0_19, %c0_20, %c0_21] : memref<3x8x8xbf16, #tpu.memory_space<vmem>>, vector<1x8x8xbf16>
    %40 = vector.shape_cast %39 : vector<1x8x8xbf16> to vector<8x8xbf16>
    %cst_22 = arith.constant dense<0.000000e+00> : vector<192x8xf32>
    %41 = tpu.matmul %38, %40, %cst_22 {dimension_numbers = #tpu.dot_dimension_numbers<[1], [0], [0], [1], [0, 0, 1, 1], [], []>} : vector<192x8xbf16>, vector<8x8xbf16>, vector<192x8xf32> -> vector<192x8xf32>
    %c0_23 = arith.constant 0 : index
    %c0_24 = arith.constant 0 : index
    %42 = vector.load %arg2[%c0_23, %c0_24] : memref<16x16xbf16, #tpu.memory_space<vmem>>, vector<16x16xbf16>
    %43 = vector.shape_cast %42 : vector<16x16xbf16> to vector<1x16x16xbf16>
    %44 = vector.broadcast %43 : vector<1x16x16xbf16> to vector<12x16x16xbf16>
    %45 = vector.shape_cast %37 : vector<192x8xf32> to vector<12x16x8xf32>
    %46 = arith.truncf %45 : vector<12x16x8xf32> to vector<12x16x8xbf16>
    %cst_25 = arith.constant dense<0.000000e+00> : vector<12x16x8xf32>
    %47 = tpu.matmul %44, %46, %cst_25 {dimension_numbers = #tpu.dot_dimension_numbers<[2], [1], [1], [2], [0, 0, 0, 1, 1, 2], [0], [0]>} : vector<12x16x16xbf16>, vector<12x16x8xbf16>, vector<12x16x8xf32> -> vector<12x16x8xf32>
    %c1_26 = arith.constant 1 : index
    %c0_27 = arith.constant 0 : index
    %c0_28 = arith.constant 0 : index
    %48 = vector.load %arg7[%c1_26, %c0_27, %c0_28] : memref<3x8x8xbf16, #tpu.memory_space<vmem>>, vector<1x8x8xbf16>
    %49 = vector.shape_cast %48 : vector<1x8x8xbf16> to vector<8x8xbf16>
    %50 = vector.shape_cast %47 : vector<12x16x8xf32> to vector<192x8xf32>
    %51 = arith.truncf %50 : vector<192x8xf32> to vector<192x8xbf16>
    %cst_29 = arith.constant dense<0.000000e+00> : vector<192x8xf32>
    %52 = tpu.matmul %51, %49, %cst_29 {dimension_numbers = #tpu.dot_dimension_numbers<[1], [0], [0], [1], [0, 0, 1, 1], [], []>} : vector<192x8xbf16>, vector<8x8xbf16>, vector<192x8xf32> -> vector<192x8xf32>
    %53 = arith.addf %41, %52 : vector<192x8xf32>
    %54 = arith.truncf %47 : vector<12x16x8xf32> to vector<12x16x8xbf16>
    %cst_30 = arith.constant dense<0.000000e+00> : vector<12x16x8xf32>
    %55 = tpu.matmul %44, %54, %cst_30 {dimension_numbers = #tpu.dot_dimension_numbers<[2], [1], [1], [2], [0, 0, 0, 1, 1, 2], [0], [0]>} : vector<12x16x16xbf16>, vector<12x16x8xbf16>, vector<12x16x8xf32> -> vector<12x16x8xf32>
    %cst_31 = arith.constant 2.000000e+00 : f32
    %56 = vector.broadcast %cst_31 : f32 to vector<12x16x8xf32>
    %57 = arith.mulf %56, %55 : vector<12x16x8xf32>
    %58 = arith.subf %57, %45 : vector<12x16x8xf32>
    %c2_32 = arith.constant 2 : index
    %c0_33 = arith.constant 0 : index
    %c0_34 = arith.constant 0 : index
    %59 = vector.load %arg7[%c2_32, %c0_33, %c0_34] : memref<3x8x8xbf16, #tpu.memory_space<vmem>>, vector<1x8x8xbf16>
    %60 = vector.shape_cast %59 : vector<1x8x8xbf16> to vector<8x8xbf16>
    %61 = vector.shape_cast %58 : vector<12x16x8xf32> to vector<192x8xf32>
    %62 = arith.truncf %61 : vector<192x8xf32> to vector<192x8xbf16>
    %cst_35 = arith.constant dense<0.000000e+00> : vector<192x8xf32>
    %63 = tpu.matmul %62, %60, %cst_35 {dimension_numbers = #tpu.dot_dimension_numbers<[1], [0], [0], [1], [0, 0, 1, 1], [], []>} : vector<192x8xbf16>, vector<8x8xbf16>, vector<192x8xf32> -> vector<192x8xf32>
    %64 = arith.addf %53, %63 : vector<192x8xf32>
    %c0_36 = arith.constant 0 : index
    %c0_37 = arith.constant 0 : index
    %65 = vector.load %arg8[%c0_36, %c0_37] : memref<1x8xf32, #tpu.memory_space<vmem>>, vector<1x8xf32>
    %66 = vector.broadcast %65 : vector<1x8xf32> to vector<192x8xf32>
    %67 = arith.addf %64, %66 : vector<192x8xf32>
    %cst_38 = arith.constant 0.000000e+00 : f32
    %68 = vector.broadcast %cst_38 : f32 to vector<192x8xf32>
    %69 = arith.maximumf %67, %68 : vector<192x8xf32>
    %70 = vector.shape_cast %69 : vector<192x8xf32> to vector<2x96x8xf32>
    %71 = arith.truncf %70 : vector<2x96x8xf32> to vector<2x96x8xbf16>
    %72 = vector.extract_strided_slice %71 {offsets = [0, 0, 0], sizes = [2, 64, 8], strides = [1, 1, 1]} : vector<2x96x8xbf16> to vector<2x64x8xbf16>
    %73 = vector.shape_cast %72 : vector<2x64x8xbf16> to vector<128x8xbf16>
    %c0_39 = arith.constant 0 : index
    %c0_40 = arith.constant 0 : index
    %c0_41 = arith.constant 0 : index
    %74 = vector.load %arg9[%c0_39, %c0_40, %c0_41] : memref<3x8x32xbf16, #tpu.memory_space<vmem>>, vector<1x8x32xbf16>
    %75 = vector.shape_cast %74 : vector<1x8x32xbf16> to vector<8x32xbf16>
    %cst_42 = arith.constant dense<0.000000e+00> : vector<128x32xf32>
    %76 = tpu.matmul %73, %75, %cst_42 {dimension_numbers = #tpu.dot_dimension_numbers<[1], [0], [0], [1], [0, 0, 1, 1], [], []>} : vector<128x8xbf16>, vector<8x32xbf16>, vector<128x32xf32> -> vector<128x32xf32>
    %77 = vector.extract_strided_slice %71 {offsets = [0, 16, 0], sizes = [2, 64, 8], strides = [1, 1, 1]} : vector<2x96x8xbf16> to vector<2x64x8xbf16>
    %78 = vector.shape_cast %77 : vector<2x64x8xbf16> to vector<128x8xbf16>
    %c1_43 = arith.constant 1 : index
    %c0_44 = arith.constant 0 : index
    %c0_45 = arith.constant 0 : index
    %79 = vector.load %arg9[%c1_43, %c0_44, %c0_45] : memref<3x8x32xbf16, #tpu.memory_space<vmem>>, vector<1x8x32xbf16>
    %80 = vector.shape_cast %79 : vector<1x8x32xbf16> to vector<8x32xbf16>
    %cst_46 = arith.constant dense<0.000000e+00> : vector<128x32xf32>
    %81 = tpu.matmul %78, %80, %cst_46 {dimension_numbers = #tpu.dot_dimension_numbers<[1], [0], [0], [1], [0, 0, 1, 1], [], []>} : vector<128x8xbf16>, vector<8x32xbf16>, vector<128x32xf32> -> vector<128x32xf32>
    %82 = arith.addf %76, %81 : vector<128x32xf32>
    %83 = vector.extract_strided_slice %71 {offsets = [0, 32, 0], sizes = [2, 64, 8], strides = [1, 1, 1]} : vector<2x96x8xbf16> to vector<2x64x8xbf16>
    %84 = vector.shape_cast %83 : vector<2x64x8xbf16> to vector<128x8xbf16>
    %c2_47 = arith.constant 2 : index
    %c0_48 = arith.constant 0 : index
    %c0_49 = arith.constant 0 : index
    %85 = vector.load %arg9[%c2_47, %c0_48, %c0_49] : memref<3x8x32xbf16, #tpu.memory_space<vmem>>, vector<1x8x32xbf16>
    %86 = vector.shape_cast %85 : vector<1x8x32xbf16> to vector<8x32xbf16>
    %cst_50 = arith.constant dense<0.000000e+00> : vector<128x32xf32>
    %87 = tpu.matmul %84, %86, %cst_50 {dimension_numbers = #tpu.dot_dimension_numbers<[1], [0], [0], [1], [0, 0, 1, 1], [], []>} : vector<128x8xbf16>, vector<8x32xbf16>, vector<128x32xf32> -> vector<128x32xf32>
    %88 = arith.addf %82, %87 : vector<128x32xf32>
    %c0_51 = arith.constant 0 : index
    %c0_52 = arith.constant 0 : index
    %89 = vector.load %arg10[%c0_51, %c0_52] : memref<1x32xf32, #tpu.memory_space<vmem>>, vector<1x32xf32>
    %90 = vector.broadcast %89 : vector<1x32xf32> to vector<128x32xf32>
    %91 = arith.addf %88, %90 : vector<128x32xf32>
    %92 = vector.extract_strided_slice %91 {offsets = [0, 0], sizes = [128, 16], strides = [1, 1]} : vector<128x32xf32> to vector<128x16xf32>
    %93 = vector.extract_strided_slice %91 {offsets = [0, 16], sizes = [128, 16], strides = [1, 1]} : vector<128x32xf32> to vector<128x16xf32>
    %94 = arith.negf %93 : vector<128x16xf32>
    %95 = math.exp %94 : vector<128x16xf32>
    %cst_53 = arith.constant 1.000000e+00 : f32
    %96 = vector.broadcast %cst_53 : f32 to vector<128x16xf32>
    %97 = arith.addf %96, %95 : vector<128x16xf32>
    %98 = arith.divf %96, %97 : vector<128x16xf32>
    %99 = arith.mulf %92, %98 : vector<128x16xf32>
    %100 = vector.shape_cast %99 : vector<128x16xf32> to vector<2x64x16xf32>
    %101 = vector.shape_cast %100 : vector<2x64x16xf32> to vector<8x16x16xf32>
    %cst_54 = arith.constant dense<0.000000e+00> : vector<8x16xf32>
    %102 = vector.multi_reduction <add>, %101, %cst_54 [2] : vector<8x16x16xf32> to vector<8x16xf32>
    %103 = vector.shape_cast %102 : vector<8x16xf32> to vector<8x16x1xf32>
    %cst_55 = arith.constant dense<0.000000e+00> : vector<8x1xf32>
    %104 = vector.multi_reduction <add>, %103, %cst_55 [1] : vector<8x16x1xf32> to vector<8x1xf32>
    %105 = vector.shape_cast %104 : vector<8x1xf32> to vector<8x1x1xf32>
    %cst_56 = arith.constant 3.906250e-03 : f32
    %106 = vector.broadcast %cst_56 : f32 to vector<8x1x1xf32>
    %107 = arith.mulf %105, %106 : vector<8x1x1xf32>
    %108 = vector.broadcast %107 : vector<8x1x1xf32> to vector<8x16x16xf32>
    %109 = arith.subf %101, %108 : vector<8x16x16xf32>
    %110 = arith.mulf %109, %109 : vector<8x16x16xf32>
    %cst_57 = arith.constant dense<0.000000e+00> : vector<8x16xf32>
    %111 = vector.multi_reduction <add>, %110, %cst_57 [2] : vector<8x16x16xf32> to vector<8x16xf32>
    %112 = vector.shape_cast %111 : vector<8x16xf32> to vector<8x16x1xf32>
    %cst_58 = arith.constant dense<0.000000e+00> : vector<8x1xf32>
    %113 = vector.multi_reduction <add>, %112, %cst_58 [1] : vector<8x16x1xf32> to vector<8x1xf32>
    %114 = vector.shape_cast %113 : vector<8x1xf32> to vector<8x1x1xf32>
    %cst_59 = arith.constant 3.906250e-03 : f32
    %115 = vector.broadcast %cst_59 : f32 to vector<8x1x1xf32>
    %116 = arith.mulf %114, %115 : vector<8x1x1xf32>
    %cst_60 = arith.constant 9.99999974E-6 : f32
    %117 = vector.broadcast %cst_60 : f32 to vector<8x1x1xf32>
    %118 = arith.addf %116, %117 : vector<8x1x1xf32>
    %119 = math.rsqrt %118 : vector<8x1x1xf32>
    %120 = vector.broadcast %119 : vector<8x1x1xf32> to vector<8x16x16xf32>
    %121 = arith.mulf %109, %120 : vector<8x16x16xf32>
    %c0_61 = arith.constant 0 : index
    %c0_62 = arith.constant 0 : index
    %122 = vector.load %arg11[%c0_61, %c0_62] : memref<16x16xf32, #tpu.memory_space<vmem>>, vector<16x16xf32>
    %123 = vector.shape_cast %122 : vector<16x16xf32> to vector<1x16x16xf32>
    %124 = vector.broadcast %123 : vector<1x16x16xf32> to vector<8x16x16xf32>
    %125 = arith.mulf %121, %124 : vector<8x16x16xf32>
    %c0_63 = arith.constant 0 : index
    %c0_64 = arith.constant 0 : index
    %126 = vector.load %arg12[%c0_63, %c0_64] : memref<16x16xf32, #tpu.memory_space<vmem>>, vector<16x16xf32>
    %127 = vector.shape_cast %126 : vector<16x16xf32> to vector<1x16x16xf32>
    %128 = vector.broadcast %127 : vector<1x16x16xf32> to vector<8x16x16xf32>
    %129 = arith.addf %125, %128 : vector<8x16x16xf32>
    %130 = vector.shape_cast %129 : vector<8x16x16xf32> to vector<2x64x16xf32>
    %131 = arith.truncf %130 : vector<2x64x16xf32> to vector<2x64x16xbf16>
    %132 = vector.extract_strided_slice %131 {offsets = [0, 0, 0], sizes = [2, 16, 16], strides = [1, 1, 1]} : vector<2x64x16xbf16> to vector<2x16x16xbf16>
    %133 = vector.shape_cast %132 : vector<2x16x16xbf16> to vector<32x16xbf16>
    %c0_65 = arith.constant 0 : index
    %c0_66 = arith.constant 0 : index
    %c0_67 = arith.constant 0 : index
    %134 = vector.load %arg13[%c0_65, %c0_66, %c0_67] : memref<4x16x64xbf16, #tpu.memory_space<vmem>>, vector<1x16x64xbf16>
    %135 = vector.shape_cast %134 : vector<1x16x64xbf16> to vector<16x64xbf16>
    %cst_68 = arith.constant dense<0.000000e+00> : vector<32x64xf32>
    %136 = tpu.matmul %133, %135, %cst_68 {dimension_numbers = #tpu.dot_dimension_numbers<[1], [0], [0], [1], [0, 0, 1, 1], [], []>} : vector<32x16xbf16>, vector<16x64xbf16>, vector<32x64xf32> -> vector<32x64xf32>
    %137 = vector.extract_strided_slice %131 {offsets = [0, 16, 0], sizes = [2, 16, 16], strides = [1, 1, 1]} : vector<2x64x16xbf16> to vector<2x16x16xbf16>
    %138 = vector.shape_cast %137 : vector<2x16x16xbf16> to vector<32x16xbf16>
    %c1_69 = arith.constant 1 : index
    %c0_70 = arith.constant 0 : index
    %c0_71 = arith.constant 0 : index
    %139 = vector.load %arg13[%c1_69, %c0_70, %c0_71] : memref<4x16x64xbf16, #tpu.memory_space<vmem>>, vector<1x16x64xbf16>
    %140 = vector.shape_cast %139 : vector<1x16x64xbf16> to vector<16x64xbf16>
    %cst_72 = arith.constant dense<0.000000e+00> : vector<32x64xf32>
    %141 = tpu.matmul %138, %140, %cst_72 {dimension_numbers = #tpu.dot_dimension_numbers<[1], [0], [0], [1], [0, 0, 1, 1], [], []>} : vector<32x16xbf16>, vector<16x64xbf16>, vector<32x64xf32> -> vector<32x64xf32>
    %142 = arith.addf %136, %141 : vector<32x64xf32>
    %143 = vector.extract_strided_slice %131 {offsets = [0, 32, 0], sizes = [2, 16, 16], strides = [1, 1, 1]} : vector<2x64x16xbf16> to vector<2x16x16xbf16>
    %144 = vector.shape_cast %143 : vector<2x16x16xbf16> to vector<32x16xbf16>
    %c2_73 = arith.constant 2 : index
    %c0_74 = arith.constant 0 : index
    %c0_75 = arith.constant 0 : index
    %145 = vector.load %arg13[%c2_73, %c0_74, %c0_75] : memref<4x16x64xbf16, #tpu.memory_space<vmem>>, vector<1x16x64xbf16>
    %146 = vector.shape_cast %145 : vector<1x16x64xbf16> to vector<16x64xbf16>
    %cst_76 = arith.constant dense<0.000000e+00> : vector<32x64xf32>
    %147 = tpu.matmul %144, %146, %cst_76 {dimension_numbers = #tpu.dot_dimension_numbers<[1], [0], [0], [1], [0, 0, 1, 1], [], []>} : vector<32x16xbf16>, vector<16x64xbf16>, vector<32x64xf32> -> vector<32x64xf32>
    %148 = arith.addf %142, %147 : vector<32x64xf32>
    %149 = vector.extract_strided_slice %131 {offsets = [0, 48, 0], sizes = [2, 16, 16], strides = [1, 1, 1]} : vector<2x64x16xbf16> to vector<2x16x16xbf16>
    %150 = vector.shape_cast %149 : vector<2x16x16xbf16> to vector<32x16xbf16>
    %c3 = arith.constant 3 : index
    %c0_77 = arith.constant 0 : index
    %c0_78 = arith.constant 0 : index
    %151 = vector.load %arg13[%c3, %c0_77, %c0_78] : memref<4x16x64xbf16, #tpu.memory_space<vmem>>, vector<1x16x64xbf16>
    %152 = vector.shape_cast %151 : vector<1x16x64xbf16> to vector<16x64xbf16>
    %cst_79 = arith.constant dense<0.000000e+00> : vector<32x64xf32>
    %153 = tpu.matmul %150, %152, %cst_79 {dimension_numbers = #tpu.dot_dimension_numbers<[1], [0], [0], [1], [0, 0, 1, 1], [], []>} : vector<32x16xbf16>, vector<16x64xbf16>, vector<32x64xf32> -> vector<32x64xf32>
    %154 = arith.addf %148, %153 : vector<32x64xf32>
    %c0_80 = arith.constant 0 : index
    %c0_81 = arith.constant 0 : index
    %155 = vector.load %arg14[%c0_80, %c0_81] : memref<1x64xf32, #tpu.memory_space<vmem>>, vector<1x64xf32>
    %156 = vector.broadcast %155 : vector<1x64xf32> to vector<32x64xf32>
    %157 = arith.addf %154, %156 : vector<32x64xf32>
    %158 = vector.extract_strided_slice %157 {offsets = [0, 0], sizes = [32, 32], strides = [1, 1]} : vector<32x64xf32> to vector<32x32xf32>
    %159 = vector.extract_strided_slice %157 {offsets = [0, 32], sizes = [32, 32], strides = [1, 1]} : vector<32x64xf32> to vector<32x32xf32>
    %160 = arith.negf %159 : vector<32x32xf32>
    %161 = math.exp %160 : vector<32x32xf32>
    %cst_82 = arith.constant 1.000000e+00 : f32
    %162 = vector.broadcast %cst_82 : f32 to vector<32x32xf32>
    %163 = arith.addf %162, %161 : vector<32x32xf32>
    %164 = arith.divf %162, %163 : vector<32x32xf32>
    %165 = arith.mulf %158, %164 : vector<32x32xf32>
    %166 = vector.shape_cast %165 : vector<32x32xf32> to vector<2x16x32xf32>
    %cst_83 = arith.constant dense<0.000000e+00> : vector<2x16xf32>
    %167 = vector.multi_reduction <add>, %166, %cst_83 [2] : vector<2x16x32xf32> to vector<2x16xf32>
    %168 = vector.shape_cast %167 : vector<2x16xf32> to vector<2x16x1xf32>
    %cst_84 = arith.constant dense<0.000000e+00> : vector<2x1xf32>
    %169 = vector.multi_reduction <add>, %168, %cst_84 [1] : vector<2x16x1xf32> to vector<2x1xf32>
    %170 = vector.shape_cast %169 : vector<2x1xf32> to vector<2x1x1xf32>
    %cst_85 = arith.constant 0.001953125 : f32
    %171 = vector.broadcast %cst_85 : f32 to vector<2x1x1xf32>
    %172 = arith.mulf %170, %171 : vector<2x1x1xf32>
    %173 = vector.broadcast %172 : vector<2x1x1xf32> to vector<2x16x32xf32>
    %174 = arith.subf %166, %173 : vector<2x16x32xf32>
    %175 = arith.mulf %174, %174 : vector<2x16x32xf32>
    %cst_86 = arith.constant dense<0.000000e+00> : vector<2x16xf32>
    %176 = vector.multi_reduction <add>, %175, %cst_86 [2] : vector<2x16x32xf32> to vector<2x16xf32>
    %177 = vector.shape_cast %176 : vector<2x16xf32> to vector<2x16x1xf32>
    %cst_87 = arith.constant dense<0.000000e+00> : vector<2x1xf32>
    %178 = vector.multi_reduction <add>, %177, %cst_87 [1] : vector<2x16x1xf32> to vector<2x1xf32>
    %179 = vector.shape_cast %178 : vector<2x1xf32> to vector<2x1x1xf32>
    %cst_88 = arith.constant 0.001953125 : f32
    %180 = vector.broadcast %cst_88 : f32 to vector<2x1x1xf32>
    %181 = arith.mulf %179, %180 : vector<2x1x1xf32>
    %cst_89 = arith.constant 9.99999974E-6 : f32
    %182 = vector.broadcast %cst_89 : f32 to vector<2x1x1xf32>
    %183 = arith.addf %181, %182 : vector<2x1x1xf32>
    %184 = math.rsqrt %183 : vector<2x1x1xf32>
    %185 = vector.broadcast %184 : vector<2x1x1xf32> to vector<2x16x32xf32>
    %186 = arith.mulf %174, %185 : vector<2x16x32xf32>
    %c0_90 = arith.constant 0 : index
    %c0_91 = arith.constant 0 : index
    %187 = vector.load %arg15[%c0_90, %c0_91] : memref<16x32xf32, #tpu.memory_space<vmem>>, vector<16x32xf32>
    %188 = vector.shape_cast %187 : vector<16x32xf32> to vector<1x16x32xf32>
    %189 = vector.broadcast %188 : vector<1x16x32xf32> to vector<2x16x32xf32>
    %190 = arith.mulf %186, %189 : vector<2x16x32xf32>
    %c0_92 = arith.constant 0 : index
    %c0_93 = arith.constant 0 : index
    %191 = vector.load %arg16[%c0_92, %c0_93] : memref<16x32xf32, #tpu.memory_space<vmem>>, vector<16x32xf32>
    %192 = vector.shape_cast %191 : vector<16x32xf32> to vector<1x16x32xf32>
    %193 = vector.broadcast %192 : vector<1x16x32xf32> to vector<2x16x32xf32>
    %194 = arith.addf %190, %193 : vector<2x16x32xf32>
    %195 = vector.shape_cast %194 : vector<2x16x32xf32> to vector<32x32xf32>
    %196 = arith.truncf %195 : vector<32x32xf32> to vector<32x32xbf16>
    %c0_94 = arith.constant 0 : index
    %c0_95 = arith.constant 0 : index
    %197 = vector.load %arg17[%c0_94, %c0_95] : memref<32x32xbf16, #tpu.memory_space<vmem>>, vector<32x32xbf16>
    %cst_96 = arith.constant dense<0.000000e+00> : vector<32x32xf32>
    %198 = tpu.matmul %196, %197, %cst_96 {dimension_numbers = #tpu.dot_dimension_numbers<[1], [0], [0], [1], [0, 0, 1, 1], [], []>} : vector<32x32xbf16>, vector<32x32xbf16>, vector<32x32xf32> -> vector<32x32xf32>
    %c0_97 = arith.constant 0 : index
    %c0_98 = arith.constant 0 : index
    %199 = vector.load %arg18[%c0_97, %c0_98] : memref<1x32xf32, #tpu.memory_space<vmem>>, vector<1x32xf32>
    %200 = vector.broadcast %199 : vector<1x32xf32> to vector<32x32xf32>
    %201 = arith.addf %198, %200 : vector<32x32xf32>
    %cst_99 = arith.constant 0.000000e+00 : f32
    %202 = vector.broadcast %cst_99 : f32 to vector<32x32xf32>
    %203 = arith.maximumf %201, %202 : vector<32x32xf32>
    %204 = arith.truncf %203 : vector<32x32xf32> to vector<32x32xbf16>
    %c0_100 = arith.constant 0 : index
    %c0_101 = arith.constant 0 : index
    %205 = vector.load %arg19[%c0_100, %c0_101] : memref<32x1xbf16, #tpu.memory_space<vmem>>, vector<32x1xbf16>
    %cst_102 = arith.constant dense<0.000000e+00> : vector<32x1xf32>
    %206 = tpu.matmul %204, %205, %cst_102 {dimension_numbers = #tpu.dot_dimension_numbers<[1], [0], [0], [1], [0, 0, 1, 1], [], []>} : vector<32x32xbf16>, vector<32x1xbf16>, vector<32x1xf32> -> vector<32x1xf32>
    %c0_103 = arith.constant 0 : index
    %c0_104 = arith.constant 0 : index
    %207 = vector.load %arg20[%c0_103, %c0_104] : memref<1x1xf32, #tpu.memory_space<vmem>>, vector<1x1xf32>
    %208 = vector.broadcast %207 : vector<1x1xf32> to vector<32x1xf32>
    %209 = arith.addf %206, %208 : vector<32x1xf32>
    %210 = vector.shape_cast %209 : vector<32x1xf32> to vector<2x16x1xf32>
    %c0_105 = arith.constant 0 : index
    %c0_106 = arith.constant 0 : index
    %c0_107 = arith.constant 0 : index
    %211 = vector.load %arg21[%c0_105, %c0_106, %c0_107] : memref<2x16x1xf32, #tpu.memory_space<vmem>>, vector<2x16x1xf32>
    tpu.vector_store %arg21[%c0_105, %c0_106, %c0_107], %210 {strides = array<i32>} : memref<2x16x1xf32, #tpu.memory_space<vmem>>, vector<2x16x1xf32>,
    return
  }
  func.func @transform_0(%arg0: i32) -> (i32, i32, i32) {
    %c0_i32 = arith.constant 0 : i32
    %c0_i32_0 = arith.constant 0 : i32
    %c0_i32_1 = arith.constant 0 : i32
    return %arg0, %c0_i32, %c0_i32_0 : i32, i32, i32
  }
  func.func @transform_1(%arg0: i32) -> (i32, i32) {
    %c0_i32 = arith.constant 0 : i32
    %c0_i32_0 = arith.constant 0 : i32
    %c0_i32_1 = arith.constant 0 : i32
    return %c0_i32, %c0_i32_0 : i32, i32
  }
  func.func @transform_2(%arg0: i32) -> (i32, i32, i32) {
    %c0_i32 = arith.constant 0 : i32
    %c0_i32_0 = arith.constant 0 : i32
    %c0_i32_1 = arith.constant 0 : i32
    %c0_i32_2 = arith.constant 0 : i32
    return %c0_i32, %c0_i32_0, %c0_i32_1 : i32, i32, i32
  }
  func.func @transform_3(%arg0: i32) -> (i32, i32) {
    %c0_i32 = arith.constant 0 : i32
    %c0_i32_0 = arith.constant 0 : i32
    %c0_i32_1 = arith.constant 0 : i32
    return %c0_i32, %c0_i32_0 : i32, i32
  }
  func.func @transform_4(%arg0: i32) -> (i32, i32) {
    %c0_i32 = arith.constant 0 : i32
    %c0_i32_0 = arith.constant 0 : i32
    %c0_i32_1 = arith.constant 0 : i32
    return %c0_i32, %c0_i32_0 : i32, i32
  }
  func.func @transform_5(%arg0: i32) -> (i32, i32) {
    %c0_i32 = arith.constant 0 : i32
    %c0_i32_0 = arith.constant 0 : i32
    %c0_i32_1 = arith.constant 0 : i32
    return %c0_i32, %c0_i32_0 : i32, i32
  }
  func.func @transform_6(%arg0: i32) -> (i32, i32, i32) {
    %c0_i32 = arith.constant 0 : i32
    %c0_i32_0 = arith.constant 0 : i32
    %c0_i32_1 = arith.constant 0 : i32
    %c0_i32_2 = arith.constant 0 : i32
    return %c0_i32, %c0_i32_0, %c0_i32_1 : i32, i32, i32
  }
  func.func @transform_7(%arg0: i32) -> (i32, i32) {
    %c0_i32 = arith.constant 0 : i32
    %c0_i32_0 = arith.constant 0 : i32
    %c0_i32_1 = arith.constant 0 : i32
    return %c0_i32, %c0_i32_0 : i32, i32
  }
  func.func @transform_8(%arg0: i32) -> (i32, i32, i32) {
    %c0_i32 = arith.constant 0 : i32
    %c0_i32_0 = arith.constant 0 : i32
    %c0_i32_1 = arith.constant 0 : i32
    %c0_i32_2 = arith.constant 0 : i32
    return %c0_i32, %c0_i32_0, %c0_i32_1 : i32, i32, i32
  }
  func.func @transform_9(%arg0: i32) -> (i32, i32) {
    %c0_i32 = arith.constant 0 : i32
    %c0_i32_0 = arith.constant 0 : i32
    %c0_i32_1 = arith.constant 0 : i32
    return %c0_i32, %c0_i32_0 : i32, i32
  }
  func.func @transform_10(%arg0: i32) -> (i32, i32) {
    %c0_i32 = arith.constant 0 : i32
    %c0_i32_0 = arith.constant 0 : i32
    %c0_i32_1 = arith.constant 0 : i32
    return %c0_i32, %c0_i32_0 : i32, i32
  }
  func.func @transform_11(%arg0: i32) -> (i32, i32) {
    %c0_i32 = arith.constant 0 : i32
    %c0_i32_0 = arith.constant 0 : i32
    %c0_i32_1 = arith.constant 0 : i32
    return %c0_i32, %c0_i32_0 : i32, i32
  }
  func.func @transform_12(%arg0: i32) -> (i32, i32, i32) {
    %c0_i32 = arith.constant 0 : i32
    %c0_i32_0 = arith.constant 0 : i32
    %c0_i32_1 = arith.constant 0 : i32
    %c0_i32_2 = arith.constant 0 : i32
    return %c0_i32, %c0_i32_0, %c0_i32_1 : i32, i32, i32
  }
  func.func @transform_13(%arg0: i32) -> (i32, i32) {
    %c0_i32 = arith.constant 0 : i32
    %c0_i32_0 = arith.constant 0 : i32
    %c0_i32_1 = arith.constant 0 : i32
    return %c0_i32, %c0_i32_0 : i32, i32
  }
  func.func @transform_14(%arg0: i32) -> (i32, i32) {
    %c0_i32 = arith.constant 0 : i32
    %c0_i32_0 = arith.constant 0 : i32
    %c0_i32_1 = arith.constant 0 : i32
    return %c0_i32, %c0_i32_0 : i32, i32
  }
  func.func @transform_15(%arg0: i32) -> (i32, i32) {
    %c0_i32 = arith.constant 0 : i32
    %c0_i32_0 = arith.constant 0 : i32
    %c0_i32_1 = arith.constant 0 : i32
    return %c0_i32, %c0_i32_0 : i32, i32
  }
  func.func @transform_16(%arg0: i32) -> (i32, i32) {
    %c0_i32 = arith.constant 0 : i32
    %c0_i32_0 = arith.constant 0 : i32
    %c0_i32_1 = arith.constant 0 : i32
    return %c0_i32, %c0_i32_0 : i32, i32
  }
  func.func @transform_17(%arg0: i32) -> (i32, i32) {
    %c0_i32 = arith.constant 0 : i32
    %c0_i32_0 = arith.constant 0 : i32
    %c0_i32_1 = arith.constant 0 : i32
    return %c0_i32, %c0_i32_0 : i32, i32
  }
  func.func @transform_18(%arg0: i32) -> (i32, i32) {
    %c0_i32 = arith.constant 0 : i32
    %c0_i32_0 = arith.constant 0 : i32
    %c0_i32_1 = arith.constant 0 : i32
    return %c0_i32, %c0_i32_0 : i32, i32
  }
  func.func @transform_19(%arg0: i32) -> (i32, i32) {
    %c0_i32 = arith.constant 0 : i32
    %c0_i32_0 = arith.constant 0 : i32
    %c0_i32_1 = arith.constant 0 : i32
    return %c0_i32, %c0_i32_0 : i32, i32
  }
  func.func @transform_20(%arg0: i32) -> (i32, i32, i32) {
    %c0_i32 = arith.constant 0 : i32
    %c0_i32_0 = arith.constant 0 : i32
    %c0_i32_1 = arith.constant 0 : i32
    return %arg0, %c0_i32, %c0_i32_0 : i32, i32, i32
  }
}

</mosaic_0001>

<llo_original>
// kernel: _lambda_.1
$region0: #{_lambda_.1}
  #allocation0 [shape = 'u32[]', space=smem, size = 0x4, offset = 0x4, fixed_abs, tag = 'smem constant byte address 0x4 - core index']
  #allocation1 [shape = 'u32[144,128]{1,0:T(1,128)}', space=vmem, size = 0x12000, scoped, tag = 'internal scratch']
  #allocation2 [shape = 'f32[1,1]{1,0:T(1,128)S(1)}', space=vmem, size = 0x200, scoped, tag = 'scoped memory for _lambda_.1']
  %s0 = inlined_call_operand.vmem [shape: f32[4,128,2], index: 0, kind: input, shape index: {}]
  %s1 = inlined_call_operand.vmem [shape: bf16[16,16], index: 1, kind: input, shape index: {}]
  %s2 = inlined_call_operand.vmem [shape: bf16[3,2,32], index: 2, kind: input, shape index: {}]
  %s3 = inlined_call_operand.vmem [shape: f32[1,32], index: 3, kind: input, shape index: {}]
  %s4 = inlined_call_operand.vmem [shape: bf16[16,8], index: 4, kind: input, shape index: {}]
  %s5 = inlined_call_operand.vmem [shape: f32[1,8], index: 5, kind: input, shape index: {}]
  %s6 = inlined_call_operand.vmem [shape: bf16[3,8,8], index: 6, kind: input, shape index: {}]
  %s7 = inlined_call_operand.vmem [shape: f32[1,8], index: 7, kind: input, shape index: {}]
  %s8 = inlined_call_operand.vmem [shape: bf16[3,8,32], index: 8, kind: input, shape index: {}]
  %s9 = inlined_call_operand.vmem [shape: f32[1,32], index: 9, kind: input, shape index: {}]
  %s10 = inlined_call_operand.vmem [shape: f32[16,16], index: 10, kind: input, shape index: {}]
  %s11 = inlined_call_operand.vmem [shape: f32[16,16], index: 11, kind: input, shape index: {}]
  %s12 = inlined_call_operand.vmem [shape: bf16[4,16,64], index: 12, kind: input, shape index: {}]
  %s13 = inlined_call_operand.vmem [shape: f32[1,64], index: 13, kind: input, shape index: {}]
  %s14 = inlined_call_operand.vmem [shape: f32[16,32], index: 14, kind: input, shape index: {}]
  %s15 = inlined_call_operand.vmem [shape: f32[16,32], index: 15, kind: input, shape index: {}]
  %s16 = inlined_call_operand.vmem [shape: bf16[32,32], index: 16, kind: input, shape index: {}]
  %s17 = inlined_call_operand.vmem [shape: f32[1,32], index: 17, kind: input, shape index: {}]
  %s18 = inlined_call_operand.vmem [shape: bf16[32,1], index: 18, kind: input, shape index: {}]
  %s19 = inlined_call_operand.<no memory space> [shape: f32[1,1], index: 19, kind: input, shape index: {}]
  %s20 = inlined_call_operand.vmem [shape: f32[4,16,1], index: 20, kind: output, shape index: {}]
  %s21 = sld [smem:[#allocation0]]
  $region113: #{_lambda_.1} parent=0
    _
  %s23 = ssub.s32 1, %s21
  %s24 = scalar_select 0, %s23, %s21
  %v25 = vstv %s19
  %26 = vst [vmem:[#allocation2] sm:$0x1] %v25
  loop: start=0, step=1, limit=4
  $region2: #{_lambda_.1} parent=0 // loop_pre_header
    _
  $region3: #{_lambda_.1} parent=0 // loop_header
    %s28 = sphi 0, %s32
    %p29 = scmp.ge.s32.totalorder %s28, 4
    %s38 = sphi 0, %s40
    %s41 = sphi 0, %s38
    %s42 = sphi 0, %s41
    %s58 = sphi 0, %s42
    %s62 = sphi 0, %s62
    %s64 = sphi 0, %s62
    %s65 = sphi 0, %s64
    %s79 = sphi 0, %s65
    %s83 = sphi 0, %s83
    %s85 = sphi 0, %s83
    %s86 = sphi 0, %s85
    %s100 = sphi 0, %s86
    %s104 = sphi 0, %s104
    %s106 = sphi 0, %s104
    %s107 = sphi 0, %s106
    %s121 = sphi 0, %s107
    %s125 = sphi 0, %s125
    %s127 = sphi 0, %s125
    %s128 = sphi 0, %s127
    %s142 = sphi 0, %s128
    %s146 = sphi 0, %s146
    %s148 = sphi 0, %s146
    %s149 = sphi 0, %s148
    %s163 = sphi 0, %s149
    %s167 = sphi 0, %s167
    %s169 = sphi 0, %s167
    %s170 = sphi 0, %s169
    %s184 = sphi 0, %s170
    %s188 = sphi 0, %s188
    %s190 = sphi 0, %s188
    %s191 = sphi 0, %s190
    %s205 = sphi 0, %s191
    %s209 = sphi 0, %s209
    %s211 = sphi 0, %s209
    %s212 = sphi 0, %s211
    %s226 = sphi 0, %s212
    %s230 = sphi 0, %s230
    %s232 = sphi 0, %s230
    %s233 = sphi 0, %s232
    %s247 = sphi 0, %s233
    %s251 = sphi 0, %s251
    %s253 = sphi 0, %s251
    %s254 = sphi 0, %s253
    %s268 = sphi 0, %s254
    %s272 = sphi 0, %s272
    %s274 = sphi 0, %s272
    %s275 = sphi 0, %s274
    %s289 = sphi 0, %s275
    %s293 = sphi 0, %s293
    %s295 = sphi 0, %s293
    %s296 = sphi 0, %s295
    %s310 = sphi 0, %s296
    %s314 = sphi 0, %s314
    %s316 = sphi 0, %s314
    %s317 = sphi 0, %s316
    %s331 = sphi 0, %s317
    %s335 = sphi 0, %s335
    %s337 = sphi 0, %s335
    %s338 = sphi 0, %s337
    %s352 = sphi 0, %s338
    %s356 = sphi 0, %s356
    %s358 = sphi 0, %s356
    %s359 = sphi 0, %s358
    %s373 = sphi 0, %s359
    %s377 = sphi 0, %s377
    %s379 = sphi 0, %s377
    %s380 = sphi 0, %s379
    %s394 = sphi 0, %s380
    %s398 = sphi 0, %s398
    %s400 = sphi 0, %s398
    %s401 = sphi 0, %s400
    %s415 = sphi 0, %s401
    %s419 = sphi 0, %s419
    %s421 = sphi 0, %s419
    %s422 = sphi 0, %s421
    %s436 = sphi 0, %s422
    %s440 = sphi 0, %s440
    %s442 = sphi 0, %s440
    %s443 = sphi 0, %s442
    %s457 = sphi 0, %s443
    %s463 = sphi 0, %s465
    %s466 = sphi 0, %s463
    %s467 = sphi 0, %s466
    %s483 = sphi 0, %s467
  $region4: #{_lambda_.1} parent=0 // loop_header_branch
    %31 = sbr.rel (%p29) target = $region8
  $region5: #{_lambda_.1} parent=0 // loop_body
    %s33 = ssub.s32 %s28, 1
    %s34 = ssub.s32 %s28, 2
    %s35 = sadd.s32 %s28, 1
    %s36 = ssub.s32 %s28, %s35
    %p37 = scmp.eq.s32.totalorder %s36, 0
    %s39 = sadd.s32 %s38, 1
    %s40 = scalar_select %p37, %s38, %s39
    %p43 = pneg %p37
    %p44 = scmp.eq.s32.totalorder %s28, 1
    %p45 = por %p43, %p44
    %p46 = scmp.ne.s32.totalorder %s38, %s41
    %p47 = scmp.eq.s32.totalorder %s28, 0
    %p48 = por %p46, %p47
    %p49 = scmp.ne.s32.totalorder %s38, %s41
    %p50 = scmp.eq.s32.totalorder %s33, 1
    %p51 = por %p49, %p50
    %p52 = scmp.ne.s32.totalorder %s41, %s42
    %p53 = scmp.eq.s32.totalorder %s33, 0
    %p54 = por %p52, %p53
    %p55 = scmp.ne.s32.totalorder %s41, %s42
    %p56 = scmp.eq.s32.totalorder %s34, 1
    %p57 = por %p55, %p56
    %p59 = scmp.ne.s32.totalorder %s42, %s58
    %p60 = scmp.eq.s32.totalorder %s34, 0
    %p61 = por %p59, %p60
    %s63 = sadd.s32 %s62, 1
    %p66 = scmp.eq.s32.totalorder %s28, 1
    %p67 = scmp.ne.s32.totalorder %s62, %s64
    %p68 = scmp.eq.s32.totalorder %s28, 0
    %p69 = por %p67, %p68
    %p70 = scmp.ne.s32.totalorder %s62, %s64
    %p71 = scmp.eq.s32.totalorder %s33, 1
    %p72 = por %p70, %p71
    %p73 = scmp.ne.s32.totalorder %s64, %s65
    %p74 = scmp.eq.s32.totalorder %s33, 0
    %p75 = por %p73, %p74
    %p76 = scmp.ne.s32.totalorder %s64, %s65
    %p77 = scmp.eq.s32.totalorder %s34, 1
    %p78 = por %p76, %p77
    %p80 = scmp.ne.s32.totalorder %s65, %s79
    %p81 = scmp.eq.s32.totalorder %s34, 0
    %p82 = por %p80, %p81
    %s84 = sadd.s32 %s83, 1
    %p87 = scmp.eq.s32.totalorder %s28, 1
    %p88 = scmp.ne.s32.totalorder %s83, %s85
    %p89 = scmp.eq.s32.totalorder %s28, 0
    %p90 = por %p88, %p89
    %p91 = scmp.ne.s32.totalorder %s83, %s85
    %p92 = scmp.eq.s32.totalorder %s33, 1
    %p93 = por %p91, %p92
    %p94 = scmp.ne.s32.totalorder %s85, %s86
    %p95 = scmp.eq.s32.totalorder %s33, 0
    %p96 = por %p94, %p95
    %p97 = scmp.ne.s32.totalorder %s85, %s86
    %p98 = scmp.eq.s32.totalorder %s34, 1
    %p99 = por %p97, %p98
    %p101 = scmp.ne.s32.totalorder %s86, %s100
    %p102 = scmp.eq.s32.totalorder %s34, 0
    %p103 = por %p101, %p102
    %s105 = sadd.s32 %s104, 1
    %p108 = scmp.eq.s32.totalorder %s28, 1
    %p109 = scmp.ne.s32.totalorder %s104, %s106
    %p110 = scmp.eq.s32.totalorder %s28, 0
    %p111 = por %p109, %p110
    %p112 = scmp.ne.s32.totalorder %s104, %s106
    %p113 = scmp.eq.s32.totalorder %s33, 1
    %p114 = por %p112, %p113
    %p115 = scmp.ne.s32.totalorder %s106, %s107
    %p116 = scmp.eq.s32.totalorder %s33, 0
    %p117 = por %p115, %p116
    %p118 = scmp.ne.s32.totalorder %s106, %s107
    %p119 = scmp.eq.s32.totalorder %s34, 1
    %p120 = por %p118, %p119
    %p122 = scmp.ne.s32.totalorder %s107, %s121
    %p123 = scmp.eq.s32.totalorder %s34, 0
    %p124 = por %p122, %p123
    %s126 = sadd.s32 %s125, 1
    %p129 = scmp.eq.s32.totalorder %s28, 1
    %p130 = scmp.ne.s32.totalorder %s125, %s127
    %p131 = scmp.eq.s32.totalorder %s28, 0
    %p132 = por %p130, %p131
    %p133 = scmp.ne.s32.totalorder %s125, %s127
    %p134 = scmp.eq.s32.totalorder %s33, 1
    %p135 = por %p133, %p134
    %p136 = scmp.ne.s32.totalorder %s127, %s128
    %p137 = scmp.eq.s32.totalorder %s33, 0
    %p138 = por %p136, %p137
    %p139 = scmp.ne.s32.totalorder %s127, %s128
    %p140 = scmp.eq.s32.totalorder %s34, 1
    %p141 = por %p139, %p140
    %p143 = scmp.ne.s32.totalorder %s128, %s142
    %p144 = scmp.eq.s32.totalorder %s34, 0
    %p145 = por %p143, %p144
    %s147 = sadd.s32 %s146, 1
    %p150 = scmp.eq.s32.totalorder %s28, 1
    %p151 = scmp.ne.s32.totalorder %s146, %s148
    %p152 = scmp.eq.s32.totalorder %s28, 0
    %p153 = por %p151, %p152
    %p154 = scmp.ne.s32.totalorder %s146, %s148
    %p155 = scmp.eq.s32.totalorder %s33, 1
    %p156 = por %p154, %p155
    %p157 = scmp.ne.s32.totalorder %s148, %s149
    %p158 = scmp.eq.s32.totalorder %s33, 0
    %p159 = por %p157, %p158
    %p160 = scmp.ne.s32.totalorder %s148, %s149
    %p161 = scmp.eq.s32.totalorder %s34, 1
    %p162 = por %p160, %p161
    %p164 = scmp.ne.s32.totalorder %s149, %s163
    %p165 = scmp.eq.s32.totalorder %s34, 0
    %p166 = por %p164, %p165
    %s168 = sadd.s32 %s167, 1
    %p171 = scmp.eq.s32.totalorder %s28, 1
    %p172 = scmp.ne.s32.totalorder %s167, %s169
    %p173 = scmp.eq.s32.totalorder %s28, 0
    %p174 = por %p172, %p173
    %p175 = scmp.ne.s32.totalorder %s167, %s169
    %p176 = scmp.eq.s32.totalorder %s33, 1
    %p177 = por %p175, %p176
    %p178 = scmp.ne.s32.totalorder %s169, %s170
    %p179 = scmp.eq.s32.totalorder %s33, 0
    %p180 = por %p178, %p179
    %p181 = scmp.ne.s32.totalorder %s169, %s170
    %p182 = scmp.eq.s32.totalorder %s34, 1
    %p183 = por %p181, %p182
    %p185 = scmp.ne.s32.totalorder %s170, %s184
    %p186 = scmp.eq.s32.totalorder %s34, 0
    %p187 = por %p185, %p186
    %s189 = sadd.s32 %s188, 1
    %p192 = scmp.eq.s32.totalorder %s28, 1
    %p193 = scmp.ne.s32.totalorder %s188, %s190
    %p194 = scmp.eq.s32.totalorder %s28, 0
    %p195 = por %p193, %p194
    %p196 = scmp.ne.s32.totalorder %s188, %s190
    %p197 = scmp.eq.s32.totalorder %s33, 1
    %p198 = por %p196, %p197
    %p199 = scmp.ne.s32.totalorder %s190, %s191
    %p200 = scmp.eq.s32.totalorder %s33, 0
    %p201 = por %p199, %p200
    %p202 = scmp.ne.s32.totalorder %s190, %s191
    %p203 = scmp.eq.s32.totalorder %s34, 1
    %p204 = por %p202, %p203
    %p206 = scmp.ne.s32.totalorder %s191, %s205
    %p207 = scmp.eq.s32.totalorder %s34, 0
    %p208 = por %p206, %p207
    %s210 = sadd.s32 %s209, 1
    %p213 = scmp.eq.s32.totalorder %s28, 1
    %p214 = scmp.ne.s32.totalorder %s209, %s211
    %p215 = scmp.eq.s32.totalorder %s28, 0
    %p216 = por %p214, %p215
    %p217 = scmp.ne.s32.totalorder %s209, %s211
    %p218 = scmp.eq.s32.totalorder %s33, 1
    %p219 = por %p217, %p218
    %p220 = scmp.ne.s32.totalorder %s211, %s212
    %p221 = scmp.eq.s32.totalorder %s33, 0
    %p222 = por %p220, %p221
    %p223 = scmp.ne.s32.totalorder %s211, %s212
    %p224 = scmp.eq.s32.totalorder %s34, 1
    %p225 = por %p223, %p224
    %p227 = scmp.ne.s32.totalorder %s212, %s226
    %p228 = scmp.eq.s32.totalorder %s34, 0
    %p229 = por %p227, %p228
    %s231 = sadd.s32 %s230, 1
    %p234 = scmp.eq.s32.totalorder %s28, 1
    %p235 = scmp.ne.s32.totalorder %s230, %s232
    %p236 = scmp.eq.s32.totalorder %s28, 0
    %p237 = por %p235, %p236
    %p238 = scmp.ne.s32.totalorder %s230, %s232
    %p239 = scmp.eq.s32.totalorder %s33, 1
    %p240 = por %p238, %p239
    %p241 = scmp.ne.s32.totalorder %s232, %s233
    %p242 = scmp.eq.s32.totalorder %s33, 0
    %p243 = por %p241, %p242
    %p244 = scmp.ne.s32.totalorder %s232, %s233
    %p245 = scmp.eq.s32.totalorder %s34, 1
    %p246 = por %p244, %p245
    %p248 = scmp.ne.s32.totalorder %s233, %s247
    %p249 = scmp.eq.s32.totalorder %s34, 0
    %p250 = por %p248, %p249
    %s252 = sadd.s32 %s251, 1
    %p255 = scmp.eq.s32.totalorder %s28, 1
    %p256 = scmp.ne.s32.totalorder %s251, %s253
    %p257 = scmp.eq.s32.totalorder %s28, 0
    %p258 = por %p256, %p257
    %p259 = scmp.ne.s32.totalorder %s251, %s253
    %p260 = scmp.eq.s32.totalorder %s33, 1
    %p261 = por %p259, %p260
    %p262 = scmp.ne.s32.totalorder %s253, %s254
    %p263 = scmp.eq.s32.totalorder %s33, 0
    %p264 = por %p262, %p263
    %p265 = scmp.ne.s32.totalorder %s253, %s254
    %p266 = scmp.eq.s32.totalorder %s34, 1
    %p267 = por %p265, %p266
    %p269 = scmp.ne.s32.totalorder %s254, %s268
    %p270 = scmp.eq.s32.totalorder %s34, 0
    %p271 = por %p269, %p270
    %s273 = sadd.s32 %s272, 1
    %p276 = scmp.eq.s32.totalorder %s28, 1
    %p277 = scmp.ne.s32.totalorder %s272, %s274
    %p278 = scmp.eq.s32.totalorder %s28, 0
    %p279 = por %p277, %p278
    %p280 = scmp.ne.s32.totalorder %s272, %s274
    %p281 = scmp.eq.s32.totalorder %s33, 1
    %p282 = por %p280, %p281
    %p283 = scmp.ne.s32.totalorder %s274, %s275
    %p284 = scmp.eq.s32.totalorder %s33, 0
    %p285 = por %p283, %p284
    %p286 = scmp.ne.s32.totalorder %s274, %s275
    %p287 = scmp.eq.s32.totalorder %s34, 1
    %p288 = por %p286, %p287
    %p290 = scmp.ne.s32.totalorder %s275, %s289
    %p291 = scmp.eq.s32.totalorder %s34, 0
    %p292 = por %p290, %p291
    %s294 = sadd.s32 %s293, 1
    %p297 = scmp.eq.s32.totalorder %s28, 1
    %p298 = scmp.ne.s32.totalorder %s293, %s295
    %p299 = scmp.eq.s32.totalorder %s28, 0
    %p300 = por %p298, %p299
    %p301 = scmp.ne.s32.totalorder %s293, %s295
    %p302 = scmp.eq.s32.totalorder %s33, 1
    %p303 = por %p301, %p302
    %p304 = scmp.ne.s32.totalorder %s295, %s296
    %p305 = scmp.eq.s32.totalorder %s33, 0
    %p306 = por %p304, %p305
    %p307 = scmp.ne.s32.totalorder %s295, %s296
    %p308 = scmp.eq.s32.totalorder %s34, 1
    %p309 = por %p307, %p308
    %p311 = scmp.ne.s32.totalorder %s296, %s310
    %p312 = scmp.eq.s32.totalorder %s34, 0
    %p313 = por %p311, %p312
    %s315 = sadd.s32 %s314, 1
    %p318 = scmp.eq.s32.totalorder %s28, 1
    %p319 = scmp.ne.s32.totalorder %s314, %s316
    %p320 = scmp.eq.s32.totalorder %s28, 0
    %p321 = por %p319, %p320
    %p322 = scmp.ne.s32.totalorder %s314, %s316
    %p323 = scmp.eq.s32.totalorder %s33, 1
    %p324 = por %p322, %p323
    %p325 = scmp.ne.s32.totalorder %s316, %s317
    %p326 = scmp.eq.s32.totalorder %s33, 0
    %p327 = por %p325, %p326
    %p328 = scmp.ne.s32.totalorder %s316, %s317
    %p329 = scmp.eq.s32.totalorder %s34, 1
    %p330 = por %p328, %p329
    %p332 = scmp.ne.s32.totalorder %s317, %s331
    %p333 = scmp.eq.s32.totalorder %s34, 0
    %p334 = por %p332, %p333
    %s336 = sadd.s32 %s335, 1
    %p339 = scmp.eq.s32.totalorder %s28, 1
    %p340 = scmp.ne.s32.totalorder %s335, %s337
    %p341 = scmp.eq.s32.totalorder %s28, 0
    %p342 = por %p340, %p341
    %p343 = scmp.ne.s32.totalorder %s335, %s337
    %p344 = scmp.eq.s32.totalorder %s33, 1
    %p345 = por %p343, %p344
    %p346 = scmp.ne.s32.totalorder %s337, %s338
    %p347 = scmp.eq.s32.totalorder %s33, 0
    %p348 = por %p346, %p347
    %p349 = scmp.ne.s32.totalorder %s337, %s338
    %p350 = scmp.eq.s32.totalorder %s34, 1
    %p351 = por %p349, %p350
    %p353 = scmp.ne.s32.totalorder %s338, %s352
    %p354 = scmp.eq.s32.totalorder %s34, 0
    %p355 = por %p353, %p354
    %s357 = sadd.s32 %s356, 1
    %p360 = scmp.eq.s32.totalorder %s28, 1
    %p361 = scmp.ne.s32.totalorder %s356, %s358
    %p362 = scmp.eq.s32.totalorder %s28, 0
    %p363 = por %p361, %p362
    %p364 = scmp.ne.s32.totalorder %s356, %s358
    %p365 = scmp.eq.s32.totalorder %s33, 1
    %p366 = por %p364, %p365
    %p367 = scmp.ne.s32.totalorder %s358, %s359
    %p368 = scmp.eq.s32.totalorder %s33, 0
    %p369 = por %p367, %p368
    %p370 = scmp.ne.s32.totalorder %s358, %s359
    %p371 = scmp.eq.s32.totalorder %s34, 1
    %p372 = por %p370, %p371
    %p374 = scmp.ne.s32.totalorder %s359, %s373
    %p375 = scmp.eq.s32.totalorder %s34, 0
    %p376 = por %p374, %p375
    %s378 = sadd.s32 %s377, 1
    %p381 = scmp.eq.s32.totalorder %s28, 1
    %p382 = scmp.ne.s32.totalorder %s377, %s379
    %p383 = scmp.eq.s32.totalorder %s28, 0
    %p384 = por %p382, %p383
    %p385 = scmp.ne.s32.totalorder %s377, %s379
    %p386 = scmp.eq.s32.totalorder %s33, 1
    %p387 = por %p385, %p386
    %p388 = scmp.ne.s32.totalorder %s379, %s380
    %p389 = scmp.eq.s32.totalorder %s33, 0
    %p390 = por %p388, %p389
    %p391 = scmp.ne.s32.totalorder %s379, %s380
    %p392 = scmp.eq.s32.totalorder %s34, 1
    %p393 = por %p391, %p392
    %p395 = scmp.ne.s32.totalorder %s380, %s394
    %p396 = scmp.eq.s32.totalorder %s34, 0
    %p397 = por %p395, %p396
    %s399 = sadd.s32 %s398, 1
    %p402 = scmp.eq.s32.totalorder %s28, 1
    %p403 = scmp.ne.s32.totalorder %s398, %s400
    %p404 = scmp.eq.s32.totalorder %s28, 0
    %p405 = por %p403, %p404
    %p406 = scmp.ne.s32.totalorder %s398, %s400
    %p407 = scmp.eq.s32.totalorder %s33, 1
    %p408 = por %p406, %p407
    %p409 = scmp.ne.s32.totalorder %s400, %s401
    %p410 = scmp.eq.s32.totalorder %s33, 0
    %p411 = por %p409, %p410
    %p412 = scmp.ne.s32.totalorder %s400, %s401
    %p413 = scmp.eq.s32.totalorder %s34, 1
    %p414 = por %p412, %p413
    %p416 = scmp.ne.s32.totalorder %s401, %s415
    %p417 = scmp.eq.s32.totalorder %s34, 0
    %p418 = por %p416, %p417
    %s420 = sadd.s32 %s419, 1
    %p423 = scmp.eq.s32.totalorder %s28, 1
    %p424 = scmp.ne.s32.totalorder %s419, %s421
    %p425 = scmp.eq.s32.totalorder %s28, 0
    %p426 = por %p424, %p425
    %p427 = scmp.ne.s32.totalorder %s419, %s421
    %p428 = scmp.eq.s32.totalorder %s33, 1
    %p429 = por %p427, %p428
    %p430 = scmp.ne.s32.totalorder %s421, %s422
    %p431 = scmp.eq.s32.totalorder %s33, 0
    %p432 = por %p430, %p431
    %p433 = scmp.ne.s32.totalorder %s421, %s422
    %p434 = scmp.eq.s32.totalorder %s34, 1
    %p435 = por %p433, %p434
    %p437 = scmp.ne.s32.totalorder %s422, %s436
    %p438 = scmp.eq.s32.totalorder %s34, 0
    %p439 = por %p437, %p438
    %s441 = sadd.s32 %s440, 1
    %p444 = scmp.eq.s32.totalorder %s28, 1
    %p445 = scmp.ne.s32.totalorder %s440, %s442
    %p446 = scmp.eq.s32.totalorder %s28, 0
    %p447 = por %p445, %p446
    %p448 = scmp.ne.s32.totalorder %s440, %s442
    %p449 = scmp.eq.s32.totalorder %s33, 1
    %p450 = por %p448, %p449
    %p451 = scmp.ne.s32.totalorder %s442, %s443
    %p452 = scmp.eq.s32.totalorder %s33, 0
    %p453 = por %p451, %p452
    %p454 = scmp.ne.s32.totalorder %s442, %s443
    %p455 = scmp.eq.s32.totalorder %s34, 1
    %p456 = por %p454, %p455
    %p458 = scmp.ne.s32.totalorder %s443, %s457
    %p459 = scmp.eq.s32.totalorder %s34, 0
    %p460 = por %p458, %p459
    %s461 = ssub.s32 %s28, %s35
    %p462 = scmp.eq.s32.totalorder %s461, 0
    %s464 = sadd.s32 %s463, 1
    %s465 = scalar_select %p462, %s463, %s464
    %p468 = pneg %p462
    %p469 = scmp.eq.s32.totalorder %s28, 1
    %p470 = por %p468, %p469
    %p471 = scmp.ne.s32.totalorder %s463, %s466
    %p472 = scmp.eq.s32.totalorder %s28, 0
    %p473 = por %p471, %p472
    %p474 = scmp.ne.s32.totalorder %s463, %s466
    %p475 = scmp.eq.s32.totalorder %s33, 1
    %p476 = por %p474, %p475
    %p477 = scmp.ne.s32.totalorder %s466, %s467
    %p478 = scmp.eq.s32.totalorder %s33, 0
    %p479 = por %p477, %p478
    %p480 = scmp.ne.s32.totalorder %s466, %s467
    %p481 = scmp.eq.s32.totalorder %s34, 1
    %p482 = por %p480, %p481
    %p484 = scmp.ne.s32.totalorder %s467, %s483
    %p485 = scmp.eq.s32.totalorder %s34, 0
    %p486 = por %p484, %p485
    %p487 = scmp.le.s32.totalorder 1, %s28
    %p488 = scmp.lt.s32.totalorder %s28, 3
    %p489 = pnand %p487, %p488
    %p490 = pneg %p489
    // Predicated region
    $region9: #{_lambda_.1} parent=5 // pred_check
      _
    $region10: #{_lambda_.1} parent=5 // pred_check_branch
      %492 = sbr.rel (%p489) target = $region12
    $region11: #{_lambda_.1} parent=5 // pred_region
      %s493 = ssub.s32 %s28, 1
      // Predicated region
      $region13: #{_lambda_.1} parent=11 // pred_check
        %p494 = pneg %p75
      $region14: #{_lambda_.1} parent=11 // pred_check_branch
        %496 = sbr.rel (%p494) target = $region16
      $region15: #{_lambda_.1} parent=11 // pred_region
        _
      $region16: #{_lambda_.1} parent=11 // pred_fallthru
        _
      // Predicated region
      $region17: #{_lambda_.1} parent=11 // pred_check
        %p497 = pneg %p96
      $region18: #{_lambda_.1} parent=11 // pred_check_branch
        %499 = sbr.rel (%p497) target = $region20
      $region19: #{_lambda_.1} parent=11 // pred_region
        _
      $region20: #{_lambda_.1} parent=11 // pred_fallthru
        _
      // Predicated region
      $region21: #{_lambda_.1} parent=11 // pred_check
        %p500 = pneg %p117
      $region22: #{_lambda_.1} parent=11 // pred_check_branch
        %502 = sbr.rel (%p500) target = $region24
      $region23: #{_lambda_.1} parent=11 // pred_region
        _
      $region24: #{_lambda_.1} parent=11 // pred_fallthru
        _
      // Predicated region
      $region25: #{_lambda_.1} parent=11 // pred_check
        %p503 = pneg %p138
      $region26: #{_lambda_.1} parent=11 // pred_check_branch
        %505 = sbr.rel (%p503) target = $region28
      $region27: #{_lambda_.1} parent=11 // pred_region
        _
      $region28: #{_lambda_.1} parent=11 // pred_fallthru
        _
      // Predicated region
      $region29: #{_lambda_.1} parent=11 // pred_check
        %p506 = pneg %p159
      $region30: #{_lambda_.1} parent=11 // pred_check_branch
        %508 = sbr.rel (%p506) target = $region32
      $region31: #{_lambda_.1} parent=11 // pred_region
        _
      $region32: #{_lambda_.1} parent=11 // pred_fallthru
        _
      // Predicated region
      $region33: #{_lambda_.1} parent=11 // pred_check
        %p509 = pneg %p180
      $region34: #{_lambda_.1} parent=11 // pred_check_branch
        %511 = sbr.rel (%p509) target = $region36
      $region35: #{_lambda_.1} parent=11 // pred_region
        _
      $region36: #{_lambda_.1} parent=11 // pred_fallthru
        _
      // Predicated region
      $region37: #{_lambda_.1} parent=11 // pred_check
        %p512 = pneg %p201
      $region38: #{_lambda_.1} parent=11 // pred_check_branch
        %514 = sbr.rel (%p512) target = $region40
      $region39: #{_lambda_.1} parent=11 // pred_region
        _
      $region40: #{_lambda_.1} parent=11 // pred_fallthru
        _
      // Predicated region
      $region41: #{_lambda_.1} parent=11 // pred_check
        %p515 = pneg %p222
      $region42: #{_lambda_.1} parent=11 // pred_check_branch
        %517 = sbr.rel (%p515) target = $region44
      $region43: #{_lambda_.1} parent=11 // pred_region
        _
      $region44: #{_lambda_.1} parent=11 // pred_fallthru
        _
      // Predicated region
      $region45: #{_lambda_.1} parent=11 // pred_check
        %p518 = pneg %p243
      $region46: #{_lambda_.1} parent=11 // pred_check_branch
        %520 = sbr.rel (%p518) target = $region48
      $region47: #{_lambda_.1} parent=11 // pred_region
        _
      $region48: #{_lambda_.1} parent=11 // pred_fallthru
        _
      // Predicated region
      $region49: #{_lambda_.1} parent=11 // pred_check
        %p521 = pneg %p264
      $region50: #{_lambda_.1} parent=11 // pred_check_branch
        %523 = sbr.rel (%p521) target = $region52
      $region51: #{_lambda_.1} parent=11 // pred_region
        _
      $region52: #{_lambda_.1} parent=11 // pred_fallthru
        _
      // Predicated region
      $region53: #{_lambda_.1} parent=11 // pred_check
        %p524 = pneg %p285
      $region54: #{_lambda_.1} parent=11 // pred_check_branch
        %526 = sbr.rel (%p524) target = $region56
      $region55: #{_lambda_.1} parent=11 // pred_region
        _
      $region56: #{_lambda_.1} parent=11 // pred_fallthru
        _
      // Predicated region
      $region57: #{_lambda_.1} parent=11 // pred_check
        %p527 = pneg %p306
      $region58: #{_lambda_.1} parent=11 // pred_check_branch
        %529 = sbr.rel (%p527) target = $region60
      $region59: #{_lambda_.1} parent=11 // pred_region
        _
      $region60: #{_lambda_.1} parent=11 // pred_fallthru
        _
      // Predicated region
      $region61: #{_lambda_.1} parent=11 // pred_check
        %p530 = pneg %p327
      $region62: #{_lambda_.1} parent=11 // pred_check_branch
        %532 = sbr.rel (%p530) target = $region64
      $region63: #{_lambda_.1} parent=11 // pred_region
        _
      $region64: #{_lambda_.1} parent=11 // pred_fallthru
        _
      // Predicated region
      $region65: #{_lambda_.1} parent=11 // pred_check
        %p533 = pneg %p348
      $region66: #{_lambda_.1} parent=11 // pred_check_branch
        %535 = sbr.rel (%p533) target = $region68
      $region67: #{_lambda_.1} parent=11 // pred_region
        _
      $region68: #{_lambda_.1} parent=11 // pred_fallthru
        _
      // Predicated region
      $region69: #{_lambda_.1} parent=11 // pred_check
        %p536 = pneg %p369
      $region70: #{_lambda_.1} parent=11 // pred_check_branch
        %538 = sbr.rel (%p536) target = $region72
      $region71: #{_lambda_.1} parent=11 // pred_region
        _
      $region72: #{_lambda_.1} parent=11 // pred_fallthru
        _
      // Predicated region
      $region73: #{_lambda_.1} parent=11 // pred_check
        %p539 = pneg %p390
      $region74: #{_lambda_.1} parent=11 // pred_check_branch
        %541 = sbr.rel (%p539) target = $region76
      $region75: #{_lambda_.1} parent=11 // pred_region
        _
      $region76: #{_lambda_.1} parent=11 // pred_fallthru
        _
      // Predicated region
      $region77: #{_lambda_.1} parent=11 // pred_check
        %p542 = pneg %p411
      $region78: #{_lambda_.1} parent=11 // pred_check_branch
        %544 = sbr.rel (%p542) target = $region80
      $region79: #{_lambda_.1} parent=11 // pred_region
        _
      $region80: #{_lambda_.1} parent=11 // pred_fallthru
        _
      // Predicated region
      $region81: #{_lambda_.1} parent=11 // pred_check
        %p545 = pneg %p432
      $region82: #{_lambda_.1} parent=11 // pred_check_branch
        %547 = sbr.rel (%p545) target = $region84
      $region83: #{_lambda_.1} parent=11 // pred_region
        _
      $region84: #{_lambda_.1} parent=11 // pred_fallthru
        _
      // Predicated region
      $region85: #{_lambda_.1} parent=11 // pred_check
        %p548 = pneg %p453
      $region86: #{_lambda_.1} parent=11 // pred_check_branch
        %550 = sbr.rel (%p548) target = $region88
      $region87: #{_lambda_.1} parent=11 // pred_region
        _
      $region88: #{_lambda_.1} parent=11 // pred_fallthru
        _
    $region12: #{_lambda_.1} parent=5 // pred_fallthru
      _
    %p551 = scmp.lt.s32.totalorder %s28, 2
    // Predicated region
    $region89: #{_lambda_.1} parent=5 // pred_check
      %p552 = pneg %p551
    $region90: #{_lambda_.1} parent=5 // pred_check_branch
      %554 = sbr.rel (%p552) target = $region92
    $region91: #{_lambda_.1} parent=5 // pred_region
      // Predicated region
      $region93: #{_lambda_.1} parent=91 // pred_check
        %p555 = pneg %p48
      $region94: #{_lambda_.1} parent=91 // pred_check_branch
        %557 = sbr.rel (%p555) target = $region96
      $region95: #{_lambda_.1} parent=91 // pred_region
        %s558 = smul.u32 2, %s28
        %p559 = scmp.lt.s32.totalorder %s558, 3
        %s560 = scalar_select %p559, %s558, 3
        %s561 = smul.addr %s560, 16
        %s562 = smul.addr %s561, 8
        %s563 = scalar_lea.vmem %s0, %s562
        %s564 = smul.u32 2, %s28
      $region96: #{_lambda_.1} parent=91 // pred_fallthru
        _
    $region92: #{_lambda_.1} parent=5 // pred_fallthru
      _
    %p565 = scmp.le.s32.totalorder 1, %s28
    %p566 = scmp.lt.s32.totalorder %s28, 3
    %p567 = pnand %p565, %p566
    %p568 = pneg %p567
    // Predicated region
    $region97: #{_lambda_.1} parent=5 // pred_check
      _
    $region98: #{_lambda_.1} parent=5 // pred_check_branch
      %570 = sbr.rel (%p567) target = $region100
    $region99: #{_lambda_.1} parent=5 // pred_region
      %s571 = ssub.s32 %s28, 1
      %s572 = smul.u32 2, %s33
      %p573 = scmp.lt.s32.totalorder %s572, 3
      %s574 = scalar_select %p573, %s572, 3
      %s575 = smul.addr %s574, 16
      %s576 = smul.addr %s575, 8
      %s577 = scalar_lea.vmem %s0, %s576
      %p578 = pneg %p54
      %p579 = pneg %p51
      %p580 = pneg %p75
      %p581 = pneg %p72
      %p582 = pneg %p96
      %p583 = pneg %p93
      %p584 = pneg %p117
      %p585 = pneg %p114
      %p586 = pneg %p138
      %p587 = pneg %p135
      %p588 = pneg %p159
      %p589 = pneg %p156
      %p590 = pneg %p180
      %p591 = pneg %p177
      %p592 = pneg %p201
      %p593 = pneg %p198
      %p594 = pneg %p222
      %p595 = pneg %p219
      %p596 = pneg %p243
      %p597 = pneg %p240
      %p598 = pneg %p264
      %p599 = pneg %p261
      %p600 = pneg %p285
      %p601 = pneg %p282
      %p602 = pneg %p306
      %p603 = pneg %p303
      %p604 = pneg %p327
      %p605 = pneg %p324
      %p606 = pneg %p348
      %p607 = pneg %p345
      %p608 = pneg %p369
      %p609 = pneg %p366
      %p610 = pneg %p390
      %p611 = pneg %p387
      %p612 = pneg %p411
      %p613 = pneg %p408
      %p614 = pneg %p432
      %p615 = pneg %p429
      %p616 = pneg %p453
      %p617 = pneg %p450
      %p618 = pneg %p479
      %p619 = pneg %p476
      %s620 = smul.u32 2, %s33
      %p621 = scmp.lt.s32.totalorder %s620, 3
      %s622 = scalar_select %p621, %s620, 3
      %s623 = smul.addr %s622, 2
      %s624 = smul.addr %s623, 8
      %s625 = scalar_lea.vmem %s20, %s624
      %s626 = smul.u32 2, %s33
      %p627 = scmp.lt.s32.totalorder %s626, 3
      %s628 = scalar_select %p627, %s626, 3
      %s629 = smul.addr %s628, 16
      %s630 = smul.addr %s629, 8
      %s631 = scalar_lea.vmem %s0, %s630
      %s632 = smul.u32 2, %s33
      %s633 = smul.u32 2, %s33
      %p634 = scmp.lt.s32.totalorder %s633, 3
      %s635 = scalar_select %p634, %s633, 3
      %s636 = smul.addr %s635, 2
      %s637 = smul.addr %s636, 8
      %s638 = scalar_lea.vmem %s20, %s637
      %s639 = smul.u32 2, %s33
      %v641 = vld [vmem:[%s631] sm:$0xff]
      %v642 = vld [vmem:[%s631 + $0x8] sm:$0xff]
      %v643 = vld [vmem:[%s631 + $0x10] sm:$0xff]
      %v644 = vld [vmem:[%s631 + $0x18] sm:$0xff]
      %v645 = vld [vmem:[%s631 + $0x20] sm:$0xff]
      %v646 = vld [vmem:[%s631 + $0x28] sm:$0xff]
      %v647 = vld [vmem:[%s631 + $0x30] sm:$0xff]
      %v648 = vld [vmem:[%s631 + $0x38] sm:$0xff]
      %v649 = vld [vmem:[%s631 + $0x40] sm:$0xff]
      %v650 = vld [vmem:[%s631 + $0x48] sm:$0xff]
      %v651 = vld [vmem:[%s631 + $0x50] sm:$0xff]
      %v652 = vld [vmem:[%s631 + $0x58] sm:$0xff]
      %v653 = vld [vmem:[%s631 + $0x60] sm:$0xff]
      %v654 = vld [vmem:[%s631 + $0x68] sm:$0xff]
      %v655 = vld [vmem:[%s631 + $0x70] sm:$0xff]
      %v656 = vld [vmem:[%s631 + $0x78] sm:$0xff]
      %v657 = vld [vmem:[%s631 + $0x80] sm:$0xff]
      %v658 = vld [vmem:[%s631 + $0x88] sm:$0xff]
      %v659 = vld [vmem:[%s631 + $0x90] sm:$0xff]
      %v660 = vld [vmem:[%s631 + $0x98] sm:$0xff]
      %v661 = vld [vmem:[%s631 + $0xa0] sm:$0xff]
      %v662 = vld [vmem:[%s631 + $0xa8] sm:$0xff]
      %v663 = vld [vmem:[%s631 + $0xb0] sm:$0xff]
      %v664 = vld [vmem:[%s631 + $0xb8] sm:$0xff]
      %v665 = vld [vmem:[%s631 + $0xc0] sm:$0xff]
      %v666 = vld [vmem:[%s631 + $0xc8] sm:$0xff]
      %v667 = vld [vmem:[%s631 + $0xd0] sm:$0xff]
      %v668 = vld [vmem:[%s631 + $0xd8] sm:$0xff]
      %v669 = vld [vmem:[%s631 + $0xe0] sm:$0xff]
      %v670 = vld [vmem:[%s631 + $0xe8] sm:$0xff]
      %v671 = vld [vmem:[%s631 + $0xf0] sm:$0xff]
      %v672 = vld [vmem:[%s631 + $0xf8] sm:$0xff]
      %v673 = vpack.c.bf16 %v642, %v641
      %v674 = vpack.c.bf16 %v644, %v643
      %v675 = vpack.c.bf16 %v646, %v645
      %v676 = vpack.c.bf16 %v648, %v647
      %v677 = vpack.c.bf16 %v650, %v649
      %v678 = vpack.c.bf16 %v652, %v651
      %v679 = vpack.c.bf16 %v654, %v653
      %v680 = vpack.c.bf16 %v656, %v655
      %v681 = vpack.c.bf16 %v658, %v657
      %v682 = vpack.c.bf16 %v660, %v659
      %v683 = vpack.c.bf16 %v662, %v661
      %v684 = vpack.c.bf16 %v664, %v663
      %v685 = vpack.c.bf16 %v666, %v665
      %v686 = vpack.c.bf16 %v668, %v667
      %v687 = vpack.c.bf16 %v670, %v669
      %v688 = vpack.c.bf16 %v672, %v671
      %v689 = vld [vmem:[%s2] sm:$0x1]
      %s690 = scalar_lea.vmem %s2, 1
      %v691 = vld [vmem:[%s690] sm:$0x1]
      %vm692 = vcmask 15360
      %v694 = vsel %vm692, %v674, 0
      %v697 = vsel %vm692, %v675, 0
      %v700 = vsel %vm692, %v676, 0
      %v703 = vsel %vm692, %v677, 0
      %v706 = vsel %vm692, %v678, 0
      %v709 = vsel %vm692, %v679, 0
      %v712 = vsel %vm692, %v682, 0
      %v715 = vsel %vm692, %v683, 0
      %v718 = vsel %vm692, %v684, 0
      %v721 = vsel %vm692, %v685, 0
      %v724 = vsel %vm692, %v686, 0
      %v727 = vsel %vm692, %v687, 0
      %vm729 = vcmask 1040384
      %v731 = vsel %vm729, %v691, 0
      %733 = vmatprep.subr.bf16.mxu0 0
      %734 = vmatpush1.bf16.msra.mxu0 %v731
      %735 = vmatprep.subr.bf16.mxu0 0
      %736 = vmatpush1.bf16.msra.mxu0 0
      %737 = vmatprep.subr.bf16.mxu0 0
      %738 = vmatpush1.bf16.msra.mxu0 0
      %739 = vmatprep.subr.bf16.mxu0 0
      %740 = vmatpush1.bf16.msra.mxu0 0
      %741 = vmatprep.subr.bf16.mxu0 0
      %742 = vmatpush1.bf16.msra.mxu0 0
      %743 = vmatprep.subr.bf16.mxu0 0
      %744 = vmatpush1.bf16.msra.mxu0 0
      %745 = vmatprep.subr.bf16.mxu0 0
      %746 = vmatpush1.bf16.msra.mxu0 0
      %747 = vmatprep.subr.bf16.mxu0 0
      %748 = vmatpush1.bf16.msra.mxu0 0
      %749 = vmatprep.subr.bf16.mxu0 0
      %750 = vmatpush1.bf16.msra.mxu0 0
      %751 = vmatprep.subr.bf16.mxu0 0
      %752 = vmatpush1.bf16.msra.mxu0 0
      %753 = vmatprep.subr.bf16.mxu0 0
      %754 = vmatpush1.bf16.msra.mxu0 0
      %755 = vmatprep.subr.bf16.mxu0 0
      %756 = vmatpush1.bf16.msra.mxu0 0
      %757 = vmatprep.subr.bf16.mxu0 0
      %758 = vmatpush1.bf16.msra.mxu0 0
      %759 = vmatprep.subr.bf16.mxu0 0
      %760 = vmatpush1.bf16.msra.mxu0 0
      %761 = vmatprep.subr.bf16.mxu0 0
      %762 = vmatpush1.bf16.msra.mxu0 0
      %763 = vmatprep.subr.bf16.mxu0 0
      %764 = vmatpush1.bf16.msra.mxu0 0
      %765 = vmatprep.mubr.bf16.mxu0 0
      %766 = vmatmul.mubr.bf16.gmra.mrb[0].mxu0 %v694
      %v767 = vpop.f32.mrb[0].mxu0
      %v768 = vadd.f32 0.0, %v767
      %v769 = vpop.f32.mrb[0].mxu0
      %v770 = vpop.f32.mrb[0].mxu0
      %v771 = vadd.f32 0.0, %v770
      %v772 = vpop.f32.mrb[0].mxu0
      %773 = vmatprep.mubr.bf16.mxu0 0
      %774 = vmatmul.mubr.bf16.gmra.mrb[0].mxu0 %v697
      %v775 = vpop.f32.mrb[0].mxu0
      %v776 = vadd.f32 0.0, %v775
      %v777 = vpop.f32.mrb[0].mxu0
      %v778 = vpop.f32.mrb[0].mxu0
      %v779 = vadd.f32 0.0, %v778
      %v780 = vpop.f32.mrb[0].mxu0
      %781 = vmatprep.mubr.bf16.mxu0 0
      %782 = vmatmul.mubr.bf16.gmra.mrb[0].mxu0 %v700
      %v783 = vpop.f32.mrb[0].mxu0
      %v784 = vadd.f32 0.0, %v783
      %v785 = vpop.f32.mrb[0].mxu0
      %v786 = vpop.f32.mrb[0].mxu0
      %v787 = vadd.f32 0.0, %v786
      %v788 = vpop.f32.mrb[0].mxu0
      %789 = vmatprep.mubr.bf16.mxu0 0
      %790 = vmatmul.mubr.bf16.gmra.mrb[0].mxu0 %v703
      %v791 = vpop.f32.mrb[0].mxu0
      %v792 = vadd.f32 0.0, %v791
      %v793 = vpop.f32.mrb[0].mxu0
      %v794 = vpop.f32.mrb[0].mxu0
      %v795 = vadd.f32 0.0, %v794
      %v796 = vpop.f32.mrb[0].mxu0
      %797 = vmatprep.mubr.bf16.mxu0 0
      %798 = vmatmul.mubr.bf16.gmra.mrb[0].mxu0 %v706
      %v799 = vpop.f32.mrb[0].mxu0
      %v800 = vadd.f32 0.0, %v799
      %v801 = vpop.f32.mrb[0].mxu0
      %v802 = vpop.f32.mrb[0].mxu0
      %v803 = vadd.f32 0.0, %v802
      %v804 = vpop.f32.mrb[0].mxu0
      %805 = vmatprep.mubr.bf16.mxu0 0
      %806 = vmatmul.mubr.bf16.gmra.mrb[0].mxu0 %v709
      %v807 = vpop.f32.mrb[0].mxu0
      %v808 = vadd.f32 0.0, %v807
      %v809 = vpop.f32.mrb[0].mxu0
      %v810 = vpop.f32.mrb[0].mxu0
      %v811 = vadd.f32 0.0, %v810
      %v812 = vpop.f32.mrb[0].mxu0
      %813 = vmatprep.mubr.bf16.mxu0 0
      %814 = vmatmul.mubr.bf16.gmra.mrb[0].mxu0 %v712
      %v815 = vpop.f32.mrb[0].mxu0
      %v816 = vadd.f32 0.0, %v815
      %v817 = vpop.f32.mrb[0].mxu0
      %v818 = vpop.f32.mrb[0].mxu0
      %v819 = vadd.f32 0.0, %v818
      %v820 = vpop.f32.mrb[0].mxu0
      %821 = vmatprep.mubr.bf16.mxu0 0
      %822 = vmatmul.mubr.bf16.gmra.mrb[0].mxu0 %v715
      %v823 = vpop.f32.mrb[0].mxu0
      %v824 = vadd.f32 0.0, %v823
      %v825 = vpop.f32.mrb[0].mxu0
      %v826 = vpop.f32.mrb[0].mxu0
      %v827 = vadd.f32 0.0, %v826
      %v828 = vpop.f32.mrb[0].mxu0
      %829 = vmatprep.mubr.bf16.mxu0 0
      %830 = vmatmul.mubr.bf16.gmra.mrb[0].mxu0 %v718
      %v831 = vpop.f32.mrb[0].mxu0
      %v832 = vadd.f32 0.0, %v831
      %v833 = vpop.f32.mrb[0].mxu0
      %v834 = vpop.f32.mrb[0].mxu0
      %v835 = vadd.f32 0.0, %v834
      %v836 = vpop.f32.mrb[0].mxu0
      %837 = vmatprep.mubr.bf16.mxu0 0
      %838 = vmatmul.mubr.bf16.gmra.mrb[0].mxu0 %v721
      %v839 = vpop.f32.mrb[0].mxu0
      %v840 = vadd.f32 0.0, %v839
      %v841 = vpop.f32.mrb[0].mxu0
      %v842 = vpop.f32.mrb[0].mxu0
      %v843 = vadd.f32 0.0, %v842
      %v844 = vpop.f32.mrb[0].mxu0
      %845 = vmatprep.mubr.bf16.mxu0 0
      %846 = vmatmul.mubr.bf16.gmra.mrb[0].mxu0 %v724
      %v847 = vpop.f32.mrb[0].mxu0
      %v848 = vadd.f32 0.0, %v847
      %v849 = vpop.f32.mrb[0].mxu0
      %v850 = vpop.f32.mrb[0].mxu0
      %v851 = vadd.f32 0.0, %v850
      %v852 = vpop.f32.mrb[0].mxu0
      %853 = vmatprep.mubr.bf16.mxu0 0
      %854 = vmatmul.mubr.bf16.gmra.mrb[0].mxu0 %v727
      %v855 = vpop.f32.mrb[0].mxu0
      %v856 = vadd.f32 0.0, %v855
      %v857 = vpop.f32.mrb[0].mxu0
      %v858 = vpop.f32.mrb[0].mxu0
      %v859 = vadd.f32 0.0, %v858
      %v860 = vpop.f32.mrb[0].mxu0
      %861 = vdwg.mxu0
      %v863 = vsel %vm692, %v673, 0
      %v866 = vsel %vm692, %v681, 0
      %v869 = vsel %vm729, %v689, 0
      %871 = vmatprep.subr.bf16.mxu0 0
      %872 = vmatpush1.bf16.msra.mxu0 %v869
      %873 = vmatprep.subr.bf16.mxu0 0
      %874 = vmatpush1.bf16.msra.mxu0 0
      %875 = vmatprep.subr.bf16.mxu0 0
      %876 = vmatpush1.bf16.msra.mxu0 0
      %877 = vmatprep.subr.bf16.mxu0 0
      %878 = vmatpush1.bf16.msra.mxu0 0
      %879 = vmatprep.subr.bf16.mxu0 0
      %880 = vmatpush1.bf16.msra.mxu0 0
      %881 = vmatprep.subr.bf16.mxu0 0
      %882 = vmatpush1.bf16.msra.mxu0 0
      %883 = vmatprep.subr.bf16.mxu0 0
      %884 = vmatpush1.bf16.msra.mxu0 0
      %885 = vmatprep.subr.bf16.mxu0 0
      %886 = vmatpush1.bf16.msra.mxu0 0
      %887 = vmatprep.subr.bf16.mxu0 0
      %888 = vmatpush1.bf16.msra.mxu0 0
      %889 = vmatprep.subr.bf16.mxu0 0
      %890 = vmatpush1.bf16.msra.mxu0 0
      %891 = vmatprep.subr.bf16.mxu0 0
      %892 = vmatpush1.bf16.msra.mxu0 0
      %893 = vmatprep.subr.bf16.mxu0 0
      %894 = vmatpush1.bf16.msra.mxu0 0
      %895 = vmatprep.subr.bf16.mxu0 0
      %896 = vmatpush1.bf16.msra.mxu0 0
      %897 = vmatprep.subr.bf16.mxu0 0
      %898 = vmatpush1.bf16.msra.mxu0 0
      %899 = vmatprep.subr.bf16.mxu0 0
      %900 = vmatpush1.bf16.msra.mxu0 0
      %901 = vmatprep.subr.bf16.mxu0 0
      %902 = vmatpush1.bf16.msra.mxu0 0
      %903 = vmatprep.mubr.bf16.mxu0 0
      %904 = vmatmul.mubr.bf16.gmra.mrb[0].mxu0 %v863
      %v905 = vpop.f32.mrb[0].mxu0
      %v906 = vadd.f32 %v768, %v905
      %v907 = vpop.f32.mrb[0].mxu0
      %v908 = vpop.f32.mrb[0].mxu0
      %v909 = vadd.f32 %v771, %v908
      %v910 = vpop.f32.mrb[0].mxu0
      %911 = vmatprep.mubr.bf16.mxu0 0
      %912 = vmatmul.mubr.bf16.gmra.mrb[0].mxu0 %v694
      %v913 = vpop.f32.mrb[0].mxu0
      %v914 = vadd.f32 %v776, %v913
      %v915 = vpop.f32.mrb[0].mxu0
      %v916 = vpop.f32.mrb[0].mxu0
      %v917 = vadd.f32 %v779, %v916
      %v918 = vpop.f32.mrb[0].mxu0
      %919 = vmatprep.mubr.bf16.mxu0 0
      %920 = vmatmul.mubr.bf16.gmra.mrb[0].mxu0 %v697
      %v921 = vpop.f32.mrb[0].mxu0
      %v922 = vadd.f32 %v784, %v921
      %v923 = vpop.f32.mrb[0].mxu0
      %v924 = vpop.f32.mrb[0].mxu0
      %v925 = vadd.f32 %v787, %v924
      %v926 = vpop.f32.mrb[0].mxu0
      %927 = vmatprep.mubr.bf16.mxu0 0
      %928 = vmatmul.mubr.bf16.gmra.mrb[0].mxu0 %v700
      %v929 = vpop.f32.mrb[0].mxu0
      %v930 = vadd.f32 %v792, %v929
      %v931 = vpop.f32.mrb[0].mxu0
      %v932 = vpop.f32.mrb[0].mxu0
      %v933 = vadd.f32 %v795, %v932
      %v934 = vpop.f32.mrb[0].mxu0
      %935 = vmatprep.mubr.bf16.mxu0 0
      %936 = vmatmul.mubr.bf16.gmra.mrb[0].mxu0 %v703
      %v937 = vpop.f32.mrb[0].mxu0
      %v938 = vadd.f32 %v800, %v937
      %v939 = vpop.f32.mrb[0].mxu0
      %v940 = vpop.f32.mrb[0].mxu0
      %v941 = vadd.f32 %v803, %v940
      %v942 = vpop.f32.mrb[0].mxu0
      %943 = vmatprep.mubr.bf16.mxu0 0
      %944 = vmatmul.mubr.bf16.gmra.mrb[0].mxu0 %v706
      %v945 = vpop.f32.mrb[0].mxu0
      %v946 = vadd.f32 %v808, %v945
      %v947 = vpop.f32.mrb[0].mxu0
      %v948 = vpop.f32.mrb[0].mxu0
      %v949 = vadd.f32 %v811, %v948
      %v950 = vpop.f32.mrb[0].mxu0
      %951 = vmatprep.mubr.bf16.mxu0 0
      %952 = vmatmul.mubr.bf16.gmra.mrb[0].mxu0 %v866
      %v953 = vpop.f32.mrb[0].mxu0
      %v954 = vadd.f32 %v816, %v953
      %v955 = vpop.f32.mrb[0].mxu0
      %v956 = vpop.f32.mrb[0].mxu0
      %v957 = vadd.f32 %v819, %v956
      %v958 = vpop.f32.mrb[0].mxu0
      %959 = vmatprep.mubr.bf16.mxu0 0
      %960 = vmatmul.mubr.bf16.gmra.mrb[0].mxu0 %v712
      %v961 = vpop.f32.mrb[0].mxu0
      %v962 = vadd.f32 %v824, %v961
      %v963 = vpop.f32.mrb[0].mxu0
      %v964 = vpop.f32.mrb[0].mxu0
      %v965 = vadd.f32 %v827, %v964
      %v966 = vpop.f32.mrb[0].mxu0
      %967 = vmatprep.mubr.bf16.mxu0 0
      %968 = vmatmul.mubr.bf16.gmra.mrb[0].mxu0 %v715
      %v969 = vpop.f32.mrb[0].mxu0
      %v970 = vadd.f32 %v832, %v969
      %v971 = vpop.f32.mrb[0].mxu0
      %v972 = vpop.f32.mrb[0].mxu0
      %v973 = vadd.f32 %v835, %v972
      %v974 = vpop.f32.mrb[0].mxu0
      %975 = vmatprep.mubr.bf16.mxu0 0
      %976 = vmatmul.mubr.bf16.gmra.mrb[0].mxu0 %v718
      %v977 = vpop.f32.mrb[0].mxu0
      %v978 = vadd.f32 %v840, %v977
      %v979 = vpop.f32.mrb[0].mxu0
      %v980 = vpop.f32.mrb[0].mxu0
      %v981 = vadd.f32 %v843, %v980
      %v982 = vpop.f32.mrb[0].mxu0
      %983 = vmatprep.mubr.bf16.mxu0 0
      %984 = vmatmul.mubr.bf16.gmra.mrb[0].mxu0 %v721
      %v985 = vpop.f32.mrb[0].mxu0
      %v986 = vadd.f32 %v848, %v985
      %v987 = vpop.f32.mrb[0].mxu0
      %v988 = vpop.f32.mrb[0].mxu0
      %v989 = vadd.f32 %v851, %v988
      %v990 = vpop.f32.mrb[0].mxu0
      %991 = vmatprep.mubr.bf16.mxu0 0
      %992 = vmatmul.mubr.bf16.gmra.mrb[0].mxu0 %v724
      %v993 = vpop.f32.mrb[0].mxu0
      %v994 = vadd.f32 %v856, %v993
      %v995 = vpop.f32.mrb[0].mxu0
      %v996 = vpop.f32.mrb[0].mxu0
      %v997 = vadd.f32 %v859, %v996
      %v998 = vpop.f32.mrb[0].mxu0
      %999 = vdwg.mxu0
      %s1000 = scalar_lea.vmem %s2, 2
      %v1001 = vld [vmem:[%s1000] sm:$0x1]
      %v1003 = vsel %vm692, %v680, 0
      %v1006 = vsel %vm692, %v688, 0
      %v1009 = vsel %vm729, %v1001, 0
      %1011 = vmatprep.subr.bf16.mxu0 0
      %1012 = vmatpush1.bf16.msra.mxu0 %v1009
      %1013 = vmatprep.subr.bf16.mxu0 0
      %1014 = vmatpush1.bf16.msra.mxu0 0
      %1015 = vmatprep.subr.bf16.mxu0 0
      %1016 = vmatpush1.bf16.msra.mxu0 0
      %1017 = vmatprep.subr.bf16.mxu0 0
      %1018 = vmatpush1.bf16.msra.mxu0 0
      %1019 = vmatprep.subr.bf16.mxu0 0
      %1020 = vmatpush1.bf16.msra.mxu0 0
      %1021 = vmatprep.subr.bf16.mxu0 0
      %1022 = vmatpush1.bf16.msra.mxu0 0
      %1023 = vmatprep.subr.bf16.mxu0 0
      %1024 = vmatpush1.bf16.msra.mxu0 0
      %1025 = vmatprep.subr.bf16.mxu0 0
      %1026 = vmatpush1.bf16.msra.mxu0 0
      %1027 = vmatprep.subr.bf16.mxu0 0
      %1028 = vmatpush1.bf16.msra.mxu0 0
      %1029 = vmatprep.subr.bf16.mxu0 0
      %1030 = vmatpush1.bf16.msra.mxu0 0
      %1031 = vmatprep.subr.bf16.mxu0 0
      %1032 = vmatpush1.bf16.msra.mxu0 0
      %1033 = vmatprep.subr.bf16.mxu0 0
      %1034 = vmatpush1.bf16.msra.mxu0 0
      %1035 = vmatprep.subr.bf16.mxu0 0
      %1036 = vmatpush1.bf16.msra.mxu0 0
      %1037 = vmatprep.subr.bf16.mxu0 0
      %1038 = vmatpush1.bf16.msra.mxu0 0
      %1039 = vmatprep.subr.bf16.mxu0 0
      %1040 = vmatpush1.bf16.msra.mxu0 0
      %1041 = vmatprep.subr.bf16.mxu0 0
      %1042 = vmatpush1.bf16.msra.mxu0 0
      %1043 = vmatprep.mubr.bf16.mxu0 0
      %1044 = vmatmul.mubr.bf16.gmra.mrb[0].mxu0 %v697
      %v1045 = vpop.f32.mrb[0].mxu0
      %v1046 = vadd.f32 0.0, %v1045
      %v1047 = vpop.f32.mrb[0].mxu0
      %v1048 = vpop.f32.mrb[0].mxu0
      %v1049 = vadd.f32 0.0, %v1048
      %v1050 = vpop.f32.mrb[0].mxu0
      %1051 = vmatprep.mubr.bf16.mxu0 0
      %1052 = vmatmul.mubr.bf16.gmra.mrb[0].mxu0 %v700
      %v1053 = vpop.f32.mrb[0].mxu0
      %v1054 = vadd.f32 0.0, %v1053
      %v1055 = vpop.f32.mrb[0].mxu0
      %v1056 = vpop.f32.mrb[0].mxu0
      %v1057 = vadd.f32 0.0, %v1056
      %v1058 = vpop.f32.mrb[0].mxu0
      %1059 = vmatprep.mubr.bf16.mxu0 0
      %1060 = vmatmul.mubr.bf16.gmra.mrb[0].mxu0 %v703
      %v1061 = vpop.f32.mrb[0].mxu0
      %v1062 = vadd.f32 0.0, %v1061
      %v1063 = vpop.f32.mrb[0].mxu0
      %v1064 = vpop.f32.mrb[0].mxu0
      %v1065 = vadd.f32 0.0, %v1064
      %v1066 = vpop.f32.mrb[0].mxu0
      %1067 = vmatprep.mubr.bf16.mxu0 0
      %1068 = vmatmul.mubr.bf16.gmra.mrb[0].mxu0 %v706
      %v1069 = vpop.f32.mrb[0].mxu0
      %v1070 = vadd.f32 0.0, %v1069
      %v1071 = vpop.f32.mrb[0].mxu0
      %v1072 = vpop.f32.mrb[0].mxu0
      %v1073 = vadd.f32 0.0, %v1072
      %v1074 = vpop.f32.mrb[0].mxu0
      %1075 = vmatprep.mubr.bf16.mxu0 0
      %1076 = vmatmul.mubr.bf16.gmra.mrb[0].mxu0 %v709
      %v1077 = vpop.f32.mrb[0].mxu0
      %v1078 = vadd.f32 0.0, %v1077
      %v1079 = vpop.f32.mrb[0].mxu0
      %v1080 = vpop.f32.mrb[0].mxu0
      %v1081 = vadd.f32 0.0, %v1080
      %v1082 = vpop.f32.mrb[0].mxu0
      %1083 = vmatprep.mubr.bf16.mxu0 0
      %1084 = vmatmul.mubr.bf16.gmra.mrb[0].mxu0 %v1003
      %v1085 = vpop.f32.mrb[0].mxu0
      %v1086 = vadd.f32 0.0, %v1085
      %v1087 = vpop.f32.mrb[0].mxu0
      %v1088 = vpop.f32.mrb[0].mxu0
      %v1089 = vadd.f32 0.0, %v1088
      %v1090 = vpop.f32.mrb[0].mxu0
      %1091 = vmatprep.mubr.bf16.mxu0 0
      %1092 = vmatmul.mubr.bf16.gmra.mrb[0].mxu0 %v715
      %v1093 = vpop.f32.mrb[0].mxu0
      %v1094 = vadd.f32 0.0, %v1093
      %v1095 = vpop.f32.mrb[0].mxu0
      %v1096 = vpop.f32.mrb[0].mxu0
      %v1097 = vadd.f32 0.0, %v1096
      %v1098 = vpop.f32.mrb[0].mxu0
      %1099 = vmatprep.mubr.bf16.mxu0 0
      %1100 = vmatmul.mubr.bf16.gmra.mrb[0].mxu0 %v718
      %v1101 = vpop.f32.mrb[0].mxu0
      %v1102 = vadd.f32 0.0, %v1101
      %v1103 = vpop.f32.mrb[0].mxu0
      %v1104 = vpop.f32.mrb[0].mxu0
      %v1105 = vadd.f32 0.0, %v1104
      %v1106 = vpop.f32.mrb[0].mxu0
      %1107 = vmatprep.mubr.bf16.mxu0 0
      %1108 = vmatmul.mubr.bf16.gmra.mrb[0].mxu0 %v721
      %v1109 = vpop.f32.mrb[0].mxu0
      %v1110 = vadd.f32 0.0, %v1109
      %v1111 = vpop.f32.mrb[0].mxu0
      %v1112 = vpop.f32.mrb[0].mxu0
      %v1113 = vadd.f32 0.0, %v1112
      %v1114 = vpop.f32.mrb[0].mxu0
      %1115 = vmatprep.mubr.bf16.mxu0 0
      %1116 = vmatmul.mubr.bf16.gmra.mrb[0].mxu0 %v724
      %v1117 = vpop.f32.mrb[0].mxu0
      %v1118 = vadd.f32 0.0, %v1117
      %v1119 = vpop.f32.mrb[0].mxu0
      %v1120 = vpop.f32.mrb[0].mxu0
      %v1121 = vadd.f32 0.0, %v1120
      %v1122 = vpop.f32.mrb[0].mxu0
      %1123 = vmatprep.mubr.bf16.mxu0 0
      %1124 = vmatmul.mubr.bf16.gmra.mrb[0].mxu0 %v727
      %v1125 = vpop.f32.mrb[0].mxu0
      %v1126 = vadd.f32 0.0, %v1125
      %v1127 = vpop.f32.mrb[0].mxu0
      %v1128 = vpop.f32.mrb[0].mxu0
      %v1129 = vadd.f32 0.0, %v1128
      %v1130 = vpop.f32.mrb[0].mxu0
      %1131 = vmatprep.mubr.bf16.mxu0 0
      %1132 = vmatmul.mubr.bf16.gmra.mrb[0].mxu0 %v1006
      %v1133 = vpop.f32.mrb[0].mxu0
      %v1134 = vadd.f32 0.0, %v1133
      %v1135 = vpop.f32.mrb[0].mxu0
      %v1136 = vpop.f32.mrb[0].mxu0
      %v1137 = vadd.f32 0.0, %v1136
      %v1138 = vpop.f32.mrb[0].mxu0
      %1139 = vdwg.mxu0
      %v1140 = vadd.f32 %v906, %v1046
      %v1141 = vadd.f32 %v909, %v1049
      %v1142 = vadd.f32 %v914, %v1054
      %v1143 = vadd.f32 %v917, %v1057
      %v1144 = vadd.f32 %v922, %v1062
      %v1145 = vadd.f32 %v925, %v1065
      %v1146 = vadd.f32 %v930, %v1070
      %v1147 = vadd.f32 %v933, %v1073
      %v1148 = vadd.f32 %v938, %v1078
      %v1149 = vadd.f32 %v941, %v1081
      %v1150 = vadd.f32 %v946, %v1086
      %v1151 = vadd.f32 %v949, %v1089
      %v1152 = vadd.f32 %v954, %v1094
      %v1153 = vadd.f32 %v957, %v1097
      %v1154 = vadd.f32 %v962, %v1102
      %v1155 = vadd.f32 %v965, %v1105
      %v1156 = vadd.f32 %v970, %v1110
      %v1157 = vadd.f32 %v973, %v1113
      %v1158 = vadd.f32 %v978, %v1118
      %v1159 = vadd.f32 %v981, %v1121
      %v1160 = vadd.f32 %v986, %v1126
      %v1161 = vadd.f32 %v989, %v1129
      %v1162 = vadd.f32 %v994, %v1134
      %v1163 = vadd.f32 %v997, %v1137
      %v1164 = vld [vmem:[%s3] sm:$0x1]
      %v1166 = vlaneseq
      %v1167 = vshrl.u32 %v1166, 7
      %v1168 = vsub.s32 0, %v1167
      %v1169 = vrot.slane %v1164, %v1168
      %v1171 = vadd.f32 %v1140, %v1169
      %v1172 = vadd.f32 %v1141, %v1169
      %v1173 = vadd.f32 %v1142, %v1169
      %v1174 = vadd.f32 %v1143, %v1169
      %v1175 = vadd.f32 %v1144, %v1169
      %v1176 = vadd.f32 %v1145, %v1169
      %v1177 = vadd.f32 %v1146, %v1169
      %v1178 = vadd.f32 %v1147, %v1169
      %v1179 = vadd.f32 %v1148, %v1169
      %v1180 = vadd.f32 %v1149, %v1169
      %v1181 = vadd.f32 %v1150, %v1169
      %v1182 = vadd.f32 %v1151, %v1169
      %v1183 = vadd.f32 %v1152, %v1169
      %v1184 = vadd.f32 %v1153, %v1169
      %v1185 = vadd.f32 %v1154, %v1169
      %v1186 = vadd.f32 %v1155, %v1169
      %v1187 = vadd.f32 %v1156, %v1169
      %v1188 = vadd.f32 %v1157, %v1169
      %v1189 = vadd.f32 %v1158, %v1169
      %v1190 = vadd.f32 %v1159, %v1169
      %v1191 = vadd.f32 %v1160, %v1169
      %v1192 = vadd.f32 %v1161, %v1169
      %v1193 = vadd.f32 %v1162, %v1169
      %v1194 = vadd.f32 %v1163, %v1169
      %v1195 = vxor.u32 %v1171, 2147483648
      %v1196 = vxor.u32 %v1172, 2147483648
      %v1197 = vxor.u32 %v1173, 2147483648
      %v1198 = vxor.u32 %v1174, 2147483648
      %v1199 = vxor.u32 %v1175, 2147483648
      %v1200 = vxor.u32 %v1176, 2147483648
      %v1201 = vxor.u32 %v1177, 2147483648
      %v1202 = vxor.u32 %v1178, 2147483648
      %v1203 = vxor.u32 %v1179, 2147483648
      %v1204 = vxor.u32 %v1180, 2147483648
      %v1205 = vxor.u32 %v1181, 2147483648
      %v1206 = vxor.u32 %v1182, 2147483648
      %v1207 = vxor.u32 %v1183, 2147483648
      %v1208 = vxor.u32 %v1184, 2147483648
      %v1209 = vxor.u32 %v1185, 2147483648
      %v1210 = vxor.u32 %v1186, 2147483648
      %v1211 = vxor.u32 %v1187, 2147483648
      %v1212 = vxor.u32 %v1188, 2147483648
      %v1213 = vxor.u32 %v1189, 2147483648
      %v1214 = vxor.u32 %v1190, 2147483648
      %v1215 = vxor.u32 %v1191, 2147483648
      %v1216 = vxor.u32 %v1192, 2147483648
      %v1217 = vxor.u32 %v1193, 2147483648
      %v1218 = vxor.u32 %v1194, 2147483648
      %v1219 = vmul.f32 %v1195, 1.442695
      %v1220 = vpow.pop %v1219
      %v1221 = vmul.f32 %v1196, 1.442695
      %v1222 = vpow.pop %v1221
      %v1223 = vmul.f32 %v1197, 1.442695
      %v1224 = vpow.pop %v1223
      %v1225 = vmul.f32 %v1198, 1.442695
      %v1226 = vpow.pop %v1225
      %v1227 = vmul.f32 %v1199, 1.442695
      %v1228 = vpow.pop %v1227
      %v1229 = vmul.f32 %v1200, 1.442695
      %v1230 = vpow.pop %v1229
      %v1231 = vmul.f32 %v1201, 1.442695
      %v1232 = vpow.pop %v1231
      %v1233 = vmul.f32 %v1202, 1.442695
      %v1234 = vpow.pop %v1233
      %v1235 = vmul.f32 %v1203, 1.442695
      %v1236 = vpow.pop %v1235
      %v1237 = vmul.f32 %v1204, 1.442695
      %v1238 = vpow.pop %v1237
      %v1239 = vmul.f32 %v1205, 1.442695
      %v1240 = vpow.pop %v1239
      %v1241 = vmul.f32 %v1206, 1.442695
      %v1242 = vpow.pop %v1241
      %v1243 = vmul.f32 %v1207, 1.442695
      %v1244 = vpow.pop %v1243
      %v1245 = vmul.f32 %v1208, 1.442695
      %v1246 = vpow.pop %v1245
      %v1247 = vmul.f32 %v1209, 1.442695
      %v1248 = vpow.pop %v1247
      %v1249 = vmul.f32 %v1210, 1.442695
      %v1250 = vpow.pop %v1249
      %v1251 = vmul.f32 %v1211, 1.442695
      %v1252 = vpow.pop %v1251
      %v1253 = vmul.f32 %v1212, 1.442695
      %v1254 = vpow.pop %v1253
      %v1255 = vmul.f32 %v1213, 1.442695
      %v1256 = vpow.pop %v1255
      %v1257 = vmul.f32 %v1214, 1.442695
      %v1258 = vpow.pop %v1257
      %v1259 = vmul.f32 %v1215, 1.442695
      %v1260 = vpow.pop %v1259
      %v1261 = vmul.f32 %v1216, 1.442695
      %v1262 = vpow.pop %v1261
      %v1263 = vmul.f32 %v1217, 1.442695
      %v1264 = vpow.pop %v1263
      %v1265 = vmul.f32 %v1218, 1.442695
      %v1266 = vpow.pop %v1265
      %v1267 = vadd.f32 %v1220, 1.0
      %v1268 = vadd.f32 %v1222, 1.0
      %v1269 = vadd.f32 %v1224, 1.0
      %v1270 = vadd.f32 %v1226, 1.0
      %v1271 = vadd.f32 %v1228, 1.0
      %v1272 = vadd.f32 %v1230, 1.0
      %v1273 = vadd.f32 %v1232, 1.0
      %v1274 = vadd.f32 %v1234, 1.0
      %v1275 = vadd.f32 %v1236, 1.0
      %v1276 = vadd.f32 %v1238, 1.0
      %v1277 = vadd.f32 %v1240, 1.0
      %v1278 = vadd.f32 %v1242, 1.0
      %v1279 = vadd.f32 %v1244, 1.0
      %v1280 = vadd.f32 %v1246, 1.0
      %v1281 = vadd.f32 %v1248, 1.0
      %v1282 = vadd.f32 %v1250, 1.0
      %v1283 = vadd.f32 %v1252, 1.0
      %v1284 = vadd.f32 %v1254, 1.0
      %v1285 = vadd.f32 %v1256, 1.0
      %v1286 = vadd.f32 %v1258, 1.0
      %v1287 = vadd.f32 %v1260, 1.0
      %v1288 = vadd.f32 %v1262, 1.0
      %v1289 = vadd.f32 %v1264, 1.0
      %v1290 = vadd.f32 %v1266, 1.0
      %v1291 = vrcp.pop %v1267
      %v1292 = vmul.f32 1.0, %v1291
      %v1293 = vrcp.pop %v1268
      %v1294 = vmul.f32 1.0, %v1293
      %v1295 = vrcp.pop %v1269
      %v1296 = vmul.f32 1.0, %v1295
      %v1297 = vrcp.pop %v1270
      %v1298 = vmul.f32 1.0, %v1297
      %v1299 = vrcp.pop %v1271
      %v1300 = vmul.f32 1.0, %v1299
      %v1301 = vrcp.pop %v1272
      %v1302 = vmul.f32 1.0, %v1301
      %v1303 = vrcp.pop %v1273
      %v1304 = vmul.f32 1.0, %v1303
      %v1305 = vrcp.pop %v1274
      %v1306 = vmul.f32 1.0, %v1305
      %v1307 = vrcp.pop %v1275
      %v1308 = vmul.f32 1.0, %v1307
      %v1309 = vrcp.pop %v1276
      %v1310 = vmul.f32 1.0, %v1309
      %v1311 = vrcp.pop %v1277
      %v1312 = vmul.f32 1.0, %v1311
      %v1313 = vrcp.pop %v1278
      %v1314 = vmul.f32 1.0, %v1313
      %v1315 = vrcp.pop %v1279
      %v1316 = vmul.f32 1.0, %v1315
      %v1317 = vrcp.pop %v1280
      %v1318 = vmul.f32 1.0, %v1317
      %v1319 = vrcp.pop %v1281
      %v1320 = vmul.f32 1.0, %v1319
      %v1321 = vrcp.pop %v1282
      %v1322 = vmul.f32 1.0, %v1321
      %v1323 = vrcp.pop %v1283
      %v1324 = vmul.f32 1.0, %v1323
      %v1325 = vrcp.pop %v1284
      %v1326 = vmul.f32 1.0, %v1325
      %v1327 = vrcp.pop %v1285
      %v1328 = vmul.f32 1.0, %v1327
      %v1329 = vrcp.pop %v1286
      %v1330 = vmul.f32 1.0, %v1329
      %v1331 = vrcp.pop %v1287
      %v1332 = vmul.f32 1.0, %v1331
      %v1333 = vrcp.pop %v1288
      %v1334 = vmul.f32 1.0, %v1333
      %v1335 = vrcp.pop %v1289
      %v1336 = vmul.f32 1.0, %v1335
      %v1337 = vrcp.pop %v1290
      %v1338 = vmul.f32 1.0, %v1337
      %1363 = vrot.lane.b32.xlu0 %v1292, 112
      %v1364 = vpop.permute.xlu0 %1363
      %1365 = vrot.lane.b32.xlu0 %v1294, 112
      %v1366 = vpop.permute.xlu0 %1365
      %1367 = vrot.lane.b32.xlu0 %v1296, 112
      %v1368 = vpop.permute.xlu0 %1367
      %1369 = vrot.lane.b32.xlu0 %v1298, 112
      %v1370 = vpop.permute.xlu0 %1369
      %1371 = vrot.lane.b32.xlu0 %v1300, 112
      %v1372 = vpop.permute.xlu0 %1371
      %1373 = vrot.lane.b32.xlu0 %v1302, 112
      %v1374 = vpop.permute.xlu0 %1373
      %1375 = vrot.lane.b32.xlu0 %v1304, 112
      %v1376 = vpop.permute.xlu0 %1375
      %1377 = vrot.lane.b32.xlu0 %v1306, 112
      %v1378 = vpop.permute.xlu0 %1377
      %1379 = vrot.lane.b32.xlu0 %v1308, 112
      %v1380 = vpop.permute.xlu0 %1379
      %1381 = vrot.lane.b32.xlu0 %v1310, 112
      %v1382 = vpop.permute.xlu0 %1381
      %1383 = vrot.lane.b32.xlu0 %v1312, 112
      %v1384 = vpop.permute.xlu0 %1383
      %1385 = vrot.lane.b32.xlu0 %v1314, 112
      %v1386 = vpop.permute.xlu0 %1385
      %1387 = vrot.lane.b32.xlu0 %v1316, 112
      %v1388 = vpop.permute.xlu0 %1387
      %1389 = vrot.lane.b32.xlu0 %v1318, 112
      %v1390 = vpop.permute.xlu0 %1389
      %1391 = vrot.lane.b32.xlu0 %v1320, 112
      %v1392 = vpop.permute.xlu0 %1391
      %1393 = vrot.lane.b32.xlu0 %v1322, 112
      %v1394 = vpop.permute.xlu0 %1393
      %1395 = vrot.lane.b32.xlu0 %v1324, 112
      %v1396 = vpop.permute.xlu0 %1395
      %1397 = vrot.lane.b32.xlu0 %v1326, 112
      %v1398 = vpop.permute.xlu0 %1397
      %1399 = vrot.lane.b32.xlu0 %v1328, 112
      %v1400 = vpop.permute.xlu0 %1399
      %1401 = vrot.lane.b32.xlu0 %v1330, 112
      %v1402 = vpop.permute.xlu0 %1401
      %1403 = vrot.lane.b32.xlu0 %v1332, 112
      %v1404 = vpop.permute.xlu0 %1403
      %1405 = vrot.lane.b32.xlu0 %v1334, 112
      %v1406 = vpop.permute.xlu0 %1405
      %1407 = vrot.lane.b32.xlu0 %v1336, 112
      %v1408 = vpop.permute.xlu0 %1407
      %1409 = vrot.lane.b32.xlu0 %v1338, 112
      %v1410 = vpop.permute.xlu0 %1409
      %v1435 = vmul.f32 %v1171, %v1364
      %v1436 = vmul.f32 %v1172, %v1366
      %v1437 = vmul.f32 %v1173, %v1368
      %v1438 = vmul.f32 %v1174, %v1370
      %v1439 = vmul.f32 %v1175, %v1372
      %v1440 = vmul.f32 %v1176, %v1374
      %v1441 = vmul.f32 %v1177, %v1376
      %v1442 = vmul.f32 %v1178, %v1378
      %v1443 = vmul.f32 %v1179, %v1380
      %v1444 = vmul.f32 %v1180, %v1382
      %v1445 = vmul.f32 %v1181, %v1384
      %v1446 = vmul.f32 %v1182, %v1386
      %v1447 = vmul.f32 %v1183, %v1388
      %v1448 = vmul.f32 %v1184, %v1390
      %v1449 = vmul.f32 %v1185, %v1392
      %v1450 = vmul.f32 %v1186, %v1394
      %v1451 = vmul.f32 %v1187, %v1396
      %v1452 = vmul.f32 %v1188, %v1398
      %v1453 = vmul.f32 %v1189, %v1400
      %v1454 = vmul.f32 %v1190, %v1402
      %v1455 = vmul.f32 %v1191, %v1404
      %v1456 = vmul.f32 %v1192, %v1406
      %v1457 = vmul.f32 %v1193, %v1408
      %v1458 = vmul.f32 %v1194, %v1410
      %v1459 = vpack.c.bf16 %v1436, %v1435
      %v1460 = vpack.c.bf16 %v1438, %v1437
      %v1461 = vpack.c.bf16 %v1440, %v1439
      %v1462 = vpack.c.bf16 %v1442, %v1441
      %v1463 = vpack.c.bf16 %v1444, %v1443
      %v1464 = vpack.c.bf16 %v1446, %v1445
      %v1465 = vpack.c.bf16 %v1448, %v1447
      %v1466 = vpack.c.bf16 %v1450, %v1449
      %v1467 = vpack.c.bf16 %v1452, %v1451
      %v1468 = vpack.c.bf16 %v1454, %v1453
      %v1469 = vpack.c.bf16 %v1456, %v1455
      %v1470 = vpack.c.bf16 %v1458, %v1457
      %v1471 = vld [vmem:[%s4] sm:$0xf]
      %v1472 = vld [vmem:[%s4 + $0x4] sm:$0xf]
      %v1473 = vld [vmem:[%s5] sm:$0x1]
      %v1475 = vlaneseq
      %v1476 = vshrl.u32 %v1475, 7
      %v1477 = vsub.s32 0, %v1476
      %v1478 = vrot.slane %v1473, %v1477
      %v1482 = vunpack.c.l.b16 %v1471
      %v1483 = vunpack.c.l.b16 %v1472
      %v1484 = vpack.c.b16 %v1483, %v1482
      %vm1486 = vcmask 130048
      %v1488 = vsel %vm1486, %v1459, 0
      %v1491 = vsel %vm1486, %v1460, 0
      %v1494 = vsel %vm1486, %v1461, 0
      %v1497 = vsel %vm1486, %v1462, 0
      %v1500 = vsel %vm1486, %v1463, 0
      %v1503 = vsel %vm1486, %v1464, 0
      %v1506 = vsel %vm1486, %v1465, 0
      %v1509 = vsel %vm1486, %v1466, 0
      %v1512 = vsel %vm1486, %v1467, 0
      %v1515 = vsel %vm1486, %v1468, 0
      %v1518 = vsel %vm1486, %v1469, 0
      %v1521 = vsel %vm1486, %v1470, 0
      %1523 = vmatprep.subr.bf16.mxu0 0
      %1524 = vmatpush1.bf16.msra.mxu0 %v1484
      %1525 = vmatprep.subr.bf16.mxu0 0
      %1526 = vmatpush1.bf16.msra.mxu0 0
      %1527 = vmatprep.subr.bf16.mxu0 0
      %1528 = vmatpush1.bf16.msra.mxu0 0
      %1529 = vmatprep.subr.bf16.mxu0 0
      %1530 = vmatpush1.bf16.msra.mxu0 0
      %1531 = vmatprep.subr.bf16.mxu0 0
      %1532 = vmatpush1.bf16.msra.mxu0 0
      %1533 = vmatprep.subr.bf16.mxu0 0
      %1534 = vmatpush1.bf16.msra.mxu0 0
      %1535 = vmatprep.subr.bf16.mxu0 0
      %1536 = vmatpush1.bf16.msra.mxu0 0
      %1537 = vmatprep.subr.bf16.mxu0 0
      %1538 = vmatpush1.bf16.msra.mxu0 0
      %1539 = vmatprep.subr.bf16.mxu0 0
      %1540 = vmatpush1.bf16.msra.mxu0 0
      %1541 = vmatprep.subr.bf16.mxu0 0
      %1542 = vmatpush1.bf16.msra.mxu0 0
      %1543 = vmatprep.subr.bf16.mxu0 0
      %1544 = vmatpush1.bf16.msra.mxu0 0
      %1545 = vmatprep.subr.bf16.mxu0 0
      %1546 = vmatpush1.bf16.msra.mxu0 0
      %1547 = vmatprep.subr.bf16.mxu0 0
      %1548 = vmatpush1.bf16.msra.mxu0 0
      %1549 = vmatprep.subr.bf16.mxu0 0
      %1550 = vmatpush1.bf16.msra.mxu0 0
      %1551 = vmatprep.subr.bf16.mxu0 0
      %1552 = vmatpush1.bf16.msra.mxu0 0
      %1553 = vmatprep.subr.bf16.mxu0 0
      %1554 = vmatpush1.bf16.msra.mxu0 0
      %1555 = vmatprep.mubr.bf16.mxu0 0
      %1556 = vmatmul.mubr.bf16.gmra.mrb[0].mxu0 %v1488
      %v1557 = vpop.f32.mrb[0].mxu0
      %v1558 = vadd.f32 %v1478, %v1557
      %v1559 = vpop.f32.mrb[0].mxu0
      %v1560 = vpop.f32.mrb[0].mxu0
      %v1561 = vadd.f32 %v1478, %v1560
      %v1562 = vpop.f32.mrb[0].mxu0
      %1563 = vmatprep.mubr.bf16.mxu0 0
      %1564 = vmatmul.mubr.bf16.gmra.mrb[0].mxu0 %v1491
      %v1565 = vpop.f32.mrb[0].mxu0
      %v1566 = vadd.f32 %v1478, %v1565
      %v1567 = vpop.f32.mrb[0].mxu0
      %v1568 = vpop.f32.mrb[0].mxu0
      %v1569 = vadd.f32 %v1478, %v1568
      %v1570 = vpop.f32.mrb[0].mxu0
      %1571 = vmatprep.mubr.bf16.mxu0 0
      %1572 = vmatmul.mubr.bf16.gmra.mrb[0].mxu0 %v1494
      %v1573 = vpop.f32.mrb[0].mxu0
      %v1574 = vadd.f32 %v1478, %v1573
      %v1575 = vpop.f32.mrb[0].mxu0
      %v1576 = vpop.f32.mrb[0].mxu0
      %v1577 = vadd.f32 %v1478, %v1576
      %v1578 = vpop.f32.mrb[0].mxu0
      %1579 = vmatprep.mubr.bf16.mxu0 0
      %1580 = vmatmul.mubr.bf16.gmra.mrb[0].mxu0 %v1497
      %v1581 = vpop.f32.mrb[0].mxu0
      %v1582 = vadd.f32 %v1478, %v1581
      %v1583 = vpop.f32.mrb[0].mxu0
      %v1584 = vpop.f32.mrb[0].mxu0
      %v1585 = vadd.f32 %v1478, %v1584
      %v1586 = vpop.f32.mrb[0].mxu0
      %1587 = vmatprep.mubr.bf16.mxu0 0
      %1588 = vmatmul.mubr.bf16.gmra.mrb[0].mxu0 %v1500
      %v1589 = vpop.f32.mrb[0].mxu0
      %v1590 = vadd.f32 %v1478, %v1589
      %v1591 = vpop.f32.mrb[0].mxu0
      %v1592 = vpop.f32.mrb[0].mxu0
      %v1593 = vadd.f32 %v1478, %v1592
      %v1594 = vpop.f32.mrb[0].mxu0
      %1595 = vmatprep.mubr.bf16.mxu0 0
      %1596 = vmatmul.mubr.bf16.gmra.mrb[0].mxu0 %v1503
      %v1597 = vpop.f32.mrb[0].mxu0
      %v1598 = vadd.f32 %v1478, %v1597
      %v1599 = vpop.f32.mrb[0].mxu0
      %v1600 = vpop.f32.mrb[0].mxu0
      %v1601 = vadd.f32 %v1478, %v1600
      %v1602 = vpop.f32.mrb[0].mxu0
      %1603 = vmatprep.mubr.bf16.mxu0 0
      %1604 = vmatmul.mubr.bf16.gmra.mrb[0].mxu0 %v1506
      %v1605 = vpop.f32.mrb[0].mxu0
      %v1606 = vadd.f32 %v1478, %v1605
      %v1607 = vpop.f32.mrb[0].mxu0
      %v1608 = vpop.f32.mrb[0].mxu0
      %v1609 = vadd.f32 %v1478, %v1608
      %v1610 = vpop.f32.mrb[0].mxu0
      %1611 = vmatprep.mubr.bf16.mxu0 0
      %1612 = vmatmul.mubr.bf16.gmra.mrb[0].mxu0 %v1509
      %v1613 = vpop.f32.mrb[0].mxu0
      %v1614 = vadd.f32 %v1478, %v1613
      %v1615 = vpop.f32.mrb[0].mxu0
      %v1616 = vpop.f32.mrb[0].mxu0
      %v1617 = vadd.f32 %v1478, %v1616
      %v1618 = vpop.f32.mrb[0].mxu0
      %1619 = vmatprep.mubr.bf16.mxu0 0
      %1620 = vmatmul.mubr.bf16.gmra.mrb[0].mxu0 %v1512
      %v1621 = vpop.f32.mrb[0].mxu0
      %v1622 = vadd.f32 %v1478, %v1621
      %v1623 = vpop.f32.mrb[0].mxu0
      %v1624 = vpop.f32.mrb[0].mxu0
      %v1625 = vadd.f32 %v1478, %v1624
      %v1626 = vpop.f32.mrb[0].mxu0
      %1627 = vmatprep.mubr.bf16.mxu0 0
      %1628 = vmatmul.mubr.bf16.gmra.mrb[0].mxu0 %v1515
      %v1629 = vpop.f32.mrb[0].mxu0
      %v1630 = vadd.f32 %v1478, %v1629
      %v1631 = vpop.f32.mrb[0].mxu0
      %v1632 = vpop.f32.mrb[0].mxu0
      %v1633 = vadd.f32 %v1478, %v1632
      %v1634 = vpop.f32.mrb[0].mxu0
      %1635 = vmatprep.mubr.bf16.mxu0 0
      %1636 = vmatmul.mubr.bf16.gmra.mrb[0].mxu0 %v1518
      %v1637 = vpop.f32.mrb[0].mxu0
      %v1638 = vadd.f32 %v1478, %v1637
      %v1639 = vpop.f32.mrb[0].mxu0
      %v1640 = vpop.f32.mrb[0].mxu0
      %v1641 = vadd.f32 %v1478, %v1640
      %v1642 = vpop.f32.mrb[0].mxu0
      %1643 = vmatprep.mubr.bf16.mxu0 0
      %1644 = vmatmul.mubr.bf16.gmra.mrb[0].mxu0 %v1521
      %v1645 = vpop.f32.mrb[0].mxu0
      %v1646 = vadd.f32 %v1478, %v1645
      %v1647 = vpop.f32.mrb[0].mxu0
      %v1648 = vpop.f32.mrb[0].mxu0
      %v1649 = vadd.f32 %v1478, %v1648
      %v1650 = vpop.f32.mrb[0].mxu0
      %1651 = vdwg.mxu0
      %v1652 = vpack.c.bf16 %v1561, %v1558
      %v1653 = vpack.c.bf16 %v1569, %v1566
      %v1654 = vpack.c.bf16 %v1577, %v1574
      %v1655 = vpack.c.bf16 %v1585, %v1582
      %v1656 = vpack.c.bf16 %v1593, %v1590
      %v1657 = vpack.c.bf16 %v1601, %v1598
      %v1658 = vpack.c.bf16 %v1609, %v1606
      %v1659 = vpack.c.bf16 %v1617, %v1614
      %v1660 = vpack.c.bf16 %v1625, %v1622
      %v1661 = vpack.c.bf16 %v1633, %v1630
      %v1662 = vpack.c.bf16 %v1641, %v1638
      %v1663 = vpack.c.bf16 %v1649, %v1646
      %v1664 = vld [vmem:[%s6] sm:$0xf]
      %v1665 = vld [vmem:[%s1] sm:$0xf]
      %v1666 = vld [vmem:[%s1 + $0x4] sm:$0xf]
      %v1669 = vunpack.c.l.b16 %v1665
      %v1670 = vunpack.c.l.b16 %v1666
      %v1671 = vpack.c.b16 %v1670, %v1669
      %v1673 = vsel %vm1486, %v1671, 0
      %1675 = vmatprep.subr.bf16.mxu0 0
      %1676 = vmatpush1.bf16.msra.mxu0 %v1652
      %1677 = vmatprep.subr.bf16.mxu0 0
      %1678 = vmatpush1.bf16.msra.mxu0 0
      %1679 = vmatprep.subr.bf16.mxu0 0
      %1680 = vmatpush1.bf16.msra.mxu0 0
      %1681 = vmatprep.subr.bf16.mxu0 0
      %1682 = vmatpush1.bf16.msra.mxu0 0
      %1683 = vmatprep.subr.bf16.mxu0 0
      %1684 = vmatpush1.bf16.msra.mxu0 0
      %1685 = vmatprep.subr.bf16.mxu0 0
      %1686 = vmatpush1.bf16.msra.mxu0 0
      %1687 = vmatprep.subr.bf16.mxu0 0
      %1688 = vmatpush1.bf16.msra.mxu0 0
      %1689 = vmatprep.subr.bf16.mxu0 0
      %1690 = vmatpush1.bf16.msra.mxu0 0
      %1691 = vmatprep.subr.bf16.mxu0 0
      %1692 = vmatpush1.bf16.msra.mxu0 0
      %1693 = vmatprep.subr.bf16.mxu0 0
      %1694 = vmatpush1.bf16.msra.mxu0 0
      %1695 = vmatprep.subr.bf16.mxu0 0
      %1696 = vmatpush1.bf16.msra.mxu0 0
      %1697 = vmatprep.subr.bf16.mxu0 0
      %1698 = vmatpush1.bf16.msra.mxu0 0
      %1699 = vmatprep.subr.bf16.mxu0 0
      %1700 = vmatpush1.bf16.msra.mxu0 0
      %1701 = vmatprep.subr.bf16.mxu0 0
      %1702 = vmatpush1.bf16.msra.mxu0 0
      %1703 = vmatprep.subr.bf16.mxu0 0
      %1704 = vmatpush1.bf16.msra.mxu0 0
      %1705 = vmatprep.subr.bf16.mxu0 0
      %1706 = vmatpush1.bf16.msra.mxu0 0
      %1707 = vmatprep.mubr.bf16.mxu0 0
      %1708 = vmatmul.mubr.bf16.gmra.mrb[0].mxu0 %v1673
      %v1709 = vpop.f32.mrb[0].mxu0
      %v1710 = vadd.f32 0.0, %v1709
      %v1711 = vpop.f32.mrb[0].mxu0
      %v1712 = vpop.f32.mrb[0].mxu0
      %v1713 = vadd.f32 0.0, %v1712
      %v1714 = vpop.f32.mrb[0].mxu0
      %1715 = vdwg.mxu0
      %1716 = vmatprep.subr.bf16.mxu0 0
      %1717 = vmatpush1.bf16.msra.mxu0 %v1653
      %1718 = vmatprep.subr.bf16.mxu0 0
      %1719 = vmatpush1.bf16.msra.mxu0 0
      %1720 = vmatprep.subr.bf16.mxu0 0
      %1721 = vmatpush1.bf16.msra.mxu0 0
      %1722 = vmatprep.subr.bf16.mxu0 0
      %1723 = vmatpush1.bf16.msra.mxu0 0
      %1724 = vmatprep.subr.bf16.mxu0 0
      %1725 = vmatpush1.bf16.msra.mxu0 0
      %1726 = vmatprep.subr.bf16.mxu0 0
      %1727 = vmatpush1.bf16.msra.mxu0 0
      %1728 = vmatprep.subr.bf16.mxu0 0
      %1729 = vmatpush1.bf16.msra.mxu0 0
      %1730 = vmatprep.subr.bf16.mxu0 0
      %1731 = vmatpush1.bf16.msra.mxu0 0
      %1732 = vmatprep.subr.bf16.mxu0 0
      %1733 = vmatpush1.bf16.msra.mxu0 0
      %1734 = vmatprep.subr.bf16.mxu0 0
      %1735 = vmatpush1.bf16.msra.mxu0 0
      %1736 = vmatprep.subr.bf16.mxu0 0
      %1737 = vmatpush1.bf16.msra.mxu0 0
      %1738 = vmatprep.subr.bf16.mxu0 0
      %1739 = vmatpush1.bf16.msra.mxu0 0
      %1740 = vmatprep.subr.bf16.mxu0 0
      %1741 = vmatpush1.bf16.msra.mxu0 0
      %1742 = vmatprep.subr.bf16.mxu0 0
      %1743 = vmatpush1.bf16.msra.mxu0 0
      %1744 = vmatprep.subr.bf16.mxu0 0
      %1745 = vmatpush1.bf16.msra.mxu0 0
      %1746 = vmatprep.subr.bf16.mxu0 0
      %1747 = vmatpush1.bf16.msra.mxu0 0
      %1748 = vmatprep.mubr.bf16.mxu0 0
      %1749 = vmatmul.mubr.bf16.gmra.mrb[0].mxu0 %v1673
      %v1750 = vpop.f32.mrb[0].mxu0
      %v1751 = vadd.f32 0.0, %v1750
      %v1752 = vpop.f32.mrb[0].mxu0
      %v1753 = vpop.f32.mrb[0].mxu0
      %v1754 = vadd.f32 0.0, %v1753
      %v1755 = vpop.f32.mrb[0].mxu0
      %1756 = vdwg.mxu0
      %1757 = vmatprep.subr.bf16.mxu0 0
      %1758 = vmatpush1.bf16.msra.mxu0 %v1654
      %1759 = vmatprep.subr.bf16.mxu0 0
      %1760 = vmatpush1.bf16.msra.mxu0 0
      %1761 = vmatprep.subr.bf16.mxu0 0
      %1762 = vmatpush1.bf16.msra.mxu0 0
      %1763 = vmatprep.subr.bf16.mxu0 0
      %1764 = vmatpush1.bf16.msra.mxu0 0
      %1765 = vmatprep.subr.bf16.mxu0 0
      %1766 = vmatpush1.bf16.msra.mxu0 0
      %1767 = vmatprep.subr.bf16.mxu0 0
      %1768 = vmatpush1.bf16.msra.mxu0 0
      %1769 = vmatprep.subr.bf16.mxu0 0
      %1770 = vmatpush1.bf16.msra.mxu0 0
      %1771 = vmatprep.subr.bf16.mxu0 0
      %1772 = vmatpush1.bf16.msra.mxu0 0
      %1773 = vmatprep.subr.bf16.mxu0 0
      %1774 = vmatpush1.bf16.msra.mxu0 0
      %1775 = vmatprep.subr.bf16.mxu0 0
      %1776 = vmatpush1.bf16.msra.mxu0 0
      %1777 = vmatprep.subr.bf16.mxu0 0
      %1778 = vmatpush1.bf16.msra.mxu0 0
      %1779 = vmatprep.subr.bf16.mxu0 0
      %1780 = vmatpush1.bf16.msra.mxu0 0
      %1781 = vmatprep.subr.bf16.mxu0 0
      %1782 = vmatpush1.bf16.msra.mxu0 0
      %1783 = vmatprep.subr.bf16.mxu0 0
      %1784 = vmatpush1.bf16.msra.mxu0 0
      %1785 = vmatprep.subr.bf16.mxu0 0
      %1786 = vmatpush1.bf16.msra.mxu0 0
      %1787 = vmatprep.subr.bf16.mxu0 0
      %1788 = vmatpush1.bf16.msra.mxu0 0
      %1789 = vmatprep.mubr.bf16.mxu0 0
      %1790 = vmatmul.mubr.bf16.gmra.mrb[0].mxu0 %v1673
      %v1791 = vpop.f32.mrb[0].mxu0
      %v1792 = vadd.f32 0.0, %v1791
      %v1793 = vpop.f32.mrb[0].mxu0
      %v1794 = vpop.f32.mrb[0].mxu0
      %v1795 = vadd.f32 0.0, %v1794
      %v1796 = vpop.f32.mrb[0].mxu0
      %1797 = vdwg.mxu0
      %1798 = vmatprep.subr.bf16.mxu0 0
      %1799 = vmatpush1.bf16.msra.mxu0 %v1655
      %1800 = vmatprep.subr.bf16.mxu0 0
      %1801 = vmatpush1.bf16.msra.mxu0 0
      %1802 = vmatprep.subr.bf16.mxu0 0
      %1803 = vmatpush1.bf16.msra.mxu0 0
      %1804 = vmatprep.subr.bf16.mxu0 0
      %1805 = vmatpush1.bf16.msra.mxu0 0
      %1806 = vmatprep.subr.bf16.mxu0 0
      %1807 = vmatpush1.bf16.msra.mxu0 0
      %1808 = vmatprep.subr.bf16.mxu0 0
      %1809 = vmatpush1.bf16.msra.mxu0 0
      %1810 = vmatprep.subr.bf16.mxu0 0
      %1811 = vmatpush1.bf16.msra.mxu0 0
      %1812 = vmatprep.subr.bf16.mxu0 0
      %1813 = vmatpush1.bf16.msra.mxu0 0
      %1814 = vmatprep.subr.bf16.mxu0 0
      %1815 = vmatpush1.bf16.msra.mxu0 0
      %1816 = vmatprep.subr.bf16.mxu0 0
      %1817 = vmatpush1.bf16.msra.mxu0 0
      %1818 = vmatprep.subr.bf16.mxu0 0
      %1819 = vmatpush1.bf16.msra.mxu0 0
      %1820 = vmatprep.subr.bf16.mxu0 0
      %1821 = vmatpush1.bf16.msra.mxu0 0
      %1822 = vmatprep.subr.bf16.mxu0 0
      %1823 = vmatpush1.bf16.msra.mxu0 0
      %1824 = vmatprep.subr.bf16.mxu0 0
      %1825 = vmatpush1.bf16.msra.mxu0 0
      %1826 = vmatprep.subr.bf16.mxu0 0
      %1827 = vmatpush1.bf16.msra.mxu0 0
      %1828 = vmatprep.subr.bf16.mxu0 0
      %1829 = vmatpush1.bf16.msra.mxu0 0
      %1830 = vmatprep.mubr.bf16.mxu0 0
      %1831 = vmatmul.mubr.bf16.gmra.mrb[0].mxu0 %v1673
      %v1832 = vpop.f32.mrb[0].mxu0
      %v1833 = vadd.f32 0.0, %v1832
      %v1834 = vpop.f32.mrb[0].mxu0
      %v1835 = vpop.f32.mrb[0].mxu0
      %v1836 = vadd.f32 0.0, %v1835
      %v1837 = vpop.f32.mrb[0].mxu0
      %1838 = vdwg.mxu0
      %1839 = vmatprep.subr.bf16.mxu0 0
      %1840 = vmatpush1.bf16.msra.mxu0 %v1656
      %1841 = vmatprep.subr.bf16.mxu0 0
      %1842 = vmatpush1.bf16.msra.mxu0 0
      %1843 = vmatprep.subr.bf16.mxu0 0
      %1844 = vmatpush1.bf16.msra.mxu0 0
      %1845 = vmatprep.subr.bf16.mxu0 0
      %1846 = vmatpush1.bf16.msra.mxu0 0
      %1847 = vmatprep.subr.bf16.mxu0 0
      %1848 = vmatpush1.bf16.msra.mxu0 0
      %1849 = vmatprep.subr.bf16.mxu0 0
      %1850 = vmatpush1.bf16.msra.mxu0 0
      %1851 = vmatprep.subr.bf16.mxu0 0
      %1852 = vmatpush1.bf16.msra.mxu0 0
      %1853 = vmatprep.subr.bf16.mxu0 0
      %1854 = vmatpush1.bf16.msra.mxu0 0
      %1855 = vmatprep.subr.bf16.mxu0 0
      %1856 = vmatpush1.bf16.msra.mxu0 0
      %1857 = vmatprep.subr.bf16.mxu0 0
      %1858 = vmatpush1.bf16.msra.mxu0 0
      %1859 = vmatprep.subr.bf16.mxu0 0
      %1860 = vmatpush1.bf16.msra.mxu0 0
      %1861 = vmatprep.subr.bf16.mxu0 0
      %1862 = vmatpush1.bf16.msra.mxu0 0
      %1863 = vmatprep.subr.bf16.mxu0 0
      %1864 = vmatpush1.bf16.msra.mxu0 0
      %1865 = vmatprep.subr.bf16.mxu0 0
      %1866 = vmatpush1.bf16.msra.mxu0 0
      %1867 = vmatprep.subr.bf16.mxu0 0
      %1868 = vmatpush1.bf16.msra.mxu0 0
      %1869 = vmatprep.subr.bf16.mxu0 0
      %1870 = vmatpush1.bf16.msra.mxu0 0
      %1871 = vmatprep.mubr.bf16.mxu0 0
      %1872 = vmatmul.mubr.bf16.gmra.mrb[0].mxu0 %v1673
      %v1873 = vpop.f32.mrb[0].mxu0
      %v1874 = vadd.f32 0.0, %v1873
      %v1875 = vpop.f32.mrb[0].mxu0
      %v1876 = vpop.f32.mrb[0].mxu0
      %v1877 = vadd.f32 0.0, %v1876
      %v1878 = vpop.f32.mrb[0].mxu0
      %1879 = vdwg.mxu0
      %1880 = vmatprep.subr.bf16.mxu0 0
      %1881 = vmatpush1.bf16.msra.mxu0 %v1657
      %1882 = vmatprep.subr.bf16.mxu0 0
      %1883 = vmatpush1.bf16.msra.mxu0 0
      %1884 = vmatprep.subr.bf16.mxu0 0
      %1885 = vmatpush1.bf16.msra.mxu0 0
      %1886 = vmatprep.subr.bf16.mxu0 0
      %1887 = vmatpush1.bf16.msra.mxu0 0
      %1888 = vmatprep.subr.bf16.mxu0 0
      %1889 = vmatpush1.bf16.msra.mxu0 0
      %1890 = vmatprep.subr.bf16.mxu0 0
      %1891 = vmatpush1.bf16.msra.mxu0 0
      %1892 = vmatprep.subr.bf16.mxu0 0
      %1893 = vmatpush1.bf16.msra.mxu0 0
      %1894 = vmatprep.subr.bf16.mxu0 0
      %1895 = vmatpush1.bf16.msra.mxu0 0
      %1896 = vmatprep.subr.bf16.mxu0 0
      %1897 = vmatpush1.bf16.msra.mxu0 0
      %1898 = vmatprep.subr.bf16.mxu0 0
      %1899 = vmatpush1.bf16.msra.mxu0 0
      %1900 = vmatprep.subr.bf16.mxu0 0
      %1901 = vmatpush1.bf16.msra.mxu0 0
      %1902 = vmatprep.subr.bf16.mxu0 0
      %1903 = vmatpush1.bf16.msra.mxu0 0
      %1904 = vmatprep.subr.bf16.mxu0 0
      %1905 = vmatpush1.bf16.msra.mxu0 0
      %1906 = vmatprep.subr.bf16.mxu0 0
      %1907 = vmatpush1.bf16.msra.mxu0 0
      %1908 = vmatprep.subr.bf16.mxu0 0
      %1909 = vmatpush1.bf16.msra.mxu0 0
      %1910 = vmatprep.subr.bf16.mxu0 0
      %1911 = vmatpush1.bf16.msra.mxu0 0
      %1912 = vmatprep.mubr.bf16.mxu0 0
      %1913 = vmatmul.mubr.bf16.gmra.mrb[0].mxu0 %v1673
      %v1914 = vpop.f32.mrb[0].mxu0
      %v1915 = vadd.f32 0.0, %v1914
      %v1916 = vpop.f32.mrb[0].mxu0
      %v1917 = vpop.f32.mrb[0].mxu0
      %v1918 = vadd.f32 0.0, %v1917
      %v1919 = vpop.f32.mrb[0].mxu0
      %1920 = vdwg.mxu0
      %1921 = vmatprep.subr.bf16.mxu0 0
      %1922 = vmatpush1.bf16.msra.mxu0 %v1658
      %1923 = vmatprep.subr.bf16.mxu0 0
      %1924 = vmatpush1.bf16.msra.mxu0 0
      %1925 = vmatprep.subr.bf16.mxu0 0
      %1926 = vmatpush1.bf16.msra.mxu0 0
      %1927 = vmatprep.subr.bf16.mxu0 0
      %1928 = vmatpush1.bf16.msra.mxu0 0
      %1929 = vmatprep.subr.bf16.mxu0 0
      %1930 = vmatpush1.bf16.msra.mxu0 0
      %1931 = vmatprep.subr.bf16.mxu0 0
      %1932 = vmatpush1.bf16.msra.mxu0 0
      %1933 = vmatprep.subr.bf16.mxu0 0
      %1934 = vmatpush1.bf16.msra.mxu0 0
      %1935 = vmatprep.subr.bf16.mxu0 0
      %1936 = vmatpush1.bf16.msra.mxu0 0
      %1937 = vmatprep.subr.bf16.mxu0 0
      %1938 = vmatpush1.bf16.msra.mxu0 0
      %1939 = vmatprep.subr.bf16.mxu0 0
      %1940 = vmatpush1.bf16.msra.mxu0 0
      %1941 = vmatprep.subr.bf16.mxu0 0
      %1942 = vmatpush1.bf16.msra.mxu0 0
      %1943 = vmatprep.subr.bf16.mxu0 0
      %1944 = vmatpush1.bf16.msra.mxu0 0
      %1945 = vmatprep.subr.bf16.mxu0 0
      %1946 = vmatpush1.bf16.msra.mxu0 0
      %1947 = vmatprep.subr.bf16.mxu0 0
      %1948 = vmatpush1.bf16.msra.mxu0 0
      %1949 = vmatprep.subr.bf16.mxu0 0
      %1950 = vmatpush1.bf16.msra.mxu0 0
      %1951 = vmatprep.subr.bf16.mxu0 0
      %1952 = vmatpush1.bf16.msra.mxu0 0
      %1953 = vmatprep.mubr.bf16.mxu0 0
      %1954 = vmatmul.mubr.bf16.gmra.mrb[0].mxu0 %v1673
      %v1955 = vpop.f32.mrb[0].mxu0
      %v1956 = vadd.f32 0.0, %v1955
      %v1957 = vpop.f32.mrb[0].mxu0
      %v1958 = vpop.f32.mrb[0].mxu0
      %v1959 = vadd.f32 0.0, %v1958
      %v1960 = vpop.f32.mrb[0].mxu0
      %1961 = vdwg.mxu0
      %1962 = vmatprep.subr.bf16.mxu0 0
      %1963 = vmatpush1.bf16.msra.mxu0 %v1659
      %1964 = vmatprep.subr.bf16.mxu0 0
      %1965 = vmatpush1.bf16.msra.mxu0 0
      %1966 = vmatprep.subr.bf16.mxu0 0
      %1967 = vmatpush1.bf16.msra.mxu0 0
      %1968 = vmatprep.subr.bf16.mxu0 0
      %1969 = vmatpush1.bf16.msra.mxu0 0
      %1970 = vmatprep.subr.bf16.mxu0 0
      %1971 = vmatpush1.bf16.msra.mxu0 0
      %1972 = vmatprep.subr.bf16.mxu0 0
      %1973 = vmatpush1.bf16.msra.mxu0 0
      %1974 = vmatprep.subr.bf16.mxu0 0
      %1975 = vmatpush1.bf16.msra.mxu0 0
      %1976 = vmatprep.subr.bf16.mxu0 0
      %1977 = vmatpush1.bf16.msra.mxu0 0
      %1978 = vmatprep.subr.bf16.mxu0 0
      %1979 = vmatpush1.bf16.msra.mxu0 0
      %1980 = vmatprep.subr.bf16.mxu0 0
      %1981 = vmatpush1.bf16.msra.mxu0 0
      %1982 = vmatprep.subr.bf16.mxu0 0
      %1983 = vmatpush1.bf16.msra.mxu0 0
      %1984 = vmatprep.subr.bf16.mxu0 0
      %1985 = vmatpush1.bf16.msra.mxu0 0
      %1986 = vmatprep.subr.bf16.mxu0 0
      %1987 = vmatpush1.bf16.msra.mxu0 0
      %1988 = vmatprep.subr.bf16.mxu0 0
      %1989 = vmatpush1.bf16.msra.mxu0 0
      %1990 = vmatprep.subr.bf16.mxu0 0
      %1991 = vmatpush1.bf16.msra.mxu0 0
      %1992 = vmatprep.subr.bf16.mxu0 0
      %1993 = vmatpush1.bf16.msra.mxu0 0
      %1994 = vmatprep.mubr.bf16.mxu0 0
      %1995 = vmatmul.mubr.bf16.gmra.mrb[0].mxu0 %v1673
      %v1996 = vpop.f32.mrb[0].mxu0
      %v1997 = vadd.f32 0.0, %v1996
      %v1998 = vpop.f32.mrb[0].mxu0
      %v1999 = vpop.f32.mrb[0].mxu0
      %v2000 = vadd.f32 0.0, %v1999
      %v2001 = vpop.f32.mrb[0].mxu0
      %2002 = vdwg.mxu0
      %2003 = vmatprep.subr.bf16.mxu0 0
      %2004 = vmatpush1.bf16.msra.mxu0 %v1660
      %2005 = vmatprep.subr.bf16.mxu0 0
      %2006 = vmatpush1.bf16.msra.mxu0 0
      %2007 = vmatprep.subr.bf16.mxu0 0
      %2008 = vmatpush1.bf16.msra.mxu0 0
      %2009 = vmatprep.subr.bf16.mxu0 0
      %2010 = vmatpush1.bf16.msra.mxu0 0
      %2011 = vmatprep.subr.bf16.mxu0 0
      %2012 = vmatpush1.bf16.msra.mxu0 0
      %2013 = vmatprep.subr.bf16.mxu0 0
      %2014 = vmatpush1.bf16.msra.mxu0 0
      %2015 = vmatprep.subr.bf16.mxu0 0
      %2016 = vmatpush1.bf16.msra.mxu0 0
      %2017 = vmatprep.subr.bf16.mxu0 0
      %2018 = vmatpush1.bf16.msra.mxu0 0
      %2019 = vmatprep.subr.bf16.mxu0 0
      %2020 = vmatpush1.bf16.msra.mxu0 0
      %2021 = vmatprep.subr.bf16.mxu0 0
      %2022 = vmatpush1.bf16.msra.mxu0 0
      %2023 = vmatprep.subr.bf16.mxu0 0
      %2024 = vmatpush1.bf16.msra.mxu0 0
      %2025 = vmatprep.subr.bf16.mxu0 0
      %2026 = vmatpush1.bf16.msra.mxu0 0
      %2027 = vmatprep.subr.bf16.mxu0 0
      %2028 = vmatpush1.bf16.msra.mxu0 0
      %2029 = vmatprep.subr.bf16.mxu0 0
      %2030 = vmatpush1.bf16.msra.mxu0 0
      %2031 = vmatprep.subr.bf16.mxu0 0
      %2032 = vmatpush1.bf16.msra.mxu0 0
      %2033 = vmatprep.subr.bf16.mxu0 0
      %2034 = vmatpush1.bf16.msra.mxu0 0
      %2035 = vmatprep.mubr.bf16.mxu0 0
      %2036 = vmatmul.mubr.bf16.gmra.mrb[0].mxu0 %v1673
      %v2037 = vpop.f32.mrb[0].mxu0
      %v2038 = vadd.f32 0.0, %v2037
      %v2039 = vpop.f32.mrb[0].mxu0
      %v2040 = vpop.f32.mrb[0].mxu0
      %v2041 = vadd.f32 0.0, %v2040
      %v2042 = vpop.f32.mrb[0].mxu0
      %2043 = vdwg.mxu0
      %2044 = vmatprep.subr.bf16.mxu0 0
      %2045 = vmatpush1.bf16.msra.mxu0 %v1661
      %2046 = vmatprep.subr.bf16.mxu0 0
      %2047 = vmatpush1.bf16.msra.mxu0 0
      %2048 = vmatprep.subr.bf16.mxu0 0
      %2049 = vmatpush1.bf16.msra.mxu0 0
      %2050 = vmatprep.subr.bf16.mxu0 0
      %2051 = vmatpush1.bf16.msra.mxu0 0
      %2052 = vmatprep.subr.bf16.mxu0 0
      %2053 = vmatpush1.bf16.msra.mxu0 0
      %2054 = vmatprep.subr.bf16.mxu0 0
      %2055 = vmatpush1.bf16.msra.mxu0 0
      %2056 = vmatprep.subr.bf16.mxu0 0
      %2057 = vmatpush1.bf16.msra.mxu0 0
      %2058 = vmatprep.subr.bf16.mxu0 0
      %2059 = vmatpush1.bf16.msra.mxu0 0
      %2060 = vmatprep.subr.bf16.mxu0 0
      %2061 = vmatpush1.bf16.msra.mxu0 0
      %2062 = vmatprep.subr.bf16.mxu0 0
      %2063 = vmatpush1.bf16.msra.mxu0 0
      %2064 = vmatprep.subr.bf16.mxu0 0
      %2065 = vmatpush1.bf16.msra.mxu0 0
      %2066 = vmatprep.subr.bf16.mxu0 0
      %2067 = vmatpush1.bf16.msra.mxu0 0
      %2068 = vmatprep.subr.bf16.mxu0 0
      %2069 = vmatpush1.bf16.msra.mxu0 0
      %2070 = vmatprep.subr.bf16.mxu0 0
      %2071 = vmatpush1.bf16.msra.mxu0 0
      %2072 = vmatprep.subr.bf16.mxu0 0
      %2073 = vmatpush1.bf16.msra.mxu0 0
      %2074 = vmatprep.subr.bf16.mxu0 0
      %2075 = vmatpush1.bf16.msra.mxu0 0
      %2076 = vmatprep.mubr.bf16.mxu0 0
      %2077 = vmatmul.mubr.bf16.gmra.mrb[0].mxu0 %v1673
      %v2078 = vpop.f32.mrb[0].mxu0
      %v2079 = vadd.f32 0.0, %v2078
      %v2080 = vpop.f32.mrb[0].mxu0
      %v2081 = vpop.f32.mrb[0].mxu0
      %v2082 = vadd.f32 0.0, %v2081
      %v2083 = vpop.f32.mrb[0].mxu0
      %2084 = vdwg.mxu0
      %2085 = vmatprep.subr.bf16.mxu0 0
      %2086 = vmatpush1.bf16.msra.mxu0 %v1662
      %2087 = vmatprep.subr.bf16.mxu0 0
      %2088 = vmatpush1.bf16.msra.mxu0 0
      %2089 = vmatprep.subr.bf16.mxu0 0
      %2090 = vmatpush1.bf16.msra.mxu0 0
      %2091 = vmatprep.subr.bf16.mxu0 0
      %2092 = vmatpush1.bf16.msra.mxu0 0
      %2093 = vmatprep.subr.bf16.mxu0 0
      %2094 = vmatpush1.bf16.msra.mxu0 0
      %2095 = vmatprep.subr.bf16.mxu0 0
      %2096 = vmatpush1.bf16.msra.mxu0 0
      %2097 = vmatprep.subr.bf16.mxu0 0
      %2098 = vmatpush1.bf16.msra.mxu0 0
      %2099 = vmatprep.subr.bf16.mxu0 0
      %2100 = vmatpush1.bf16.msra.mxu0 0
      %2101 = vmatprep.subr.bf16.mxu0 0
      %2102 = vmatpush1.bf16.msra.mxu0 0
      %2103 = vmatprep.subr.bf16.mxu0 0
      %2104 = vmatpush1.bf16.msra.mxu0 0
      %2105 = vmatprep.subr.bf16.mxu0 0
      %2106 = vmatpush1.bf16.msra.mxu0 0
      %2107 = vmatprep.subr.bf16.mxu0 0
      %2108 = vmatpush1.bf16.msra.mxu0 0
      %2109 = vmatprep.subr.bf16.mxu0 0
      %2110 = vmatpush1.bf16.msra.mxu0 0
      %2111 = vmatprep.subr.bf16.mxu0 0
      %2112 = vmatpush1.bf16.msra.mxu0 0
      %2113 = vmatprep.subr.bf16.mxu0 0
      %2114 = vmatpush1.bf16.msra.mxu0 0
      %2115 = vmatprep.subr.bf16.mxu0 0
      %2116 = vmatpush1.bf16.msra.mxu0 0
      %2117 = vmatprep.mubr.bf16.mxu0 0
      %2118 = vmatmul.mubr.bf16.gmra.mrb[0].mxu0 %v1673
      %v2119 = vpop.f32.mrb[0].mxu0
      %v2120 = vadd.f32 0.0, %v2119
      %v2121 = vpop.f32.mrb[0].mxu0
      %v2122 = vpop.f32.mrb[0].mxu0
      %v2123 = vadd.f32 0.0, %v2122
      %v2124 = vpop.f32.mrb[0].mxu0
      %2125 = vdwg.mxu0
      %2126 = vmatprep.subr.bf16.mxu0 0
      %2127 = vmatpush1.bf16.msra.mxu0 %v1663
      %2128 = vmatprep.subr.bf16.mxu0 0
      %2129 = vmatpush1.bf16.msra.mxu0 0
      %2130 = vmatprep.subr.bf16.mxu0 0
      %2131 = vmatpush1.bf16.msra.mxu0 0
      %2132 = vmatprep.subr.bf16.mxu0 0
      %2133 = vmatpush1.bf16.msra.mxu0 0
      %2134 = vmatprep.subr.bf16.mxu0 0
      %2135 = vmatpush1.bf16.msra.mxu0 0
      %2136 = vmatprep.subr.bf16.mxu0 0
      %2137 = vmatpush1.bf16.msra.mxu0 0
      %2138 = vmatprep.subr.bf16.mxu0 0
      %2139 = vmatpush1.bf16.msra.mxu0 0
      %2140 = vmatprep.subr.bf16.mxu0 0
      %2141 = vmatpush1.bf16.msra.mxu0 0
      %2142 = vmatprep.subr.bf16.mxu0 0
      %2143 = vmatpush1.bf16.msra.mxu0 0
      %2144 = vmatprep.subr.bf16.mxu0 0
      %2145 = vmatpush1.bf16.msra.mxu0 0
      %2146 = vmatprep.subr.bf16.mxu0 0
      %2147 = vmatpush1.bf16.msra.mxu0 0
      %2148 = vmatprep.subr.bf16.mxu0 0
      %2149 = vmatpush1.bf16.msra.mxu0 0
      %2150 = vmatprep.subr.bf16.mxu0 0
      %2151 = vmatpush1.bf16.msra.mxu0 0
      %2152 = vmatprep.subr.bf16.mxu0 0
      %2153 = vmatpush1.bf16.msra.mxu0 0
      %2154 = vmatprep.subr.bf16.mxu0 0
      %2155 = vmatpush1.bf16.msra.mxu0 0
      %2156 = vmatprep.subr.bf16.mxu0 0
      %2157 = vmatpush1.bf16.msra.mxu0 0
      %2158 = vmatprep.mubr.bf16.mxu0 0
      %2159 = vmatmul.mubr.bf16.gmra.mrb[0].mxu0 %v1673
      %v2160 = vpop.f32.mrb[0].mxu0
      %v2161 = vadd.f32 0.0, %v2160
      %v2162 = vpop.f32.mrb[0].mxu0
      %v2163 = vpop.f32.mrb[0].mxu0
      %v2164 = vadd.f32 0.0, %v2163
      %v2165 = vpop.f32.mrb[0].mxu0
      %2166 = vdwg.mxu0
      %s2167 = scalar_lea.vmem %s6, 4
      %v2168 = vld [vmem:[%s2167] sm:$0xf]
      %v2169 = vpack.c.bf16 %v1713, %v1710
      %v2170 = vpack.c.bf16 %v1754, %v1751
      %v2171 = vpack.c.bf16 %v1795, %v1792
      %v2172 = vpack.c.bf16 %v1836, %v1833
      %v2173 = vpack.c.bf16 %v1877, %v1874
      %v2174 = vpack.c.bf16 %v1918, %v1915
      %v2175 = vpack.c.bf16 %v1959, %v1956
      %v2176 = vpack.c.bf16 %v2000, %v1997
      %v2177 = vpack.c.bf16 %v2041, %v2038
      %v2178 = vpack.c.bf16 %v2082, %v2079
      %v2179 = vpack.c.bf16 %v2123, %v2120
      %v2180 = vpack.c.bf16 %v2164, %v2161
      %vm2181 = vcmask 64512
      %v2183 = vsel %vm2181, %v2169, 0
      %v2186 = vsel %vm2181, %v2170, 0
      %v2189 = vsel %vm2181, %v2171, 0
      %v2192 = vsel %vm2181, %v2172, 0
      %v2195 = vsel %vm2181, %v2173, 0
      %v2198 = vsel %vm2181, %v2174, 0
      %v2201 = vsel %vm2181, %v2175, 0
      %v2204 = vsel %vm2181, %v2176, 0
      %v2207 = vsel %vm2181, %v2177, 0
      %v2210 = vsel %vm2181, %v2178, 0
      %v2213 = vsel %vm2181, %v2179, 0
      %v2216 = vsel %vm2181, %v2180, 0
      %vm2218 = vcmask 1043456
      %v2220 = vsel %vm2218, %v2168, 0
      %2222 = vmatprep.subr.bf16.mxu0 0
      %2223 = vmatpush1.bf16.msra.mxu0 %v2220
      %2224 = vmatprep.subr.bf16.mxu0 0
      %2225 = vmatpush1.bf16.msra.mxu0 0
      %2226 = vmatprep.subr.bf16.mxu0 0
      %2227 = vmatpush1.bf16.msra.mxu0 0
      %2228 = vmatprep.subr.bf16.mxu0 0
      %2229 = vmatpush1.bf16.msra.mxu0 0
      %2230 = vmatprep.subr.bf16.mxu0 0
      %2231 = vmatpush1.bf16.msra.mxu0 0
      %2232 = vmatprep.subr.bf16.mxu0 0
      %2233 = vmatpush1.bf16.msra.mxu0 0
      %2234 = vmatprep.subr.bf16.mxu0 0
      %2235 = vmatpush1.bf16.msra.mxu0 0
      %2236 = vmatprep.subr.bf16.mxu0 0
      %2237 = vmatpush1.bf16.msra.mxu0 0
      %2238 = vmatprep.subr.bf16.mxu0 0
      %2239 = vmatpush1.bf16.msra.mxu0 0
      %2240 = vmatprep.subr.bf16.mxu0 0
      %2241 = vmatpush1.bf16.msra.mxu0 0
      %2242 = vmatprep.subr.bf16.mxu0 0
      %2243 = vmatpush1.bf16.msra.mxu0 0
      %2244 = vmatprep.subr.bf16.mxu0 0
      %2245 = vmatpush1.bf16.msra.mxu0 0
      %2246 = vmatprep.subr.bf16.mxu0 0
      %2247 = vmatpush1.bf16.msra.mxu0 0
      %2248 = vmatprep.subr.bf16.mxu0 0
      %2249 = vmatpush1.bf16.msra.mxu0 0
      %2250 = vmatprep.subr.bf16.mxu0 0
      %2251 = vmatpush1.bf16.msra.mxu0 0
      %2252 = vmatprep.subr.bf16.mxu0 0
      %2253 = vmatpush1.bf16.msra.mxu0 0
      %2254 = vmatprep.mubr.bf16.mxu0 0
      %2255 = vmatmul.mubr.bf16.gmra.mrb[0].mxu0 %v2183
      %v2256 = vpop.f32.mrb[0].mxu0
      %v2257 = vadd.f32 0.0, %v2256
      %v2258 = vpop.f32.mrb[0].mxu0
      %v2259 = vpop.f32.mrb[0].mxu0
      %v2260 = vadd.f32 0.0, %v2259
      %v2261 = vpop.f32.mrb[0].mxu0
      %2262 = vmatprep.mubr.bf16.mxu0 0
      %2263 = vmatmul.mubr.bf16.gmra.mrb[0].mxu0 %v2186
      %v2264 = vpop.f32.mrb[0].mxu0
      %v2265 = vadd.f32 0.0, %v2264
      %v2266 = vpop.f32.mrb[0].mxu0
      %v2267 = vpop.f32.mrb[0].mxu0
      %v2268 = vadd.f32 0.0, %v2267
      %v2269 = vpop.f32.mrb[0].mxu0
      %2270 = vmatprep.mubr.bf16.mxu0 0
      %2271 = vmatmul.mubr.bf16.gmra.mrb[0].mxu0 %v2189
      %v2272 = vpop.f32.mrb[0].mxu0
      %v2273 = vadd.f32 0.0, %v2272
      %v2274 = vpop.f32.mrb[0].mxu0
      %v2275 = vpop.f32.mrb[0].mxu0
      %v2276 = vadd.f32 0.0, %v2275
      %v2277 = vpop.f32.mrb[0].mxu0
      %2278 = vmatprep.mubr.bf16.mxu0 0
      %2279 = vmatmul.mubr.bf16.gmra.mrb[0].mxu0 %v2192
      %v2280 = vpop.f32.mrb[0].mxu0
      %v2281 = vadd.f32 0.0, %v2280
      %v2282 = vpop.f32.mrb[0].mxu0
      %v2283 = vpop.f32.mrb[0].mxu0
      %v2284 = vadd.f32 0.0, %v2283
      %v2285 = vpop.f32.mrb[0].mxu0
      %2286 = vmatprep.mubr.bf16.mxu0 0
      %2287 = vmatmul.mubr.bf16.gmra.mrb[0].mxu0 %v2195
      %v2288 = vpop.f32.mrb[0].mxu0
      %v2289 = vadd.f32 0.0, %v2288
      %v2290 = vpop.f32.mrb[0].mxu0
      %v2291 = vpop.f32.mrb[0].mxu0
      %v2292 = vadd.f32 0.0, %v2291
      %v2293 = vpop.f32.mrb[0].mxu0
      %2294 = vmatprep.mubr.bf16.mxu0 0
      %2295 = vmatmul.mubr.bf16.gmra.mrb[0].mxu0 %v2198
      %v2296 = vpop.f32.mrb[0].mxu0
      %v2297 = vadd.f32 0.0, %v2296
      %v2298 = vpop.f32.mrb[0].mxu0
      %v2299 = vpop.f32.mrb[0].mxu0
      %v2300 = vadd.f32 0.0, %v2299
      %v2301 = vpop.f32.mrb[0].mxu0
      %2302 = vmatprep.mubr.bf16.mxu0 0
      %2303 = vmatmul.mubr.bf16.gmra.mrb[0].mxu0 %v2201
      %v2304 = vpop.f32.mrb[0].mxu0
      %v2305 = vadd.f32 0.0, %v2304
      %v2306 = vpop.f32.mrb[0].mxu0
      %v2307 = vpop.f32.mrb[0].mxu0
      %v2308 = vadd.f32 0.0, %v2307
      %v2309 = vpop.f32.mrb[0].mxu0
      %2310 = vmatprep.mubr.bf16.mxu0 0
      %2311 = vmatmul.mubr.bf16.gmra.mrb[0].mxu0 %v2204
      %v2312 = vpop.f32.mrb[0].mxu0
      %v2313 = vadd.f32 0.0, %v2312
      %v2314 = vpop.f32.mrb[0].mxu0
      %v2315 = vpop.f32.mrb[0].mxu0
      %v2316 = vadd.f32 0.0, %v2315
      %v2317 = vpop.f32.mrb[0].mxu0
      %2318 = vmatprep.mubr.bf16.mxu0 0
      %2319 = vmatmul.mubr.bf16.gmra.mrb[0].mxu0 %v2207
      %v2320 = vpop.f32.mrb[0].mxu0
      %v2321 = vadd.f32 0.0, %v2320
      %v2322 = vpop.f32.mrb[0].mxu0
      %v2323 = vpop.f32.mrb[0].mxu0
      %v2324 = vadd.f32 0.0, %v2323
      %v2325 = vpop.f32.mrb[0].mxu0
      %2326 = vmatprep.mubr.bf16.mxu0 0
      %2327 = vmatmul.mubr.bf16.gmra.mrb[0].mxu0 %v2210
      %v2328 = vpop.f32.mrb[0].mxu0
      %v2329 = vadd.f32 0.0, %v2328
      %v2330 = vpop.f32.mrb[0].mxu0
      %v2331 = vpop.f32.mrb[0].mxu0
      %v2332 = vadd.f32 0.0, %v2331
      %v2333 = vpop.f32.mrb[0].mxu0
      %2334 = vmatprep.mubr.bf16.mxu0 0
      %2335 = vmatmul.mubr.bf16.gmra.mrb[0].mxu0 %v2213
      %v2336 = vpop.f32.mrb[0].mxu0
      %v2337 = vadd.f32 0.0, %v2336
      %v2338 = vpop.f32.mrb[0].mxu0
      %v2339 = vpop.f32.mrb[0].mxu0
      %v2340 = vadd.f32 0.0, %v2339
      %v2341 = vpop.f32.mrb[0].mxu0
      %2342 = vmatprep.mubr.bf16.mxu0 0
      %2343 = vmatmul.mubr.bf16.gmra.mrb[0].mxu0 %v2216
      %v2344 = vpop.f32.mrb[0].mxu0
      %v2345 = vadd.f32 0.0, %v2344
      %v2346 = vpop.f32.mrb[0].mxu0
      %v2347 = vpop.f32.mrb[0].mxu0
      %v2348 = vadd.f32 0.0, %v2347
      %v2349 = vpop.f32.mrb[0].mxu0
      %2350 = vdwg.mxu0
      %v2352 = vsel %vm2181, %v1652, 0
      %v2355 = vsel %vm2181, %v1653, 0
      %v2358 = vsel %vm2181, %v1654, 0
      %v2361 = vsel %vm2181, %v1655, 0
      %v2364 = vsel %vm2181, %v1656, 0
      %v2367 = vsel %vm2181, %v1657, 0
      %v2370 = vsel %vm2181, %v1658, 0
      %v2373 = vsel %vm2181, %v1659, 0
      %v2376 = vsel %vm2181, %v1660, 0
      %v2379 = vsel %vm2181, %v1661, 0
      %v2382 = vsel %vm2181, %v1662, 0
      %v2385 = vsel %vm2181, %v1663, 0
      %v2388 = vsel %vm2218, %v1664, 0
      %2390 = vmatprep.subr.bf16.mxu0 0
      %2391 = vmatpush1.bf16.msra.mxu0 %v2388
      %2392 = vmatprep.subr.bf16.mxu0 0
      %2393 = vmatpush1.bf16.msra.mxu0 0
      %2394 = vmatprep.subr.bf16.mxu0 0
      %2395 = vmatpush1.bf16.msra.mxu0 0
      %2396 = vmatprep.subr.bf16.mxu0 0
      %2397 = vmatpush1.bf16.msra.mxu0 0
      %2398 = vmatprep.subr.bf16.mxu0 0
      %2399 = vmatpush1.bf16.msra.mxu0 0
      %2400 = vmatprep.subr.bf16.mxu0 0
      %2401 = vmatpush1.bf16.msra.mxu0 0
      %2402 = vmatprep.subr.bf16.mxu0 0
      %2403 = vmatpush1.bf16.msra.mxu0 0
      %2404 = vmatprep.subr.bf16.mxu0 0
      %2405 = vmatpush1.bf16.msra.mxu0 0
      %2406 = vmatprep.subr.bf16.mxu0 0
      %2407 = vmatpush1.bf16.msra.mxu0 0
      %2408 = vmatprep.subr.bf16.mxu0 0
      %2409 = vmatpush1.bf16.msra.mxu0 0
      %2410 = vmatprep.subr.bf16.mxu0 0
      %2411 = vmatpush1.bf16.msra.mxu0 0
      %2412 = vmatprep.subr.bf16.mxu0 0
      %2413 = vmatpush1.bf16.msra.mxu0 0
      %2414 = vmatprep.subr.bf16.mxu0 0
      %2415 = vmatpush1.bf16.msra.mxu0 0
      %2416 = vmatprep.subr.bf16.mxu0 0
      %2417 = vmatpush1.bf16.msra.mxu0 0
      %2418 = vmatprep.subr.bf16.mxu0 0
      %2419 = vmatpush1.bf16.msra.mxu0 0
      %2420 = vmatprep.subr.bf16.mxu0 0
      %2421 = vmatpush1.bf16.msra.mxu0 0
      %2422 = vmatprep.mubr.bf16.mxu0 0
      %2423 = vmatmul.mubr.bf16.gmra.mrb[0].mxu0 %v2352
      %v2424 = vpop.f32.mrb[0].mxu0
      %v2425 = vadd.f32 %v2257, %v2424
      %v2426 = vpop.f32.mrb[0].mxu0
      %v2427 = vpop.f32.mrb[0].mxu0
      %v2428 = vadd.f32 %v2260, %v2427
      %v2429 = vpop.f32.mrb[0].mxu0
      %2430 = vmatprep.mubr.bf16.mxu0 0
      %2431 = vmatmul.mubr.bf16.gmra.mrb[0].mxu0 %v2355
      %v2432 = vpop.f32.mrb[0].mxu0
      %v2433 = vadd.f32 %v2265, %v2432
      %v2434 = vpop.f32.mrb[0].mxu0
      %v2435 = vpop.f32.mrb[0].mxu0
      %v2436 = vadd.f32 %v2268, %v2435
      %v2437 = vpop.f32.mrb[0].mxu0
      %2438 = vmatprep.mubr.bf16.mxu0 0
      %2439 = vmatmul.mubr.bf16.gmra.mrb[0].mxu0 %v2358
      %v2440 = vpop.f32.mrb[0].mxu0
      %v2441 = vadd.f32 %v2273, %v2440
      %v2442 = vpop.f32.mrb[0].mxu0
      %v2443 = vpop.f32.mrb[0].mxu0
      %v2444 = vadd.f32 %v2276, %v2443
      %v2445 = vpop.f32.mrb[0].mxu0
      %2446 = vmatprep.mubr.bf16.mxu0 0
      %2447 = vmatmul.mubr.bf16.gmra.mrb[0].mxu0 %v2361
      %v2448 = vpop.f32.mrb[0].mxu0
      %v2449 = vadd.f32 %v2281, %v2448
      %v2450 = vpop.f32.mrb[0].mxu0
      %v2451 = vpop.f32.mrb[0].mxu0
      %v2452 = vadd.f32 %v2284, %v2451
      %v2453 = vpop.f32.mrb[0].mxu0
      %2454 = vmatprep.mubr.bf16.mxu0 0
      %2455 = vmatmul.mubr.bf16.gmra.mrb[0].mxu0 %v2364
      %v2456 = vpop.f32.mrb[0].mxu0
      %v2457 = vadd.f32 %v2289, %v2456
      %v2458 = vpop.f32.mrb[0].mxu0
      %v2459 = vpop.f32.mrb[0].mxu0
      %v2460 = vadd.f32 %v2292, %v2459
      %v2461 = vpop.f32.mrb[0].mxu0
      %2462 = vmatprep.mubr.bf16.mxu0 0
      %2463 = vmatmul.mubr.bf16.gmra.mrb[0].mxu0 %v2367
      %v2464 = vpop.f32.mrb[0].mxu0
      %v2465 = vadd.f32 %v2297, %v2464
      %v2466 = vpop.f32.mrb[0].mxu0
      %v2467 = vpop.f32.mrb[0].mxu0
      %v2468 = vadd.f32 %v2300, %v2467
      %v2469 = vpop.f32.mrb[0].mxu0
      %2470 = vmatprep.mubr.bf16.mxu0 0
      %2471 = vmatmul.mubr.bf16.gmra.mrb[0].mxu0 %v2370
      %v2472 = vpop.f32.mrb[0].mxu0
      %v2473 = vadd.f32 %v2305, %v2472
      %v2474 = vpop.f32.mrb[0].mxu0
      %v2475 = vpop.f32.mrb[0].mxu0
      %v2476 = vadd.f32 %v2308, %v2475
      %v2477 = vpop.f32.mrb[0].mxu0
      %2478 = vmatprep.mubr.bf16.mxu0 0
      %2479 = vmatmul.mubr.bf16.gmra.mrb[0].mxu0 %v2373
      %v2480 = vpop.f32.mrb[0].mxu0
      %v2481 = vadd.f32 %v2313, %v2480
      %v2482 = vpop.f32.mrb[0].mxu0
      %v2483 = vpop.f32.mrb[0].mxu0
      %v2484 = vadd.f32 %v2316, %v2483
      %v2485 = vpop.f32.mrb[0].mxu0
      %2486 = vmatprep.mubr.bf16.mxu0 0
      %2487 = vmatmul.mubr.bf16.gmra.mrb[0].mxu0 %v2376
      %v2488 = vpop.f32.mrb[0].mxu0
      %v2489 = vadd.f32 %v2321, %v2488
      %v2490 = vpop.f32.mrb[0].mxu0
      %v2491 = vpop.f32.mrb[0].mxu0
      %v2492 = vadd.f32 %v2324, %v2491
      %v2493 = vpop.f32.mrb[0].mxu0
      %2494 = vmatprep.mubr.bf16.mxu0 0
      %2495 = vmatmul.mubr.bf16.gmra.mrb[0].mxu0 %v2379
      %v2496 = vpop.f32.mrb[0].mxu0
      %v2497 = vadd.f32 %v2329, %v2496
      %v2498 = vpop.f32.mrb[0].mxu0
      %v2499 = vpop.f32.mrb[0].mxu0
      %v2500 = vadd.f32 %v2332, %v2499
      %v2501 = vpop.f32.mrb[0].mxu0
      %2502 = vmatprep.mubr.bf16.mxu0 0
      %2503 = vmatmul.mubr.bf16.gmra.mrb[0].mxu0 %v2382
      %v2504 = vpop.f32.mrb[0].mxu0
      %v2505 = vadd.f32 %v2337, %v2504
      %v2506 = vpop.f32.mrb[0].mxu0
      %v2507 = vpop.f32.mrb[0].mxu0
      %v2508 = vadd.f32 %v2340, %v2507
      %v2509 = vpop.f32.mrb[0].mxu0
      %2510 = vmatprep.mubr.bf16.mxu0 0
      %2511 = vmatmul.mubr.bf16.gmra.mrb[0].mxu0 %v2385
      %v2512 = vpop.f32.mrb[0].mxu0
      %v2513 = vadd.f32 %v2345, %v2512
      %v2514 = vpop.f32.mrb[0].mxu0
      %v2515 = vpop.f32.mrb[0].mxu0
      %v2516 = vadd.f32 %v2348, %v2515
      %v2517 = vpop.f32.mrb[0].mxu0
      %2518 = vdwg.mxu0
      %2519 = vmatprep.subr.bf16.mxu0 0
      %2520 = vmatpush1.bf16.msra.mxu0 %v2169
      %2521 = vmatprep.subr.bf16.mxu0 0
      %2522 = vmatpush1.bf16.msra.mxu0 0
      %2523 = vmatprep.subr.bf16.mxu0 0
      %2524 = vmatpush1.bf16.msra.mxu0 0
      %2525 = vmatprep.subr.bf16.mxu0 0
      %2526 = vmatpush1.bf16.msra.mxu0 0
      %2527 = vmatprep.subr.bf16.mxu0 0
      %2528 = vmatpush1.bf16.msra.mxu0 0
      %2529 = vmatprep.subr.bf16.mxu0 0
      %2530 = vmatpush1.bf16.msra.mxu0 0
      %2531 = vmatprep.subr.bf16.mxu0 0
      %2532 = vmatpush1.bf16.msra.mxu0 0
      %2533 = vmatprep.subr.bf16.mxu0 0
      %2534 = vmatpush1.bf16.msra.mxu0 0
      %2535 = vmatprep.subr.bf16.mxu0 0
      %2536 = vmatpush1.bf16.msra.mxu0 0
      %2537 = vmatprep.subr.bf16.mxu0 0
      %2538 = vmatpush1.bf16.msra.mxu0 0
      %2539 = vmatprep.subr.bf16.mxu0 0
      %2540 = vmatpush1.bf16.msra.mxu0 0
      %2541 = vmatprep.subr.bf16.mxu0 0
      %2542 = vmatpush1.bf16.msra.mxu0 0
      %2543 = vmatprep.subr.bf16.mxu0 0
      %2544 = vmatpush1.bf16.msra.mxu0 0
      %2545 = vmatprep.subr.bf16.mxu0 0
      %2546 = vmatpush1.bf16.msra.mxu0 0
      %2547 = vmatprep.subr.bf16.mxu0 0
      %2548 = vmatpush1.bf16.msra.mxu0 0
      %2549 = vmatprep.subr.bf16.mxu0 0
      %2550 = vmatpush1.bf16.msra.mxu0 0
      %2551 = vmatprep.mubr.bf16.mxu0 0
      %2552 = vmatmul.mubr.bf16.gmra.mrb[0].mxu0 %v1673
      %v2553 = vpop.f32.mrb[0].mxu0
      %v2554 = vadd.f32 0.0, %v2553
      %v2555 = vpop.f32.mrb[0].mxu0
      %v2556 = vpop.f32.mrb[0].mxu0
      %v2557 = vadd.f32 0.0, %v2556
      %v2558 = vpop.f32.mrb[0].mxu0
      %2559 = vdwg.mxu0
      %2560 = vmatprep.subr.bf16.mxu0 0
      %2561 = vmatpush1.bf16.msra.mxu0 %v2170
      %2562 = vmatprep.subr.bf16.mxu0 0
      %2563 = vmatpush1.bf16.msra.mxu0 0
      %2564 = vmatprep.subr.bf16.mxu0 0
      %2565 = vmatpush1.bf16.msra.mxu0 0
      %2566 = vmatprep.subr.bf16.mxu0 0
      %2567 = vmatpush1.bf16.msra.mxu0 0
      %2568 = vmatprep.subr.bf16.mxu0 0
      %2569 = vmatpush1.bf16.msra.mxu0 0
      %2570 = vmatprep.subr.bf16.mxu0 0
      %2571 = vmatpush1.bf16.msra.mxu0 0
      %2572 = vmatprep.subr.bf16.mxu0 0
      %2573 = vmatpush1.bf16.msra.mxu0 0
      %2574 = vmatprep.subr.bf16.mxu0 0
      %2575 = vmatpush1.bf16.msra.mxu0 0
      %2576 = vmatprep.subr.bf16.mxu0 0
      %2577 = vmatpush1.bf16.msra.mxu0 0
      %2578 = vmatprep.subr.bf16.mxu0 0
      %2579 = vmatpush1.bf16.msra.mxu0 0
      %2580 = vmatprep.subr.bf16.mxu0 0
      %2581 = vmatpush1.bf16.msra.mxu0 0
      %2582 = vmatprep.subr.bf16.mxu0 0
      %2583 = vmatpush1.bf16.msra.mxu0 0
      %2584 = vmatprep.subr.bf16.mxu0 0
      %2585 = vmatpush1.bf16.msra.mxu0 0
      %2586 = vmatprep.subr.bf16.mxu0 0
      %2587 = vmatpush1.bf16.msra.mxu0 0
      %2588 = vmatprep.subr.bf16.mxu0 0
      %2589 = vmatpush1.bf16.msra.mxu0 0
      %2590 = vmatprep.subr.bf16.mxu0 0
      %2591 = vmatpush1.bf16.msra.mxu0 0
      %2592 = vmatprep.mubr.bf16.mxu0 0
      %2593 = vmatmul.mubr.bf16.gmra.mrb[0].mxu0 %v1673
      %v2594 = vpop.f32.mrb[0].mxu0
      %v2595 = vadd.f32 0.0, %v2594
      %v2596 = vpop.f32.mrb[0].mxu0
      %v2597 = vpop.f32.mrb[0].mxu0
      %v2598 = vadd.f32 0.0, %v2597
      %v2599 = vpop.f32.mrb[0].mxu0
      %2600 = vdwg.mxu0
      %2601 = vmatprep.subr.bf16.mxu0 0
      %2602 = vmatpush1.bf16.msra.mxu0 %v2171
      %2603 = vmatprep.subr.bf16.mxu0 0
      %2604 = vmatpush1.bf16.msra.mxu0 0
      %2605 = vmatprep.subr.bf16.mxu0 0
      %2606 = vmatpush1.bf16.msra.mxu0 0
      %2607 = vmatprep.subr.bf16.mxu0 0
      %2608 = vmatpush1.bf16.msra.mxu0 0
      %2609 = vmatprep.subr.bf16.mxu0 0
      %2610 = vmatpush1.bf16.msra.mxu0 0
      %2611 = vmatprep.subr.bf16.mxu0 0
      %2612 = vmatpush1.bf16.msra.mxu0 0
      %2613 = vmatprep.subr.bf16.mxu0 0
      %2614 = vmatpush1.bf16.msra.mxu0 0
      %2615 = vmatprep.subr.bf16.mxu0 0
      %2616 = vmatpush1.bf16.msra.mxu0 0
      %2617 = vmatprep.subr.bf16.mxu0 0
      %2618 = vmatpush1.bf16.msra.mxu0 0
      %2619 = vmatprep.subr.bf16.mxu0 0
      %2620 = vmatpush1.bf16.msra.mxu0 0
      %2621 = vmatprep.subr.bf16.mxu0 0
      %2622 = vmatpush1.bf16.msra.mxu0 0
      %2623 = vmatprep.subr.bf16.mxu0 0
      %2624 = vmatpush1.bf16.msra.mxu0 0
      %2625 = vmatprep.subr.bf16.mxu0 0
      %2626 = vmatpush1.bf16.msra.mxu0 0
      %2627 = vmatprep.subr.bf16.mxu0 0
      %2628 = vmatpush1.bf16.msra.mxu0 0
      %2629 = vmatprep.subr.bf16.mxu0 0
      %2630 = vmatpush1.bf16.msra.mxu0 0
      %2631 = vmatprep.subr.bf16.mxu0 0
      %2632 = vmatpush1.bf16.msra.mxu0 0
      %2633 = vmatprep.mubr.bf16.mxu0 0
      %2634 = vmatmul.mubr.bf16.gmra.mrb[0].mxu0 %v1673
      %v2635 = vpop.f32.mrb[0].mxu0
      %v2636 = vadd.f32 0.0, %v2635
      %v2637 = vpop.f32.mrb[0].mxu0
      %v2638 = vpop.f32.mrb[0].mxu0
      %v2639 = vadd.f32 0.0, %v2638
      %v2640 = vpop.f32.mrb[0].mxu0
      %2641 = vdwg.mxu0
      %2642 = vmatprep.subr.bf16.mxu0 0
      %2643 = vmatpush1.bf16.msra.mxu0 %v2172
      %2644 = vmatprep.subr.bf16.mxu0 0
      %2645 = vmatpush1.bf16.msra.mxu0 0
      %2646 = vmatprep.subr.bf16.mxu0 0
      %2647 = vmatpush1.bf16.msra.mxu0 0
      %2648 = vmatprep.subr.bf16.mxu0 0
      %2649 = vmatpush1.bf16.msra.mxu0 0
      %2650 = vmatprep.subr.bf16.mxu0 0
      %2651 = vmatpush1.bf16.msra.mxu0 0
      %2652 = vmatprep.subr.bf16.mxu0 0
      %2653 = vmatpush1.bf16.msra.mxu0 0
      %2654 = vmatprep.subr.bf16.mxu0 0
      %2655 = vmatpush1.bf16.msra.mxu0 0
      %2656 = vmatprep.subr.bf16.mxu0 0
      %2657 = vmatpush1.bf16.msra.mxu0 0
      %2658 = vmatprep.subr.bf16.mxu0 0
      %2659 = vmatpush1.bf16.msra.mxu0 0
      %2660 = vmatprep.subr.bf16.mxu0 0
      %2661 = vmatpush1.bf16.msra.mxu0 0
      %2662 = vmatprep.subr.bf16.mxu0 0
      %2663 = vmatpush1.bf16.msra.mxu0 0
      %2664 = vmatprep.subr.bf16.mxu0 0
      %2665 = vmatpush1.bf16.msra.mxu0 0
      %2666 = vmatprep.subr.bf16.mxu0 0
      %2667 = vmatpush1.bf16.msra.mxu0 0
      %2668 = vmatprep.subr.bf16.mxu0 0
      %2669 = vmatpush1.bf16.msra.mxu0 0
      %2670 = vmatprep.subr.bf16.mxu0 0
      %2671 = vmatpush1.bf16.msra.mxu0 0
      %2672 = vmatprep.subr.bf16.mxu0 0
      %2673 = vmatpush1.bf16.msra.mxu0 0
      %2674 = vmatprep.mubr.bf16.mxu0 0
      %2675 = vmatmul.mubr.bf16.gmra.mrb[0].mxu0 %v1673
      %v2676 = vpop.f32.mrb[0].mxu0
      %v2677 = vadd.f32 0.0, %v2676
      %v2678 = vpop.f32.mrb[0].mxu0
      %v2679 = vpop.f32.mrb[0].mxu0
      %v2680 = vadd.f32 0.0, %v2679
      %v2681 = vpop.f32.mrb[0].mxu0
      %2682 = vdwg.mxu0
      %2683 = vmatprep.subr.bf16.mxu0 0
      %2684 = vmatpush1.bf16.msra.mxu0 %v2173
      %2685 = vmatprep.subr.bf16.mxu0 0
      %2686 = vmatpush1.bf16.msra.mxu0 0
      %2687 = vmatprep.subr.bf16.mxu0 0
      %2688 = vmatpush1.bf16.msra.mxu0 0
      %2689 = vmatprep.subr.bf16.mxu0 0
      %2690 = vmatpush1.bf16.msra.mxu0 0
      %2691 = vmatprep.subr.bf16.mxu0 0
      %2692 = vmatpush1.bf16.msra.mxu0 0
      %2693 = vmatprep.subr.bf16.mxu0 0
      %2694 = vmatpush1.bf16.msra.mxu0 0
      %2695 = vmatprep.subr.bf16.mxu0 0
      %2696 = vmatpush1.bf16.msra.mxu0 0
      %2697 = vmatprep.subr.bf16.mxu0 0
      %2698 = vmatpush1.bf16.msra.mxu0 0
      %2699 = vmatprep.subr.bf16.mxu0 0
      %2700 = vmatpush1.bf16.msra.mxu0 0
      %2701 = vmatprep.subr.bf16.mxu0 0
      %2702 = vmatpush1.bf16.msra.mxu0 0
      %2703 = vmatprep.subr.bf16.mxu0 0
      %2704 = vmatpush1.bf16.msra.mxu0 0
      %2705 = vmatprep.subr.bf16.mxu0 0
      %2706 = vmatpush1.bf16.msra.mxu0 0
      %2707 = vmatprep.subr.bf16.mxu0 0
      %2708 = vmatpush1.bf16.msra.mxu0 0
      %2709 = vmatprep.subr.bf16.mxu0 0
      %2710 = vmatpush1.bf16.msra.mxu0 0
      %2711 = vmatprep.subr.bf16.mxu0 0
      %2712 = vmatpush1.bf16.msra.mxu0 0
      %2713 = vmatprep.subr.bf16.mxu0 0
      %2714 = vmatpush1.bf16.msra.mxu0 0
      %2715 = vmatprep.mubr.bf16.mxu0 0
      %2716 = vmatmul.mubr.bf16.gmra.mrb[0].mxu0 %v1673
      %v2717 = vpop.f32.mrb[0].mxu0
      %v2718 = vadd.f32 0.0, %v2717
      %v2719 = vpop.f32.mrb[0].mxu0
      %v2720 = vpop.f32.mrb[0].mxu0
      %v2721 = vadd.f32 0.0, %v2720
      %v2722 = vpop.f32.mrb[0].mxu0
      %2723 = vdwg.mxu0
      %2724 = vmatprep.subr.bf16.mxu0 0
      %2725 = vmatpush1.bf16.msra.mxu0 %v2174
      %2726 = vmatprep.subr.bf16.mxu0 0
      %2727 = vmatpush1.bf16.msra.mxu0 0
      %2728 = vmatprep.subr.bf16.mxu0 0
      %2729 = vmatpush1.bf16.msra.mxu0 0
      %2730 = vmatprep.subr.bf16.mxu0 0
      %2731 = vmatpush1.bf16.msra.mxu0 0
      %2732 = vmatprep.subr.bf16.mxu0 0
      %2733 = vmatpush1.bf16.msra.mxu0 0
      %2734 = vmatprep.subr.bf16.mxu0 0
      %2735 = vmatpush1.bf16.msra.mxu0 0
      %2736 = vmatprep.subr.bf16.mxu0 0
      %2737 = vmatpush1.bf16.msra.mxu0 0
      %2738 = vmatprep.subr.bf16.mxu0 0
      %2739 = vmatpush1.bf16.msra.mxu0 0
      %2740 = vmatprep.subr.bf16.mxu0 0
      %2741 = vmatpush1.bf16.msra.mxu0 0
      %2742 = vmatprep.subr.bf16.mxu0 0
      %2743 = vmatpush1.bf16.msra.mxu0 0
      %2744 = vmatprep.subr.bf16.mxu0 0
      %2745 = vmatpush1.bf16.msra.mxu0 0
      %2746 = vmatprep.subr.bf16.mxu0 0
      %2747 = vmatpush1.bf16.msra.mxu0 0
      %2748 = vmatprep.subr.bf16.mxu0 0
      %2749 = vmatpush1.bf16.msra.mxu0 0
      %2750 = vmatprep.subr.bf16.mxu0 0
      %2751 = vmatpush1.bf16.msra.mxu0 0
      %2752 = vmatprep.subr.bf16.mxu0 0
      %2753 = vmatpush1.bf16.msra.mxu0 0
      %2754 = vmatprep.subr.bf16.mxu0 0
      %2755 = vmatpush1.bf16.msra.mxu0 0
      %2756 = vmatprep.mubr.bf16.mxu0 0
      %2757 = vmatmul.mubr.bf16.gmra.mrb[0].mxu0 %v1673
      %v2758 = vpop.f32.mrb[0].mxu0
      %v2759 = vadd.f32 0.0, %v2758
      %v2760 = vpop.f32.mrb[0].mxu0
      %v2761 = vpop.f32.mrb[0].mxu0
      %v2762 = vadd.f32 0.0, %v2761
      %v2763 = vpop.f32.mrb[0].mxu0
      %2764 = vdwg.mxu0
      %2765 = vmatprep.subr.bf16.mxu0 0
      %2766 = vmatpush1.bf16.msra.mxu0 %v2175
      %2767 = vmatprep.subr.bf16.mxu0 0
      %2768 = vmatpush1.bf16.msra.mxu0 0
      %2769 = vmatprep.subr.bf16.mxu0 0
      %2770 = vmatpush1.bf16.msra.mxu0 0
      %2771 = vmatprep.subr.bf16.mxu0 0
      %2772 = vmatpush1.bf16.msra.mxu0 0
      %2773 = vmatprep.subr.bf16.mxu0 0
      %2774 = vmatpush1.bf16.msra.mxu0 0
      %2775 = vmatprep.subr.bf16.mxu0 0
      %2776 = vmatpush1.bf16.msra.mxu0 0
      %2777 = vmatprep.subr.bf16.mxu0 0
      %2778 = vmatpush1.bf16.msra.mxu0 0
      %2779 = vmatprep.subr.bf16.mxu0 0
      %2780 = vmatpush1.bf16.msra.mxu0 0
      %2781 = vmatprep.subr.bf16.mxu0 0
      %2782 = vmatpush1.bf16.msra.mxu0 0
      %2783 = vmatprep.subr.bf16.mxu0 0
      %2784 = vmatpush1.bf16.msra.mxu0 0
      %2785 = vmatprep.subr.bf16.mxu0 0
      %2786 = vmatpush1.bf16.msra.mxu0 0
      %2787 = vmatprep.subr.bf16.mxu0 0
      %2788 = vmatpush1.bf16.msra.mxu0 0
      %2789 = vmatprep.subr.bf16.mxu0 0
      %2790 = vmatpush1.bf16.msra.mxu0 0
      %2791 = vmatprep.subr.bf16.mxu0 0
      %2792 = vmatpush1.bf16.msra.mxu0 0
      %2793 = vmatprep.subr.bf16.mxu0 0
      %2794 = vmatpush1.bf16.msra.mxu0 0
      %2795 = vmatprep.subr.bf16.mxu0 0
      %2796 = vmatpush1.bf16.msra.mxu0 0
      %2797 = vmatprep.mubr.bf16.mxu0 0
      %2798 = vmatmul.mubr.bf16.gmra.mrb[0].mxu0 %v1673
      %v2799 = vpop.f32.mrb[0].mxu0
      %v2800 = vadd.f32 0.0, %v2799
      %v2801 = vpop.f32.mrb[0].mxu0
      %v2802 = vpop.f32.mrb[0].mxu0
      %v2803 = vadd.f32 0.0, %v2802
      %v2804 = vpop.f32.mrb[0].mxu0
      %2805 = vdwg.mxu0
      %2806 = vmatprep.subr.bf16.mxu0 0
      %2807 = vmatpush1.bf16.msra.mxu0 %v2176
      %2808 = vmatprep.subr.bf16.mxu0 0
      %2809 = vmatpush1.bf16.msra.mxu0 0
      %2810 = vmatprep.subr.bf16.mxu0 0
      %2811 = vmatpush1.bf16.msra.mxu0 0
      %2812 = vmatprep.subr.bf16.mxu0 0
      %2813 = vmatpush1.bf16.msra.mxu0 0
      %2814 = vmatprep.subr.bf16.mxu0 0
      %2815 = vmatpush1.bf16.msra.mxu0 0
      %2816 = vmatprep.subr.bf16.mxu0 0
      %2817 = vmatpush1.bf16.msra.mxu0 0
      %2818 = vmatprep.subr.bf16.mxu0 0
      %2819 = vmatpush1.bf16.msra.mxu0 0
      %2820 = vmatprep.subr.bf16.mxu0 0
      %2821 = vmatpush1.bf16.msra.mxu0 0
      %2822 = vmatprep.subr.bf16.mxu0 0
      %2823 = vmatpush1.bf16.msra.mxu0 0
      %2824 = vmatprep.subr.bf16.mxu0 0
      %2825 = vmatpush1.bf16.msra.mxu0 0
      %2826 = vmatprep.subr.bf16.mxu0 0
      %2827 = vmatpush1.bf16.msra.mxu0 0
      %2828 = vmatprep.subr.bf16.mxu0 0
      %2829 = vmatpush1.bf16.msra.mxu0 0
      %2830 = vmatprep.subr.bf16.mxu0 0
      %2831 = vmatpush1.bf16.msra.mxu0 0
      %2832 = vmatprep.subr.bf16.mxu0 0
      %2833 = vmatpush1.bf16.msra.mxu0 0
      %2834 = vmatprep.subr.bf16.mxu0 0
      %2835 = vmatpush1.bf16.msra.mxu0 0
      %2836 = vmatprep.subr.bf16.mxu0 0
      %2837 = vmatpush1.bf16.msra.mxu0 0
      %2838 = vmatprep.mubr.bf16.mxu0 0
      %2839 = vmatmul.mubr.bf16.gmra.mrb[0].mxu0 %v1673
      %v2840 = vpop.f32.mrb[0].mxu0
      %v2841 = vadd.f32 0.0, %v2840
      %v2842 = vpop.f32.mrb[0].mxu0
      %v2843 = vpop.f32.mrb[0].mxu0
      %v2844 = vadd.f32 0.0, %v2843
      %v2845 = vpop.f32.mrb[0].mxu0
      %2846 = vdwg.mxu0
      %2847 = vmatprep.subr.bf16.mxu0 0
      %2848 = vmatpush1.bf16.msra.mxu0 %v2177
      %2849 = vmatprep.subr.bf16.mxu0 0
      %2850 = vmatpush1.bf16.msra.mxu0 0
      %2851 = vmatprep.subr.bf16.mxu0 0
      %2852 = vmatpush1.bf16.msra.mxu0 0
      %2853 = vmatprep.subr.bf16.mxu0 0
      %2854 = vmatpush1.bf16.msra.mxu0 0
      %2855 = vmatprep.subr.bf16.mxu0 0
      %2856 = vmatpush1.bf16.msra.mxu0 0
      %2857 = vmatprep.subr.bf16.mxu0 0
      %2858 = vmatpush1.bf16.msra.mxu0 0
      %2859 = vmatprep.subr.bf16.mxu0 0
      %2860 = vmatpush1.bf16.msra.mxu0 0
      %2861 = vmatprep.subr.bf16.mxu0 0
      %2862 = vmatpush1.bf16.msra.mxu0 0
      %2863 = vmatprep.subr.bf16.mxu0 0
      %2864 = vmatpush1.bf16.msra.mxu0 0
      %2865 = vmatprep.subr.bf16.mxu0 0
      %2866 = vmatpush1.bf16.msra.mxu0 0
      %2867 = vmatprep.subr.bf16.mxu0 0
      %2868 = vmatpush1.bf16.msra.mxu0 0
      %2869 = vmatprep.subr.bf16.mxu0 0
      %2870 = vmatpush1.bf16.msra.mxu0 0
      %2871 = vmatprep.subr.bf16.mxu0 0
      %2872 = vmatpush1.bf16.msra.mxu0 0
      %2873 = vmatprep.subr.bf16.mxu0 0
      %2874 = vmatpush1.bf16.msra.mxu0 0
      %2875 = vmatprep.subr.bf16.mxu0 0
      %2876 = vmatpush1.bf16.msra.mxu0 0
      %2877 = vmatprep.subr.bf16.mxu0 0
      %2878 = vmatpush1.bf16.msra.mxu0 0
      %2879 = vmatprep.mubr.bf16.mxu0 0
      %2880 = vmatmul.mubr.bf16.gmra.mrb[0].mxu0 %v1673
      %v2881 = vpop.f32.mrb[0].mxu0
      %v2882 = vadd.f32 0.0, %v2881
      %v2883 = vpop.f32.mrb[0].mxu0
      %v2884 = vpop.f32.mrb[0].mxu0
      %v2885 = vadd.f32 0.0, %v2884
      %v2886 = vpop.f32.mrb[0].mxu0
      %2887 = vdwg.mxu0
      %2888 = vmatprep.subr.bf16.mxu0 0
      %2889 = vmatpush1.bf16.msra.mxu0 %v2178
      %2890 = vmatprep.subr.bf16.mxu0 0
      %2891 = vmatpush1.bf16.msra.mxu0 0
      %2892 = vmatprep.subr.bf16.mxu0 0
      %2893 = vmatpush1.bf16.msra.mxu0 0
      %2894 = vmatprep.subr.bf16.mxu0 0
      %2895 = vmatpush1.bf16.msra.mxu0 0
      %2896 = vmatprep.subr.bf16.mxu0 0
      %2897 = vmatpush1.bf16.msra.mxu0 0
      %2898 = vmatprep.subr.bf16.mxu0 0
      %2899 = vmatpush1.bf16.msra.mxu0 0
      %2900 = vmatprep.subr.bf16.mxu0 0
      %2901 = vmatpush1.bf16.msra.mxu0 0
      %2902 = vmatprep.subr.bf16.mxu0 0
      %2903 = vmatpush1.bf16.msra.mxu0 0
      %2904 = vmatprep.subr.bf16.mxu0 0
      %2905 = vmatpush1.bf16.msra.mxu0 0
      %2906 = vmatprep.subr.bf16.mxu0 0
      %2907 = vmatpush1.bf16.msra.mxu0 0
      %2908 = vmatprep.subr.bf16.mxu0 0
      %2909 = vmatpush1.bf16.msra.mxu0 0
      %2910 = vmatprep.subr.bf16.mxu0 0
      %2911 = vmatpush1.bf16.msra.mxu0 0
      %2912 = vmatprep.subr.bf16.mxu0 0
      %2913 = vmatpush1.bf16.msra.mxu0 0
      %2914 = vmatprep.subr.bf16.mxu0 0
      %2915 = vmatpush1.bf16.msra.mxu0 0
      %2916 = vmatprep.subr.bf16.mxu0 0
      %2917 = vmatpush1.bf16.msra.mxu0 0
      %2918 = vmatprep.subr.bf16.mxu0 0
      %2919 = vmatpush1.bf16.msra.mxu0 0
      %2920 = vmatprep.mubr.bf16.mxu0 0
      %2921 = vmatmul.mubr.bf16.gmra.mrb[0].mxu0 %v1673
      %v2922 = vpop.f32.mrb[0].mxu0
      %v2923 = vadd.f32 0.0, %v2922
      %v2924 = vpop.f32.mrb[0].mxu0
      %v2925 = vpop.f32.mrb[0].mxu0
      %v2926 = vadd.f32 0.0, %v2925
      %v2927 = vpop.f32.mrb[0].mxu0
      %2928 = vdwg.mxu0
      %2929 = vmatprep.subr.bf16.mxu0 0
      %2930 = vmatpush1.bf16.msra.mxu0 %v2179
      %2931 = vmatprep.subr.bf16.mxu0 0
      %2932 = vmatpush1.bf16.msra.mxu0 0
      %2933 = vmatprep.subr.bf16.mxu0 0
      %2934 = vmatpush1.bf16.msra.mxu0 0
      %2935 = vmatprep.subr.bf16.mxu0 0
      %2936 = vmatpush1.bf16.msra.mxu0 0
      %2937 = vmatprep.subr.bf16.mxu0 0
      %2938 = vmatpush1.bf16.msra.mxu0 0
      %2939 = vmatprep.subr.bf16.mxu0 0
      %2940 = vmatpush1.bf16.msra.mxu0 0
      %2941 = vmatprep.subr.bf16.mxu0 0
      %2942 = vmatpush1.bf16.msra.mxu0 0
      %2943 = vmatprep.subr.bf16.mxu0 0
      %2944 = vmatpush1.bf16.msra.mxu0 0
      %2945 = vmatprep.subr.bf16.mxu0 0
      %2946 = vmatpush1.bf16.msra.mxu0 0
      %2947 = vmatprep.subr.bf16.mxu0 0
      %2948 = vmatpush1.bf16.msra.mxu0 0
      %2949 = vmatprep.subr.bf16.mxu0 0
      %2950 = vmatpush1.bf16.msra.mxu0 0
      %2951 = vmatprep.subr.bf16.mxu0 0
      %2952 = vmatpush1.bf16.msra.mxu0 0
      %2953 = vmatprep.subr.bf16.mxu0 0
      %2954 = vmatpush1.bf16.msra.mxu0 0
      %2955 = vmatprep.subr.bf16.mxu0 0
      %2956 = vmatpush1.bf16.msra.mxu0 0
      %2957 = vmatprep.subr.bf16.mxu0 0
      %2958 = vmatpush1.bf16.msra.mxu0 0
      %2959 = vmatprep.subr.bf16.mxu0 0
      %2960 = vmatpush1.bf16.msra.mxu0 0
      %2961 = vmatprep.mubr.bf16.mxu0 0
      %2962 = vmatmul.mubr.bf16.gmra.mrb[0].mxu0 %v1673
      %v2963 = vpop.f32.mrb[0].mxu0
      %v2964 = vadd.f32 0.0, %v2963
      %v2965 = vpop.f32.mrb[0].mxu0
      %v2966 = vpop.f32.mrb[0].mxu0
      %v2967 = vadd.f32 0.0, %v2966
      %v2968 = vpop.f32.mrb[0].mxu0
      %2969 = vdwg.mxu0
      %2970 = vmatprep.subr.bf16.mxu0 0
      %2971 = vmatpush1.bf16.msra.mxu0 %v2180
      %2972 = vmatprep.subr.bf16.mxu0 0
      %2973 = vmatpush1.bf16.msra.mxu0 0
      %2974 = vmatprep.subr.bf16.mxu0 0
      %2975 = vmatpush1.bf16.msra.mxu0 0
      %2976 = vmatprep.subr.bf16.mxu0 0
      %2977 = vmatpush1.bf16.msra.mxu0 0
      %2978 = vmatprep.subr.bf16.mxu0 0
      %2979 = vmatpush1.bf16.msra.mxu0 0
      %2980 = vmatprep.subr.bf16.mxu0 0
      %2981 = vmatpush1.bf16.msra.mxu0 0
      %2982 = vmatprep.subr.bf16.mxu0 0
      %2983 = vmatpush1.bf16.msra.mxu0 0
      %2984 = vmatprep.subr.bf16.mxu0 0
      %2985 = vmatpush1.bf16.msra.mxu0 0
      %2986 = vmatprep.subr.bf16.mxu0 0
      %2987 = vmatpush1.bf16.msra.mxu0 0
      %2988 = vmatprep.subr.bf16.mxu0 0
      %2989 = vmatpush1.bf16.msra.mxu0 0
      %2990 = vmatprep.subr.bf16.mxu0 0
      %2991 = vmatpush1.bf16.msra.mxu0 0
      %2992 = vmatprep.subr.bf16.mxu0 0
      %2993 = vmatpush1.bf16.msra.mxu0 0
      %2994 = vmatprep.subr.bf16.mxu0 0
      %2995 = vmatpush1.bf16.msra.mxu0 0
      %2996 = vmatprep.subr.bf16.mxu0 0
      %2997 = vmatpush1.bf16.msra.mxu0 0
      %2998 = vmatprep.subr.bf16.mxu0 0
      %2999 = vmatpush1.bf16.msra.mxu0 0
      %3000 = vmatprep.subr.bf16.mxu0 0
      %3001 = vmatpush1.bf16.msra.mxu0 0
      %3002 = vmatprep.mubr.bf16.mxu0 0
      %3003 = vmatmul.mubr.bf16.gmra.mrb[0].mxu0 %v1673
      %v3004 = vpop.f32.mrb[0].mxu0
      %v3005 = vadd.f32 0.0, %v3004
      %v3006 = vpop.f32.mrb[0].mxu0
      %v3007 = vpop.f32.mrb[0].mxu0
      %v3008 = vadd.f32 0.0, %v3007
      %v3009 = vpop.f32.mrb[0].mxu0
      %3010 = vdwg.mxu0
      %v3011 = vmul.f32 %v2554, 2.0
      %v3012 = vmul.f32 %v2557, 2.0
      %v3013 = vmul.f32 %v2595, 2.0
      %v3014 = vmul.f32 %v2598, 2.0
      %v3015 = vmul.f32 %v2636, 2.0
      %v3016 = vmul.f32 %v2639, 2.0
      %v3017 = vmul.f32 %v2677, 2.0
      %v3018 = vmul.f32 %v2680, 2.0
      %v3019 = vmul.f32 %v2718, 2.0
      %v3020 = vmul.f32 %v2721, 2.0
      %v3021 = vmul.f32 %v2759, 2.0
      %v3022 = vmul.f32 %v2762, 2.0
      %v3023 = vmul.f32 %v2800, 2.0
      %v3024 = vmul.f32 %v2803, 2.0
      %v3025 = vmul.f32 %v2841, 2.0
      %v3026 = vmul.f32 %v2844, 2.0
      %v3027 = vmul.f32 %v2882, 2.0
      %v3028 = vmul.f32 %v2885, 2.0
      %v3029 = vmul.f32 %v2923, 2.0
      %v3030 = vmul.f32 %v2926, 2.0
      %v3031 = vmul.f32 %v2964, 2.0
      %v3032 = vmul.f32 %v2967, 2.0
      %v3033 = vmul.f32 %v3005, 2.0
      %v3034 = vmul.f32 %v3008, 2.0
      %v3035 = vsub.f32 %v3011, %v1558
      %v3036 = vsub.f32 %v3012, %v1561
      %v3037 = vsub.f32 %v3013, %v1566
      %v3038 = vsub.f32 %v3014, %v1569
      %v3039 = vsub.f32 %v3015, %v1574
      %v3040 = vsub.f32 %v3016, %v1577
      %v3041 = vsub.f32 %v3017, %v1582
      %v3042 = vsub.f32 %v3018, %v1585
      %v3043 = vsub.f32 %v3019, %v1590
      %v3044 = vsub.f32 %v3020, %v1593
      %v3045 = vsub.f32 %v3021, %v1598
      %v3046 = vsub.f32 %v3022, %v1601
      %v3047 = vsub.f32 %v3023, %v1606
      %v3048 = vsub.f32 %v3024, %v1609
      %v3049 = vsub.f32 %v3025, %v1614
      %v3050 = vsub.f32 %v3026, %v1617
      %v3051 = vsub.f32 %v3027, %v1622
      %v3052 = vsub.f32 %v3028, %v1625
      %v3053 = vsub.f32 %v3029, %v1630
      %v3054 = vsub.f32 %v3030, %v1633
      %v3055 = vsub.f32 %v3031, %v1638
      %v3056 = vsub.f32 %v3032, %v1641
      %v3057 = vsub.f32 %v3033, %v1646
      %v3058 = vsub.f32 %v3034, %v1649
      %s3059 = scalar_lea.vmem %s6, 8
      %v3060 = vld [vmem:[%s3059] sm:$0xf]
      %v3061 = vpack.c.bf16 %v3036, %v3035
      %v3062 = vpack.c.bf16 %v3038, %v3037
      %v3063 = vpack.c.bf16 %v3040, %v3039
      %v3064 = vpack.c.bf16 %v3042, %v3041
      %v3065 = vpack.c.bf16 %v3044, %v3043
      %v3066 = vpack.c.bf16 %v3046, %v3045
      %v3067 = vpack.c.bf16 %v3048, %v3047
      %v3068 = vpack.c.bf16 %v3050, %v3049
      %v3069 = vpack.c.bf16 %v3052, %v3051
      %v3070 = vpack.c.bf16 %v3054, %v3053
      %v3071 = vpack.c.bf16 %v3056, %v3055
      %v3072 = vpack.c.bf16 %v3058, %v3057
      %v3074 = vsel %vm2181, %v3061, 0
      %v3077 = vsel %vm2181, %v3062, 0
      %v3080 = vsel %vm2181, %v3063, 0
      %v3083 = vsel %vm2181, %v3064, 0
      %v3086 = vsel %vm2181, %v3065, 0
      %v3089 = vsel %vm2181, %v3066, 0
      %v3092 = vsel %vm2181, %v3067, 0
      %v3095 = vsel %vm2181, %v3068, 0
      %v3098 = vsel %vm2181, %v3069, 0
      %v3101 = vsel %vm2181, %v3070, 0
      %v3104 = vsel %vm2181, %v3071, 0
      %v3107 = vsel %vm2181, %v3072, 0
      %v3110 = vsel %vm2218, %v3060, 0
      %3112 = vmatprep.subr.bf16.mxu0 0
      %3113 = vmatpush1.bf16.msra.mxu0 %v3110
      %3114 = vmatprep.subr.bf16.mxu0 0
      %3115 = vmatpush1.bf16.msra.mxu0 0
      %3116 = vmatprep.subr.bf16.mxu0 0
      %3117 = vmatpush1.bf16.msra.mxu0 0
      %3118 = vmatprep.subr.bf16.mxu0 0
      %3119 = vmatpush1.bf16.msra.mxu0 0
      %3120 = vmatprep.subr.bf16.mxu0 0
      %3121 = vmatpush1.bf16.msra.mxu0 0
      %3122 = vmatprep.subr.bf16.mxu0 0
      %3123 = vmatpush1.bf16.msra.mxu0 0
      %3124 = vmatprep.subr.bf16.mxu0 0
      %3125 = vmatpush1.bf16.msra.mxu0 0
      %3126 = vmatprep.subr.bf16.mxu0 0
      %3127 = vmatpush1.bf16.msra.mxu0 0
      %3128 = vmatprep.subr.bf16.mxu0 0
      %3129 = vmatpush1.bf16.msra.mxu0 0
      %3130 = vmatprep.subr.bf16.mxu0 0
      %3131 = vmatpush1.bf16.msra.mxu0 0
      %3132 = vmatprep.subr.bf16.mxu0 0
      %3133 = vmatpush1.bf16.msra.mxu0 0
      %3134 = vmatprep.subr.bf16.mxu0 0
      %3135 = vmatpush1.bf16.msra.mxu0 0
      %3136 = vmatprep.subr.bf16.mxu0 0
      %3137 = vmatpush1.bf16.msra.mxu0 0
      %3138 = vmatprep.subr.bf16.mxu0 0
      %3139 = vmatpush1.bf16.msra.mxu0 0
      %3140 = vmatprep.subr.bf16.mxu0 0
      %3141 = vmatpush1.bf16.msra.mxu0 0
      %3142 = vmatprep.subr.bf16.mxu0 0
      %3143 = vmatpush1.bf16.msra.mxu0 0
      %3144 = vmatprep.mubr.bf16.mxu0 0
      %3145 = vmatmul.mubr.bf16.gmra.mrb[0].mxu0 %v3074
      %v3146 = vpop.f32.mrb[0].mxu0
      %v3147 = vadd.f32 0.0, %v3146
      %v3148 = vpop.f32.mrb[0].mxu0
      %v3149 = vpop.f32.mrb[0].mxu0
      %v3150 = vadd.f32 0.0, %v3149
      %v3151 = vpop.f32.mrb[0].mxu0
      %3152 = vmatprep.mubr.bf16.mxu0 0
      %3153 = vmatmul.mubr.bf16.gmra.mrb[0].mxu0 %v3077
      %v3154 = vpop.f32.mrb[0].mxu0
      %v3155 = vadd.f32 0.0, %v3154
      %v3156 = vpop.f32.mrb[0].mxu0
      %v3157 = vpop.f32.mrb[0].mxu0
      %v3158 = vadd.f32 0.0, %v3157
      %v3159 = vpop.f32.mrb[0].mxu0
      %3160 = vmatprep.mubr.bf16.mxu0 0
      %3161 = vmatmul.mubr.bf16.gmra.mrb[0].mxu0 %v3080
      %v3162 = vpop.f32.mrb[0].mxu0
      %v3163 = vadd.f32 0.0, %v3162
      %v3164 = vpop.f32.mrb[0].mxu0
      %v3165 = vpop.f32.mrb[0].mxu0
      %v3166 = vadd.f32 0.0, %v3165
      %v3167 = vpop.f32.mrb[0].mxu0
      %3168 = vmatprep.mubr.bf16.mxu0 0
      %3169 = vmatmul.mubr.bf16.gmra.mrb[0].mxu0 %v3083
      %v3170 = vpop.f32.mrb[0].mxu0
      %v3171 = vadd.f32 0.0, %v3170
      %v3172 = vpop.f32.mrb[0].mxu0
      %v3173 = vpop.f32.mrb[0].mxu0
      %v3174 = vadd.f32 0.0, %v3173
      %v3175 = vpop.f32.mrb[0].mxu0
      %3176 = vmatprep.mubr.bf16.mxu0 0
      %3177 = vmatmul.mubr.bf16.gmra.mrb[0].mxu0 %v3086
      %v3178 = vpop.f32.mrb[0].mxu0
      %v3179 = vadd.f32 0.0, %v3178
      %v3180 = vpop.f32.mrb[0].mxu0
      %v3181 = vpop.f32.mrb[0].mxu0
      %v3182 = vadd.f32 0.0, %v3181
      %v3183 = vpop.f32.mrb[0].mxu0
      %3184 = vmatprep.mubr.bf16.mxu0 0
      %3185 = vmatmul.mubr.bf16.gmra.mrb[0].mxu0 %v3089
      %v3186 = vpop.f32.mrb[0].mxu0
      %v3187 = vadd.f32 0.0, %v3186
      %v3188 = vpop.f32.mrb[0].mxu0
      %v3189 = vpop.f32.mrb[0].mxu0
      %v3190 = vadd.f32 0.0, %v3189
      %v3191 = vpop.f32.mrb[0].mxu0
      %3192 = vmatprep.mubr.bf16.mxu0 0
      %3193 = vmatmul.mubr.bf16.gmra.mrb[0].mxu0 %v3092
      %v3194 = vpop.f32.mrb[0].mxu0
      %v3195 = vadd.f32 0.0, %v3194
      %v3196 = vpop.f32.mrb[0].mxu0
      %v3197 = vpop.f32.mrb[0].mxu0
      %v3198 = vadd.f32 0.0, %v3197
      %v3199 = vpop.f32.mrb[0].mxu0
      %3200 = vmatprep.mubr.bf16.mxu0 0
      %3201 = vmatmul.mubr.bf16.gmra.mrb[0].mxu0 %v3095
      %v3202 = vpop.f32.mrb[0].mxu0
      %v3203 = vadd.f32 0.0, %v3202
      %v3204 = vpop.f32.mrb[0].mxu0
      %v3205 = vpop.f32.mrb[0].mxu0
      %v3206 = vadd.f32 0.0, %v3205
      %v3207 = vpop.f32.mrb[0].mxu0
      %3208 = vmatprep.mubr.bf16.mxu0 0
      %3209 = vmatmul.mubr.bf16.gmra.mrb[0].mxu0 %v3098
      %v3210 = vpop.f32.mrb[0].mxu0
      %v3211 = vadd.f32 0.0, %v3210
      %v3212 = vpop.f32.mrb[0].mxu0
      %v3213 = vpop.f32.mrb[0].mxu0
      %v3214 = vadd.f32 0.0, %v3213
      %v3215 = vpop.f32.mrb[0].mxu0
      %3216 = vmatprep.mubr.bf16.mxu0 0
      %3217 = vmatmul.mubr.bf16.gmra.mrb[0].mxu0 %v3101
      %v3218 = vpop.f32.mrb[0].mxu0
      %v3219 = vadd.f32 0.0, %v3218
      %v3220 = vpop.f32.mrb[0].mxu0
      %v3221 = vpop.f32.mrb[0].mxu0
      %v3222 = vadd.f32 0.0, %v3221
      %v3223 = vpop.f32.mrb[0].mxu0
      %3224 = vmatprep.mubr.bf16.mxu0 0
      %3225 = vmatmul.mubr.bf16.gmra.mrb[0].mxu0 %v3104
      %v3226 = vpop.f32.mrb[0].mxu0
      %v3227 = vadd.f32 0.0, %v3226
      %v3228 = vpop.f32.mrb[0].mxu0
      %v3229 = vpop.f32.mrb[0].mxu0
      %v3230 = vadd.f32 0.0, %v3229
      %v3231 = vpop.f32.mrb[0].mxu0
      %3232 = vmatprep.mubr.bf16.mxu0 0
      %3233 = vmatmul.mubr.bf16.gmra.mrb[0].mxu0 %v3107
      %v3234 = vpop.f32.mrb[0].mxu0
      %v3235 = vadd.f32 0.0, %v3234
      %v3236 = vpop.f32.mrb[0].mxu0
      %v3237 = vpop.f32.mrb[0].mxu0
      %v3238 = vadd.f32 0.0, %v3237
      %v3239 = vpop.f32.mrb[0].mxu0
      %3240 = vdwg.mxu0
      %v3241 = vadd.f32 %v2425, %v3147
      %v3242 = vadd.f32 %v2428, %v3150
      %v3243 = vadd.f32 %v2433, %v3155
      %v3244 = vadd.f32 %v2436, %v3158
      %v3245 = vadd.f32 %v2441, %v3163
      %v3246 = vadd.f32 %v2444, %v3166
      %v3247 = vadd.f32 %v2449, %v3171
      %v3248 = vadd.f32 %v2452, %v3174
      %v3249 = vadd.f32 %v2457, %v3179
      %v3250 = vadd.f32 %v2460, %v3182
      %v3251 = vadd.f32 %v2465, %v3187
      %v3252 = vadd.f32 %v2468, %v3190
      %v3253 = vadd.f32 %v2473, %v3195
      %v3254 = vadd.f32 %v2476, %v3198
      %v3255 = vadd.f32 %v2481, %v3203
      %v3256 = vadd.f32 %v2484, %v3206
      %v3257 = vadd.f32 %v2489, %v3211
      %v3258 = vadd.f32 %v2492, %v3214
      %v3259 = vadd.f32 %v2497, %v3219
      %v3260 = vadd.f32 %v2500, %v3222
      %v3261 = vadd.f32 %v2505, %v3227
      %v3262 = vadd.f32 %v2508, %v3230
      %v3263 = vadd.f32 %v2513, %v3235
      %v3264 = vadd.f32 %v2516, %v3238
      %v3265 = vld [vmem:[%s7] sm:$0x1]
      %v3267 = vlaneseq
      %v3268 = vshrl.u32 %v3267, 7
      %v3269 = vsub.s32 0, %v3268
      %v3270 = vrot.slane %v3265, %v3269
      %v3272 = vadd.f32 %v3241, %v3270
      %v3273 = vadd.f32 %v3242, %v3270
      %v3274 = vadd.f32 %v3243, %v3270
      %v3275 = vadd.f32 %v3244, %v3270
      %v3276 = vadd.f32 %v3245, %v3270
      %v3277 = vadd.f32 %v3246, %v3270
      %v3278 = vadd.f32 %v3247, %v3270
      %v3279 = vadd.f32 %v3248, %v3270
      %v3280 = vadd.f32 %v3249, %v3270
      %v3281 = vadd.f32 %v3250, %v3270
      %v3282 = vadd.f32 %v3251, %v3270
      %v3283 = vadd.f32 %v3252, %v3270
      %v3284 = vadd.f32 %v3253, %v3270
      %v3285 = vadd.f32 %v3254, %v3270
      %v3286 = vadd.f32 %v3255, %v3270
      %v3287 = vadd.f32 %v3256, %v3270
      %v3288 = vadd.f32 %v3257, %v3270
      %v3289 = vadd.f32 %v3258, %v3270
      %v3290 = vadd.f32 %v3259, %v3270
      %v3291 = vadd.f32 %v3260, %v3270
      %v3292 = vadd.f32 %v3261, %v3270
      %v3293 = vadd.f32 %v3262, %v3270
      %v3294 = vadd.f32 %v3263, %v3270
      %v3295 = vadd.f32 %v3264, %v3270
      %v3296 = vmax.f32 %v3272, 0.0
      %v3297 = vmax.f32 %v3273, 0.0
      %v3298 = vmax.f32 %v3274, 0.0
      %v3299 = vmax.f32 %v3275, 0.0
      %v3300 = vmax.f32 %v3276, 0.0
      %v3301 = vmax.f32 %v3277, 0.0
      %v3302 = vmax.f32 %v3278, 0.0
      %v3303 = vmax.f32 %v3279, 0.0
      %v3304 = vmax.f32 %v3280, 0.0
      %v3305 = vmax.f32 %v3281, 0.0
      %v3306 = vmax.f32 %v3282, 0.0
      %v3307 = vmax.f32 %v3283, 0.0
      %v3308 = vmax.f32 %v3284, 0.0
      %v3309 = vmax.f32 %v3285, 0.0
      %v3310 = vmax.f32 %v3286, 0.0
      %v3311 = vmax.f32 %v3287, 0.0
      %v3312 = vmax.f32 %v3288, 0.0
      %v3313 = vmax.f32 %v3289, 0.0
      %v3314 = vmax.f32 %v3290, 0.0
      %v3315 = vmax.f32 %v3291, 0.0
      %v3316 = vmax.f32 %v3292, 0.0
      %v3317 = vmax.f32 %v3293, 0.0
      %v3318 = vmax.f32 %v3294, 0.0
      %v3319 = vmax.f32 %v3295, 0.0
      %v3320 = vpack.c.bf16 %v3297, %v3296
      %v3321 = vpack.c.bf16 %v3299, %v3298
      %v3322 = vpack.c.bf16 %v3301, %v3300
      %v3323 = vpack.c.bf16 %v3303, %v3302
      %v3324 = vpack.c.bf16 %v3305, %v3304
      %v3325 = vpack.c.bf16 %v3307, %v3306
      %v3326 = vpack.c.bf16 %v3309, %v3308
      %v3327 = vpack.c.bf16 %v3311, %v3310
      %v3328 = vpack.c.bf16 %v3313, %v3312
      %v3329 = vpack.c.bf16 %v3315, %v3314
      %v3330 = vpack.c.bf16 %v3317, %v3316
      %v3331 = vpack.c.bf16 %v3319, %v3318
      %v3332 = vld [vmem:[%s8] sm:$0xf]
      %s3333 = scalar_lea.vmem %s8, 4
      %v3334 = vld [vmem:[%s3333] sm:$0xf]
      %v3336 = vsel %vm2181, %v3321, 0
      %v3339 = vsel %vm2181, %v3322, 0
      %v3342 = vsel %vm2181, %v3323, 0
      %v3345 = vsel %vm2181, %v3324, 0
      %v3348 = vsel %vm2181, %v3327, 0
      %v3351 = vsel %vm2181, %v3328, 0
      %v3354 = vsel %vm2181, %v3329, 0
      %v3357 = vsel %vm2181, %v3330, 0
      %v3360 = vsel %vm2218, %v3334, 0
      %3362 = vmatprep.subr.bf16.mxu0 0
      %3363 = vmatpush1.bf16.msra.mxu0 %v3360
      %3364 = vmatprep.subr.bf16.mxu0 0
      %3365 = vmatpush1.bf16.msra.mxu0 0
      %3366 = vmatprep.subr.bf16.mxu0 0
      %3367 = vmatpush1.bf16.msra.mxu0 0
      %3368 = vmatprep.subr.bf16.mxu0 0
      %3369 = vmatpush1.bf16.msra.mxu0 0
      %3370 = vmatprep.subr.bf16.mxu0 0
      %3371 = vmatpush1.bf16.msra.mxu0 0
      %3372 = vmatprep.subr.bf16.mxu0 0
      %3373 = vmatpush1.bf16.msra.mxu0 0
      %3374 = vmatprep.subr.bf16.mxu0 0
      %3375 = vmatpush1.bf16.msra.mxu0 0
      %3376 = vmatprep.subr.bf16.mxu0 0
      %3377 = vmatpush1.bf16.msra.mxu0 0
      %3378 = vmatprep.subr.bf16.mxu0 0
      %3379 = vmatpush1.bf16.msra.mxu0 0
      %3380 = vmatprep.subr.bf16.mxu0 0
      %3381 = vmatpush1.bf16.msra.mxu0 0
      %3382 = vmatprep.subr.bf16.mxu0 0
      %3383 = vmatpush1.bf16.msra.mxu0 0
      %3384 = vmatprep.subr.bf16.mxu0 0
      %3385 = vmatpush1.bf16.msra.mxu0 0
      %3386 = vmatprep.subr.bf16.mxu0 0
      %3387 = vmatpush1.bf16.msra.mxu0 0
      %3388 = vmatprep.subr.bf16.mxu0 0
      %3389 = vmatpush1.bf16.msra.mxu0 0
      %3390 = vmatprep.subr.bf16.mxu0 0
      %3391 = vmatpush1.bf16.msra.mxu0 0
      %3392 = vmatprep.subr.bf16.mxu0 0
      %3393 = vmatpush1.bf16.msra.mxu0 0
      %3394 = vmatprep.mubr.bf16.mxu0 0
      %3395 = vmatmul.mubr.bf16.gmra.mrb[0].mxu0 %v3336
      %v3396 = vpop.f32.mrb[0].mxu0
      %v3397 = vadd.f32 0.0, %v3396
      %v3398 = vpop.f32.mrb[0].mxu0
      %v3399 = vpop.f32.mrb[0].mxu0
      %v3400 = vadd.f32 0.0, %v3399
      %v3401 = vpop.f32.mrb[0].mxu0
      %3402 = vmatprep.mubr.bf16.mxu0 0
      %3403 = vmatmul.mubr.bf16.gmra.mrb[0].mxu0 %v3339
      %v3404 = vpop.f32.mrb[0].mxu0
      %v3405 = vadd.f32 0.0, %v3404
      %v3406 = vpop.f32.mrb[0].mxu0
      %v3407 = vpop.f32.mrb[0].mxu0
      %v3408 = vadd.f32 0.0, %v3407
      %v3409 = vpop.f32.mrb[0].mxu0
      %3410 = vmatprep.mubr.bf16.mxu0 0
      %3411 = vmatmul.mubr.bf16.gmra.mrb[0].mxu0 %v3342
      %v3412 = vpop.f32.mrb[0].mxu0
      %v3413 = vadd.f32 0.0, %v3412
      %v3414 = vpop.f32.mrb[0].mxu0
      %v3415 = vpop.f32.mrb[0].mxu0
      %v3416 = vadd.f32 0.0, %v3415
      %v3417 = vpop.f32.mrb[0].mxu0
      %3418 = vmatprep.mubr.bf16.mxu0 0
      %3419 = vmatmul.mubr.bf16.gmra.mrb[0].mxu0 %v3345
      %v3420 = vpop.f32.mrb[0].mxu0
      %v3421 = vadd.f32 0.0, %v3420
      %v3422 = vpop.f32.mrb[0].mxu0
      %v3423 = vpop.f32.mrb[0].mxu0
      %v3424 = vadd.f32 0.0, %v3423
      %v3425 = vpop.f32.mrb[0].mxu0
      %3426 = vmatprep.mubr.bf16.mxu0 0
      %3427 = vmatmul.mubr.bf16.gmra.mrb[0].mxu0 %v3348
      %v3428 = vpop.f32.mrb[0].mxu0
      %v3429 = vadd.f32 0.0, %v3428
      %v3430 = vpop.f32.mrb[0].mxu0
      %v3431 = vpop.f32.mrb[0].mxu0
      %v3432 = vadd.f32 0.0, %v3431
      %v3433 = vpop.f32.mrb[0].mxu0
      %3434 = vmatprep.mubr.bf16.mxu0 0
      %3435 = vmatmul.mubr.bf16.gmra.mrb[0].mxu0 %v3351
      %v3436 = vpop.f32.mrb[0].mxu0
      %v3437 = vadd.f32 0.0, %v3436
      %v3438 = vpop.f32.mrb[0].mxu0
      %v3439 = vpop.f32.mrb[0].mxu0
      %v3440 = vadd.f32 0.0, %v3439
      %v3441 = vpop.f32.mrb[0].mxu0
      %3442 = vmatprep.mubr.bf16.mxu0 0
      %3443 = vmatmul.mubr.bf16.gmra.mrb[0].mxu0 %v3354
      %v3444 = vpop.f32.mrb[0].mxu0
      %v3445 = vadd.f32 0.0, %v3444
      %v3446 = vpop.f32.mrb[0].mxu0
      %v3447 = vpop.f32.mrb[0].mxu0
      %v3448 = vadd.f32 0.0, %v3447
      %v3449 = vpop.f32.mrb[0].mxu0
      %3450 = vmatprep.mubr.bf16.mxu0 0
      %3451 = vmatmul.mubr.bf16.gmra.mrb[0].mxu0 %v3357
      %v3452 = vpop.f32.mrb[0].mxu0
      %v3453 = vadd.f32 0.0, %v3452
      %v3454 = vpop.f32.mrb[0].mxu0
      %v3455 = vpop.f32.mrb[0].mxu0
      %v3456 = vadd.f32 0.0, %v3455
      %v3457 = vpop.f32.mrb[0].mxu0
      %3458 = vdwg.mxu0
      %v3460 = vsel %vm2181, %v3320, 0
      %v3463 = vsel %vm2181, %v3326, 0
      %v3466 = vsel %vm2218, %v3332, 0
      %3468 = vmatprep.subr.bf16.mxu0 0
      %3469 = vmatpush1.bf16.msra.mxu0 %v3466
      %3470 = vmatprep.subr.bf16.mxu0 0
      %3471 = vmatpush1.bf16.msra.mxu0 0
      %3472 = vmatprep.subr.bf16.mxu0 0
      %3473 = vmatpush1.bf16.msra.mxu0 0
      %3474 = vmatprep.subr.bf16.mxu0 0
      %3475 = vmatpush1.bf16.msra.mxu0 0
      %3476 = vmatprep.subr.bf16.mxu0 0
      %3477 = vmatpush1.bf16.msra.mxu0 0
      %3478 = vmatprep.subr.bf16.mxu0 0
      %3479 = vmatpush1.bf16.msra.mxu0 0
      %3480 = vmatprep.subr.bf16.mxu0 0
      %3481 = vmatpush1.bf16.msra.mxu0 0
      %3482 = vmatprep.subr.bf16.mxu0 0
      %3483 = vmatpush1.bf16.msra.mxu0 0
      %3484 = vmatprep.subr.bf16.mxu0 0
      %3485 = vmatpush1.bf16.msra.mxu0 0
      %3486 = vmatprep.subr.bf16.mxu0 0
      %3487 = vmatpush1.bf16.msra.mxu0 0
      %3488 = vmatprep.subr.bf16.mxu0 0
      %3489 = vmatpush1.bf16.msra.mxu0 0
      %3490 = vmatprep.subr.bf16.mxu0 0
      %3491 = vmatpush1.bf16.msra.mxu0 0
      %3492 = vmatprep.subr.bf16.mxu0 0
      %3493 = vmatpush1.bf16.msra.mxu0 0
      %3494 = vmatprep.subr.bf16.mxu0 0
      %3495 = vmatpush1.bf16.msra.mxu0 0
      %3496 = vmatprep.subr.bf16.mxu0 0
      %3497 = vmatpush1.bf16.msra.mxu0 0
      %3498 = vmatprep.subr.bf16.mxu0 0
      %3499 = vmatpush1.bf16.msra.mxu0 0
      %3500 = vmatprep.mubr.bf16.mxu0 0
      %3501 = vmatmul.mubr.bf16.gmra.mrb[0].mxu0 %v3460
      %v3502 = vpop.f32.mrb[0].mxu0
      %v3503 = vadd.f32 %v3397, %v3502
      %v3504 = vpop.f32.mrb[0].mxu0
      %v3505 = vpop.f32.mrb[0].mxu0
      %v3506 = vadd.f32 %v3400, %v3505
      %v3507 = vpop.f32.mrb[0].mxu0
      %3508 = vmatprep.mubr.bf16.mxu0 0
      %3509 = vmatmul.mubr.bf16.gmra.mrb[0].mxu0 %v3336
      %v3510 = vpop.f32.mrb[0].mxu0
      %v3511 = vadd.f32 %v3405, %v3510
      %v3512 = vpop.f32.mrb[0].mxu0
      %v3513 = vpop.f32.mrb[0].mxu0
      %v3514 = vadd.f32 %v3408, %v3513
      %v3515 = vpop.f32.mrb[0].mxu0
      %3516 = vmatprep.mubr.bf16.mxu0 0
      %3517 = vmatmul.mubr.bf16.gmra.mrb[0].mxu0 %v3339
      %v3518 = vpop.f32.mrb[0].mxu0
      %v3519 = vadd.f32 %v3413, %v3518
      %v3520 = vpop.f32.mrb[0].mxu0
      %v3521 = vpop.f32.mrb[0].mxu0
      %v3522 = vadd.f32 %v3416, %v3521
      %v3523 = vpop.f32.mrb[0].mxu0
      %3524 = vmatprep.mubr.bf16.mxu0 0
      %3525 = vmatmul.mubr.bf16.gmra.mrb[0].mxu0 %v3342
      %v3526 = vpop.f32.mrb[0].mxu0
      %v3527 = vadd.f32 %v3421, %v3526
      %v3528 = vpop.f32.mrb[0].mxu0
      %v3529 = vpop.f32.mrb[0].mxu0
      %v3530 = vadd.f32 %v3424, %v3529
      %v3531 = vpop.f32.mrb[0].mxu0
      %3532 = vmatprep.mubr.bf16.mxu0 0
      %3533 = vmatmul.mubr.bf16.gmra.mrb[0].mxu0 %v3463
      %v3534 = vpop.f32.mrb[0].mxu0
      %v3535 = vadd.f32 %v3429, %v3534
      %v3536 = vpop.f32.mrb[0].mxu0
      %v3537 = vpop.f32.mrb[0].mxu0
      %v3538 = vadd.f32 %v3432, %v3537
      %v3539 = vpop.f32.mrb[0].mxu0
      %3540 = vmatprep.mubr.bf16.mxu0 0
      %3541 = vmatmul.mubr.bf16.gmra.mrb[0].mxu0 %v3348
      %v3542 = vpop.f32.mrb[0].mxu0
      %v3543 = vadd.f32 %v3437, %v3542
      %v3544 = vpop.f32.mrb[0].mxu0
      %v3545 = vpop.f32.mrb[0].mxu0
      %v3546 = vadd.f32 %v3440, %v3545
      %v3547 = vpop.f32.mrb[0].mxu0
      %3548 = vmatprep.mubr.bf16.mxu0 0
      %3549 = vmatmul.mubr.bf16.gmra.mrb[0].mxu0 %v3351
      %v3550 = vpop.f32.mrb[0].mxu0
      %v3551 = vadd.f32 %v3445, %v3550
      %v3552 = vpop.f32.mrb[0].mxu0
      %v3553 = vpop.f32.mrb[0].mxu0
      %v3554 = vadd.f32 %v3448, %v3553
      %v3555 = vpop.f32.mrb[0].mxu0
      %3556 = vmatprep.mubr.bf16.mxu0 0
      %3557 = vmatmul.mubr.bf16.gmra.mrb[0].mxu0 %v3354
      %v3558 = vpop.f32.mrb[0].mxu0
      %v3559 = vadd.f32 %v3453, %v3558
      %v3560 = vpop.f32.mrb[0].mxu0
      %v3561 = vpop.f32.mrb[0].mxu0
      %v3562 = vadd.f32 %v3456, %v3561
      %v3563 = vpop.f32.mrb[0].mxu0
      %3564 = vdwg.mxu0
      %s3565 = scalar_lea.vmem %s8, 8
      %v3566 = vld [vmem:[%s3565] sm:$0xf]
      %v3568 = vsel %vm2181, %v3325, 0
      %v3571 = vsel %vm2181, %v3331, 0
      %v3574 = vsel %vm2218, %v3566, 0
      %3576 = vmatprep.subr.bf16.mxu0 0
      %3577 = vmatpush1.bf16.msra.mxu0 %v3574
      %3578 = vmatprep.subr.bf16.mxu0 0
      %3579 = vmatpush1.bf16.msra.mxu0 0
      %3580 = vmatprep.subr.bf16.mxu0 0
      %3581 = vmatpush1.bf16.msra.mxu0 0
      %3582 = vmatprep.subr.bf16.mxu0 0
      %3583 = vmatpush1.bf16.msra.mxu0 0
      %3584 = vmatprep.subr.bf16.mxu0 0
      %3585 = vmatpush1.bf16.msra.mxu0 0
      %3586 = vmatprep.subr.bf16.mxu0 0
      %3587 = vmatpush1.bf16.msra.mxu0 0
      %3588 = vmatprep.subr.bf16.mxu0 0
      %3589 = vmatpush1.bf16.msra.mxu0 0
      %3590 = vmatprep.subr.bf16.mxu0 0
      %3591 = vmatpush1.bf16.msra.mxu0 0
      %3592 = vmatprep.subr.bf16.mxu0 0
      %3593 = vmatpush1.bf16.msra.mxu0 0
      %3594 = vmatprep.subr.bf16.mxu0 0
      %3595 = vmatpush1.bf16.msra.mxu0 0
      %3596 = vmatprep.subr.bf16.mxu0 0
      %3597 = vmatpush1.bf16.msra.mxu0 0
      %3598 = vmatprep.subr.bf16.mxu0 0
      %3599 = vmatpush1.bf16.msra.mxu0 0
      %3600 = vmatprep.subr.bf16.mxu0 0
      %3601 = vmatpush1.bf16.msra.mxu0 0
      %3602 = vmatprep.subr.bf16.mxu0 0
      %3603 = vmatpush1.bf16.msra.mxu0 0
      %3604 = vmatprep.subr.bf16.mxu0 0
      %3605 = vmatpush1.bf16.msra.mxu0 0
      %3606 = vmatprep.subr.bf16.mxu0 0
      %3607 = vmatpush1.bf16.msra.mxu0 0
      %3608 = vmatprep.mubr.bf16.mxu0 0
      %3609 = vmatmul.mubr.bf16.gmra.mrb[0].mxu0 %v3339
      %v3610 = vpop.f32.mrb[0].mxu0
      %v3611 = vadd.f32 0.0, %v3610
      %v3612 = vpop.f32.mrb[0].mxu0
      %v3613 = vpop.f32.mrb[0].mxu0
      %v3614 = vadd.f32 0.0, %v3613
      %v3615 = vpop.f32.mrb[0].mxu0
      %3616 = vmatprep.mubr.bf16.mxu0 0
      %3617 = vmatmul.mubr.bf16.gmra.mrb[0].mxu0 %v3342
      %v3618 = vpop.f32.mrb[0].mxu0
      %v3619 = vadd.f32 0.0, %v3618
      %v3620 = vpop.f32.mrb[0].mxu0
      %v3621 = vpop.f32.mrb[0].mxu0
      %v3622 = vadd.f32 0.0, %v3621
      %v3623 = vpop.f32.mrb[0].mxu0
      %3624 = vmatprep.mubr.bf16.mxu0 0
      %3625 = vmatmul.mubr.bf16.gmra.mrb[0].mxu0 %v3345
      %v3626 = vpop.f32.mrb[0].mxu0
      %v3627 = vadd.f32 0.0, %v3626
      %v3628 = vpop.f32.mrb[0].mxu0
      %v3629 = vpop.f32.mrb[0].mxu0
      %v3630 = vadd.f32 0.0, %v3629
      %v3631 = vpop.f32.mrb[0].mxu0
      %3632 = vmatprep.mubr.bf16.mxu0 0
      %3633 = vmatmul.mubr.bf16.gmra.mrb[0].mxu0 %v3568
      %v3634 = vpop.f32.mrb[0].mxu0
      %v3635 = vadd.f32 0.0, %v3634
      %v3636 = vpop.f32.mrb[0].mxu0
      %v3637 = vpop.f32.mrb[0].mxu0
      %v3638 = vadd.f32 0.0, %v3637
      %v3639 = vpop.f32.mrb[0].mxu0
      %3640 = vmatprep.mubr.bf16.mxu0 0
      %3641 = vmatmul.mubr.bf16.gmra.mrb[0].mxu0 %v3351
      %v3642 = vpop.f32.mrb[0].mxu0
      %v3643 = vadd.f32 0.0, %v3642
      %v3644 = vpop.f32.mrb[0].mxu0
      %v3645 = vpop.f32.mrb[0].mxu0
      %v3646 = vadd.f32 0.0, %v3645
      %v3647 = vpop.f32.mrb[0].mxu0
      %3648 = vmatprep.mubr.bf16.mxu0 0
      %3649 = vmatmul.mubr.bf16.gmra.mrb[0].mxu0 %v3354
      %v3650 = vpop.f32.mrb[0].mxu0
      %v3651 = vadd.f32 0.0, %v3650
      %v3652 = vpop.f32.mrb[0].mxu0
      %v3653 = vpop.f32.mrb[0].mxu0
      %v3654 = vadd.f32 0.0, %v3653
      %v3655 = vpop.f32.mrb[0].mxu0
      %3656 = vmatprep.mubr.bf16.mxu0 0
      %3657 = vmatmul.mubr.bf16.gmra.mrb[0].mxu0 %v3357
      %v3658 = vpop.f32.mrb[0].mxu0
      %v3659 = vadd.f32 0.0, %v3658
      %v3660 = vpop.f32.mrb[0].mxu0
      %v3661 = vpop.f32.mrb[0].mxu0
      %v3662 = vadd.f32 0.0, %v3661
      %v3663 = vpop.f32.mrb[0].mxu0
      %3664 = vmatprep.mubr.bf16.mxu0 0
      %3665 = vmatmul.mubr.bf16.gmra.mrb[0].mxu0 %v3571
      %v3666 = vpop.f32.mrb[0].mxu0
      %v3667 = vadd.f32 0.0, %v3666
      %v3668 = vpop.f32.mrb[0].mxu0
      %v3669 = vpop.f32.mrb[0].mxu0
      %v3670 = vadd.f32 0.0, %v3669
      %v3671 = vpop.f32.mrb[0].mxu0
      %3672 = vdwg.mxu0
      %v3673 = vadd.f32 %v3503, %v3611
      %v3674 = vadd.f32 %v3506, %v3614
      %v3675 = vadd.f32 %v3511, %v3619
      %v3676 = vadd.f32 %v3514, %v3622
      %v3677 = vadd.f32 %v3519, %v3627
      %v3678 = vadd.f32 %v3522, %v3630
      %v3679 = vadd.f32 %v3527, %v3635
      %v3680 = vadd.f32 %v3530, %v3638
      %v3681 = vadd.f32 %v3535, %v3643
      %v3682 = vadd.f32 %v3538, %v3646
      %v3683 = vadd.f32 %v3543, %v3651
      %v3684 = vadd.f32 %v3546, %v3654
      %v3685 = vadd.f32 %v3551, %v3659
      %v3686 = vadd.f32 %v3554, %v3662
      %v3687 = vadd.f32 %v3559, %v3667
      %v3688 = vadd.f32 %v3562, %v3670
      %v3689 = vld [vmem:[%s9] sm:$0x1]
      %v3691 = vlaneseq
      %v3692 = vshrl.u32 %v3691, 7
      %v3693 = vsub.s32 0, %v3692
      %v3694 = vrot.slane %v3689, %v3693
      %v3696 = vadd.f32 %v3673, %v3694
      %v3697 = vadd.f32 %v3674, %v3694
      %v3698 = vadd.f32 %v3675, %v3694
      %v3699 = vadd.f32 %v3676, %v3694
      %v3700 = vadd.f32 %v3677, %v3694
      %v3701 = vadd.f32 %v3678, %v3694
      %v3702 = vadd.f32 %v3679, %v3694
      %v3703 = vadd.f32 %v3680, %v3694
      %v3704 = vadd.f32 %v3681, %v3694
      %v3705 = vadd.f32 %v3682, %v3694
      %v3706 = vadd.f32 %v3683, %v3694
      %v3707 = vadd.f32 %v3684, %v3694
      %v3708 = vadd.f32 %v3685, %v3694
      %v3709 = vadd.f32 %v3686, %v3694
      %v3710 = vadd.f32 %v3687, %v3694
      %v3711 = vadd.f32 %v3688, %v3694
      %v3712 = vxor.u32 %v3696, 2147483648
      %v3713 = vxor.u32 %v3697, 2147483648
      %v3714 = vxor.u32 %v3698, 2147483648
      %v3715 = vxor.u32 %v3699, 2147483648
      %v3716 = vxor.u32 %v3700, 2147483648
      %v3717 = vxor.u32 %v3701, 2147483648
      %v3718 = vxor.u32 %v3702, 2147483648
      %v3719 = vxor.u32 %v3703, 2147483648
      %v3720 = vxor.u32 %v3704, 2147483648
      %v3721 = vxor.u32 %v3705, 2147483648
      %v3722 = vxor.u32 %v3706, 2147483648
      %v3723 = vxor.u32 %v3707, 2147483648
      %v3724 = vxor.u32 %v3708, 2147483648
      %v3725 = vxor.u32 %v3709, 2147483648
      %v3726 = vxor.u32 %v3710, 2147483648
      %v3727 = vxor.u32 %v3711, 2147483648
      %v3728 = vmul.f32 %v3712, 1.442695
      %v3729 = vpow.pop %v3728
      %v3730 = vmul.f32 %v3713, 1.442695
      %v3731 = vpow.pop %v3730
      %v3732 = vmul.f32 %v3714, 1.442695
      %v3733 = vpow.pop %v3732
      %v3734 = vmul.f32 %v3715, 1.442695
      %v3735 = vpow.pop %v3734
      %v3736 = vmul.f32 %v3716, 1.442695
      %v3737 = vpow.pop %v3736
      %v3738 = vmul.f32 %v3717, 1.442695
      %v3739 = vpow.pop %v3738
      %v3740 = vmul.f32 %v3718, 1.442695
      %v3741 = vpow.pop %v3740
      %v3742 = vmul.f32 %v3719, 1.442695
      %v3743 = vpow.pop %v3742
      %v3744 = vmul.f32 %v3720, 1.442695
      %v3745 = vpow.pop %v3744
      %v3746 = vmul.f32 %v3721, 1.442695
      %v3747 = vpow.pop %v3746
      %v3748 = vmul.f32 %v3722, 1.442695
      %v3749 = vpow.pop %v3748
      %v3750 = vmul.f32 %v3723, 1.442695
      %v3751 = vpow.pop %v3750
      %v3752 = vmul.f32 %v3724, 1.442695
      %v3753 = vpow.pop %v3752
      %v3754 = vmul.f32 %v3725, 1.442695
      %v3755 = vpow.pop %v3754
      %v3756 = vmul.f32 %v3726, 1.442695
      %v3757 = vpow.pop %v3756
      %v3758 = vmul.f32 %v3727, 1.442695
      %v3759 = vpow.pop %v3758
      %v3760 = vadd.f32 %v3729, 1.0
      %v3761 = vadd.f32 %v3731, 1.0
      %v3762 = vadd.f32 %v3733, 1.0
      %v3763 = vadd.f32 %v3735, 1.0
      %v3764 = vadd.f32 %v3737, 1.0
      %v3765 = vadd.f32 %v3739, 1.0
      %v3766 = vadd.f32 %v3741, 1.0
      %v3767 = vadd.f32 %v3743, 1.0
      %v3768 = vadd.f32 %v3745, 1.0
      %v3769 = vadd.f32 %v3747, 1.0
      %v3770 = vadd.f32 %v3749, 1.0
      %v3771 = vadd.f32 %v3751, 1.0
      %v3772 = vadd.f32 %v3753, 1.0
      %v3773 = vadd.f32 %v3755, 1.0
      %v3774 = vadd.f32 %v3757, 1.0
      %v3775 = vadd.f32 %v3759, 1.0
      %v3776 = vrcp.pop %v3760
      %v3777 = vmul.f32 1.0, %v3776
      %v3778 = vrcp.pop %v3761
      %v3779 = vmul.f32 1.0, %v3778
      %v3780 = vrcp.pop %v3762
      %v3781 = vmul.f32 1.0, %v3780
      %v3782 = vrcp.pop %v3763
      %v3783 = vmul.f32 1.0, %v3782
      %v3784 = vrcp.pop %v3764
      %v3785 = vmul.f32 1.0, %v3784
      %v3786 = vrcp.pop %v3765
      %v3787 = vmul.f32 1.0, %v3786
      %v3788 = vrcp.pop %v3766
      %v3789 = vmul.f32 1.0, %v3788
      %v3790 = vrcp.pop %v3767
      %v3791 = vmul.f32 1.0, %v3790
      %v3792 = vrcp.pop %v3768
      %v3793 = vmul.f32 1.0, %v3792
      %v3794 = vrcp.pop %v3769
      %v3795 = vmul.f32 1.0, %v3794
      %v3796 = vrcp.pop %v3770
      %v3797 = vmul.f32 1.0, %v3796
      %v3798 = vrcp.pop %v3771
      %v3799 = vmul.f32 1.0, %v3798
      %v3800 = vrcp.pop %v3772
      %v3801 = vmul.f32 1.0, %v3800
      %v3802 = vrcp.pop %v3773
      %v3803 = vmul.f32 1.0, %v3802
      %v3804 = vrcp.pop %v3774
      %v3805 = vmul.f32 1.0, %v3804
      %v3806 = vrcp.pop %v3775
      %v3807 = vmul.f32 1.0, %v3806
      %3824 = vrot.lane.b32.xlu0 %v3777, 112
      %v3825 = vpop.permute.xlu0 %3824
      %3826 = vrot.lane.b32.xlu0 %v3779, 112
      %v3827 = vpop.permute.xlu0 %3826
      %3828 = vrot.lane.b32.xlu0 %v3781, 112
      %v3829 = vpop.permute.xlu0 %3828
      %3830 = vrot.lane.b32.xlu0 %v3783, 112
      %v3831 = vpop.permute.xlu0 %3830
      %3832 = vrot.lane.b32.xlu0 %v3785, 112
      %v3833 = vpop.permute.xlu0 %3832
      %3834 = vrot.lane.b32.xlu0 %v3787, 112
      %v3835 = vpop.permute.xlu0 %3834
      %3836 = vrot.lane.b32.xlu0 %v3789, 112
      %v3837 = vpop.permute.xlu0 %3836
      %3838 = vrot.lane.b32.xlu0 %v3791, 112
      %v3839 = vpop.permute.xlu0 %3838
      %3840 = vrot.lane.b32.xlu0 %v3793, 112
      %v3841 = vpop.permute.xlu0 %3840
      %3842 = vrot.lane.b32.xlu0 %v3795, 112
      %v3843 = vpop.permute.xlu0 %3842
      %3844 = vrot.lane.b32.xlu0 %v3797, 112
      %v3845 = vpop.permute.xlu0 %3844
      %3846 = vrot.lane.b32.xlu0 %v3799, 112
      %v3847 = vpop.permute.xlu0 %3846
      %3848 = vrot.lane.b32.xlu0 %v3801, 112
      %v3849 = vpop.permute.xlu0 %3848
      %3850 = vrot.lane.b32.xlu0 %v3803, 112
      %v3851 = vpop.permute.xlu0 %3850
      %3852 = vrot.lane.b32.xlu0 %v3805, 112
      %v3853 = vpop.permute.xlu0 %3852
      %3854 = vrot.lane.b32.xlu0 %v3807, 112
      %v3855 = vpop.permute.xlu0 %3854
      %v3872 = vmul.f32 %v3696, %v3825
      %v3873 = vmul.f32 %v3697, %v3827
      %v3874 = vmul.f32 %v3698, %v3829
      %v3875 = vmul.f32 %v3699, %v3831
      %v3876 = vmul.f32 %v3700, %v3833
      %v3877 = vmul.f32 %v3701, %v3835
      %v3878 = vmul.f32 %v3702, %v3837
      %v3879 = vmul.f32 %v3703, %v3839
      %v3880 = vmul.f32 %v3704, %v3841
      %v3881 = vmul.f32 %v3705, %v3843
      %v3882 = vmul.f32 %v3706, %v3845
      %v3883 = vmul.f32 %v3707, %v3847
      %v3884 = vmul.f32 %v3708, %v3849
      %v3885 = vmul.f32 %v3709, %v3851
      %v3886 = vmul.f32 %v3710, %v3853
      %v3887 = vmul.f32 %v3711, %v3855
      %v3888 = vsel %vm1486, %v3872, 0.0
      %3889 = vadd.xlane.f32.xlu0 %v3888
      %v3890 = vpop.xlane.xlu0 %3889
      %v3891 = vsel %vm1486, %v3873, 0.0
      %3892 = vadd.xlane.f32.xlu0 %v3891
      %v3893 = vpop.xlane.xlu0 %3892
      %v3894 = vsel %vm1486, %v3874, 0.0
      %3895 = vadd.xlane.f32.xlu0 %v3894
      %v3896 = vpop.xlane.xlu0 %3895
      %v3897 = vsel %vm1486, %v3875, 0.0
      %3898 = vadd.xlane.f32.xlu0 %v3897
      %v3899 = vpop.xlane.xlu0 %3898
      %v3900 = vsel %vm1486, %v3876, 0.0
      %3901 = vadd.xlane.f32.xlu0 %v3900
      %v3902 = vpop.xlane.xlu0 %3901
      %v3903 = vsel %vm1486, %v3877, 0.0
      %3904 = vadd.xlane.f32.xlu0 %v3903
      %v3905 = vpop.xlane.xlu0 %3904
      %v3906 = vsel %vm1486, %v3878, 0.0
      %3907 = vadd.xlane.f32.xlu0 %v3906
      %v3908 = vpop.xlane.xlu0 %3907
      %v3909 = vsel %vm1486, %v3879, 0.0
      %3910 = vadd.xlane.f32.xlu0 %v3909
      %v3911 = vpop.xlane.xlu0 %3910
      %v3912 = vsel %vm1486, %v3880, 0.0
      %3913 = vadd.xlane.f32.xlu0 %v3912
      %v3914 = vpop.xlane.xlu0 %3913
      %v3915 = vsel %vm1486, %v3881, 0.0
      %3916 = vadd.xlane.f32.xlu0 %v3915
      %v3917 = vpop.xlane.xlu0 %3916
      %v3918 = vsel %vm1486, %v3882, 0.0
      %3919 = vadd.xlane.f32.xlu0 %v3918
      %v3920 = vpop.xlane.xlu0 %3919
      %v3921 = vsel %vm1486, %v3883, 0.0
      %3922 = vadd.xlane.f32.xlu0 %v3921
      %v3923 = vpop.xlane.xlu0 %3922
      %v3924 = vsel %vm1486, %v3884, 0.0
      %3925 = vadd.xlane.f32.xlu0 %v3924
      %v3926 = vpop.xlane.xlu0 %3925
      %v3927 = vsel %vm1486, %v3885, 0.0
      %3928 = vadd.xlane.f32.xlu0 %v3927
      %v3929 = vpop.xlane.xlu0 %3928
      %v3930 = vsel %vm1486, %v3886, 0.0
      %3931 = vadd.xlane.f32.xlu0 %v3930
      %v3932 = vpop.xlane.xlu0 %3931
      %v3933 = vsel %vm1486, %v3887, 0.0
      %3934 = vadd.xlane.f32.xlu0 %v3933
      %v3935 = vpop.xlane.xlu0 %3934
      %v3936 = vadd.f32 %v3890, %v3893
      %v3937 = vrot.slane %v3936, 4
      %v3938 = vadd.f32 %v3936, %v3937
      %v3939 = vrot.slane %v3938, 2
      %v3940 = vadd.f32 %v3938, %v3939
      %v3941 = vrot.slane %v3940, 1
      %v3942 = vadd.f32 %v3940, %v3941
      %v3943 = vadd.f32 %v3896, %v3899
      %v3944 = vrot.slane %v3943, 4
      %v3945 = vadd.f32 %v3943, %v3944
      %v3946 = vrot.slane %v3945, 2
      %v3947 = vadd.f32 %v3945, %v3946
      %v3948 = vrot.slane %v3947, 1
      %v3949 = vadd.f32 %v3947, %v3948
      %v3950 = vadd.f32 %v3902, %v3905
      %v3951 = vrot.slane %v3950, 4
      %v3952 = vadd.f32 %v3950, %v3951
      %v3953 = vrot.slane %v3952, 2
      %v3954 = vadd.f32 %v3952, %v3953
      %v3955 = vrot.slane %v3954, 1
      %v3956 = vadd.f32 %v3954, %v3955
      %v3957 = vadd.f32 %v3908, %v3911
      %v3958 = vrot.slane %v3957, 4
      %v3959 = vadd.f32 %v3957, %v3958
      %v3960 = vrot.slane %v3959, 2
      %v3961 = vadd.f32 %v3959, %v3960
      %v3962 = vrot.slane %v3961, 1
      %v3963 = vadd.f32 %v3961, %v3962
      %v3964 = vadd.f32 %v3914, %v3917
      %v3965 = vrot.slane %v3964, 4
      %v3966 = vadd.f32 %v3964, %v3965
      %v3967 = vrot.slane %v3966, 2
      %v3968 = vadd.f32 %v3966, %v3967
      %v3969 = vrot.slane %v3968, 1
      %v3970 = vadd.f32 %v3968, %v3969
      %v3971 = vadd.f32 %v3920, %v3923
      %v3972 = vrot.slane %v3971, 4
      %v3973 = vadd.f32 %v3971, %v3972
      %v3974 = vrot.slane %v3973, 2
      %v3975 = vadd.f32 %v3973, %v3974
      %v3976 = vrot.slane %v3975, 1
      %v3977 = vadd.f32 %v3975, %v3976
      %v3978 = vadd.f32 %v3926, %v3929
      %v3979 = vrot.slane %v3978, 4
      %v3980 = vadd.f32 %v3978, %v3979
      %v3981 = vrot.slane %v3980, 2
      %v3982 = vadd.f32 %v3980, %v3981
      %v3983 = vrot.slane %v3982, 1
      %v3984 = vadd.f32 %v3982, %v3983
      %v3985 = vadd.f32 %v3932, %v3935
      %v3986 = vrot.slane %v3985, 4
      %v3987 = vadd.f32 %v3985, %v3986
      %v3988 = vrot.slane %v3987, 2
      %v3989 = vadd.f32 %v3987, %v3988
      %v3990 = vrot.slane %v3989, 1
      %v3991 = vadd.f32 %v3989, %v3990
      %v3992 = vmul.f32 %v3942, 0.00390625
      %v3993 = vmul.f32 %v3949, 0.00390625
      %v3994 = vmul.f32 %v3956, 0.00390625
      %v3995 = vmul.f32 %v3963, 0.00390625
      %v3996 = vmul.f32 %v3970, 0.00390625
      %v3997 = vmul.f32 %v3977, 0.00390625
      %v3998 = vmul.f32 %v3984, 0.00390625
      %v3999 = vmul.f32 %v3991, 0.00390625
      %v4000 = vsub.f32 %v3872, %v3992
      %v4001 = vsub.f32 %v3873, %v3992
      %v4002 = vsub.f32 %v3874, %v3993
      %v4003 = vsub.f32 %v3875, %v3993
      %v4004 = vsub.f32 %v3876, %v3994
      %v4005 = vsub.f32 %v3877, %v3994
      %v4006 = vsub.f32 %v3878, %v3995
      %v4007 = vsub.f32 %v3879, %v3995
      %v4008 = vsub.f32 %v3880, %v3996
      %v4009 = vsub.f32 %v3881, %v3996
      %v4010 = vsub.f32 %v3882, %v3997
      %v4011 = vsub.f32 %v3883, %v3997
      %v4012 = vsub.f32 %v3884, %v3998
      %v4013 = vsub.f32 %v3885, %v3998
      %v4014 = vsub.f32 %v3886, %v3999
      %v4015 = vsub.f32 %v3887, %v3999
      %v4016 = vmul.f32 %v4000, %v4000
      %v4017 = vmul.f32 %v4001, %v4001
      %v4018 = vmul.f32 %v4002, %v4002
      %v4019 = vmul.f32 %v4003, %v4003
      %v4020 = vmul.f32 %v4004, %v4004
      %v4021 = vmul.f32 %v4005, %v4005
      %v4022 = vmul.f32 %v4006, %v4006
      %v4023 = vmul.f32 %v4007, %v4007
      %v4024 = vmul.f32 %v4008, %v4008
      %v4025 = vmul.f32 %v4009, %v4009
      %v4026 = vmul.f32 %v4010, %v4010
      %v4027 = vmul.f32 %v4011, %v4011
      %v4028 = vmul.f32 %v4012, %v4012
      %v4029 = vmul.f32 %v4013, %v4013
      %v4030 = vmul.f32 %v4014, %v4014
      %v4031 = vmul.f32 %v4015, %v4015
      %v4032 = vsel %vm1486, %v4016, 0.0
      %4033 = vadd.xlane.f32.xlu0 %v4032
      %v4034 = vpop.xlane.xlu0 %4033
      %v4035 = vsel %vm1486, %v4017, 0.0
      %4036 = vadd.xlane.f32.xlu0 %v4035
      %v4037 = vpop.xlane.xlu0 %4036
      %v4038 = vsel %vm1486, %v4018, 0.0
      %4039 = vadd.xlane.f32.xlu0 %v4038
      %v4040 = vpop.xlane.xlu0 %4039
      %v4041 = vsel %vm1486, %v4019, 0.0
      %4042 = vadd.xlane.f32.xlu0 %v4041
      %v4043 = vpop.xlane.xlu0 %4042
      %v4044 = vsel %vm1486, %v4020, 0.0
      %4045 = vadd.xlane.f32.xlu0 %v4044
      %v4046 = vpop.xlane.xlu0 %4045
      %v4047 = vsel %vm1486, %v4021, 0.0
      %4048 = vadd.xlane.f32.xlu0 %v4047
      %v4049 = vpop.xlane.xlu0 %4048
      %v4050 = vsel %vm1486, %v4022, 0.0
      %4051 = vadd.xlane.f32.xlu0 %v4050
      %v4052 = vpop.xlane.xlu0 %4051
      %v4053 = vsel %vm1486, %v4023, 0.0
      %4054 = vadd.xlane.f32.xlu0 %v4053
      %v4055 = vpop.xlane.xlu0 %4054
      %v4056 = vsel %vm1486, %v4024, 0.0
      %4057 = vadd.xlane.f32.xlu0 %v4056
      %v4058 = vpop.xlane.xlu0 %4057
      %v4059 = vsel %vm1486, %v4025, 0.0
      %4060 = vadd.xlane.f32.xlu0 %v4059
      %v4061 = vpop.xlane.xlu0 %4060
      %v4062 = vsel %vm1486, %v4026, 0.0
      %4063 = vadd.xlane.f32.xlu0 %v4062
      %v4064 = vpop.xlane.xlu0 %4063
      %v4065 = vsel %vm1486, %v4027, 0.0
      %4066 = vadd.xlane.f32.xlu0 %v4065
      %v4067 = vpop.xlane.xlu0 %4066
      %v4068 = vsel %vm1486, %v4028, 0.0
      %4069 = vadd.xlane.f32.xlu0 %v4068
      %v4070 = vpop.xlane.xlu0 %4069
      %v4071 = vsel %vm1486, %v4029, 0.0
      %4072 = vadd.xlane.f32.xlu0 %v4071
      %v4073 = vpop.xlane.xlu0 %4072
      %v4074 = vsel %vm1486, %v4030, 0.0
      %4075 = vadd.xlane.f32.xlu0 %v4074
      %v4076 = vpop.xlane.xlu0 %4075
      %v4077 = vsel %vm1486, %v4031, 0.0
      %4078 = vadd.xlane.f32.xlu0 %v4077
      %v4079 = vpop.xlane.xlu0 %4078
      %v4080 = vadd.f32 %v4034, %v4037
      %v4081 = vrot.slane %v4080, 4
      %v4082 = vadd.f32 %v4080, %v4081
      %v4083 = vrot.slane %v4082, 2
      %v4084 = vadd.f32 %v4082, %v4083
      %v4085 = vrot.slane %v4084, 1
      %v4086 = vadd.f32 %v4084, %v4085
      %v4087 = vadd.f32 %v4040, %v4043
      %v4088 = vrot.slane %v4087, 4
      %v4089 = vadd.f32 %v4087, %v4088
      %v4090 = vrot.slane %v4089, 2
      %v4091 = vadd.f32 %v4089, %v4090
      %v4092 = vrot.slane %v4091, 1
      %v4093 = vadd.f32 %v4091, %v4092
      %v4094 = vadd.f32 %v4046, %v4049
      %v4095 = vrot.slane %v4094, 4
      %v4096 = vadd.f32 %v4094, %v4095
      %v4097 = vrot.slane %v4096, 2
      %v4098 = vadd.f32 %v4096, %v4097
      %v4099 = vrot.slane %v4098, 1
      %v4100 = vadd.f32 %v4098, %v4099
      %v4101 = vadd.f32 %v4052, %v4055
      %v4102 = vrot.slane %v4101, 4
      %v4103 = vadd.f32 %v4101, %v4102
      %v4104 = vrot.slane %v4103, 2
      %v4105 = vadd.f32 %v4103, %v4104
      %v4106 = vrot.slane %v4105, 1
      %v4107 = vadd.f32 %v4105, %v4106
      %v4108 = vadd.f32 %v4058, %v4061
      %v4109 = vrot.slane %v4108, 4
      %v4110 = vadd.f32 %v4108, %v4109
      %v4111 = vrot.slane %v4110, 2
      %v4112 = vadd.f32 %v4110, %v4111
      %v4113 = vrot.slane %v4112, 1
      %v4114 = vadd.f32 %v4112, %v4113
      %v4115 = vadd.f32 %v4064, %v4067
      %v4116 = vrot.slane %v4115, 4
      %v4117 = vadd.f32 %v4115, %v4116
      %v4118 = vrot.slane %v4117, 2
      %v4119 = vadd.f32 %v4117, %v4118
      %v4120 = vrot.slane %v4119, 1
      %v4121 = vadd.f32 %v4119, %v4120
      %v4122 = vadd.f32 %v4070, %v4073
      %v4123 = vrot.slane %v4122, 4
      %v4124 = vadd.f32 %v4122, %v4123
      %v4125 = vrot.slane %v4124, 2
      %v4126 = vadd.f32 %v4124, %v4125
      %v4127 = vrot.slane %v4126, 1
      %v4128 = vadd.f32 %v4126, %v4127
      %v4129 = vadd.f32 %v4076, %v4079
      %v4130 = vrot.slane %v4129, 4
      %v4131 = vadd.f32 %v4129, %v4130
      %v4132 = vrot.slane %v4131, 2
      %v4133 = vadd.f32 %v4131, %v4132
      %v4134 = vrot.slane %v4133, 1
      %v4135 = vadd.f32 %v4133, %v4134
      %v4136 = vmul.f32 %v4086, 0.00390625
      %v4137 = vmul.f32 %v4093, 0.00390625
      %v4138 = vmul.f32 %v4100, 0.00390625
      %v4139 = vmul.f32 %v4107, 0.00390625
      %v4140 = vmul.f32 %v4114, 0.00390625
      %v4141 = vmul.f32 %v4121, 0.00390625
      %v4142 = vmul.f32 %v4128, 0.00390625
      %v4143 = vmul.f32 %v4135, 0.00390625
      %v4144 = vadd.f32 %v4136, 1e-05
      %v4145 = vadd.f32 %v4137, 1e-05
      %v4146 = vadd.f32 %v4138, 1e-05
      %v4147 = vadd.f32 %v4139, 1e-05
      %v4148 = vadd.f32 %v4140, 1e-05
      %v4149 = vadd.f32 %v4141, 1e-05
      %v4150 = vadd.f32 %v4142, 1e-05
      %v4151 = vadd.f32 %v4143, 1e-05
      %v4152 = vrsqrt.pop %v4144
      %v4153 = vrsqrt.pop %v4145
      %v4154 = vrsqrt.pop %v4146
      %v4155 = vrsqrt.pop %v4147
      %v4156 = vrsqrt.pop %v4148
      %v4157 = vrsqrt.pop %v4149
      %v4158 = vrsqrt.pop %v4150
      %v4159 = vrsqrt.pop %v4151
      %v4160 = vmul.f32 %v4000, %v4152
      %v4161 = vmul.f32 %v4001, %v4152
      %v4162 = vmul.f32 %v4002, %v4153
      %v4163 = vmul.f32 %v4003, %v4153
      %v4164 = vmul.f32 %v4004, %v4154
      %v4165 = vmul.f32 %v4005, %v4154
      %v4166 = vmul.f32 %v4006, %v4155
      %v4167 = vmul.f32 %v4007, %v4155
      %v4168 = vmul.f32 %v4008, %v4156
      %v4169 = vmul.f32 %v4009, %v4156
      %v4170 = vmul.f32 %v4010, %v4157
      %v4171 = vmul.f32 %v4011, %v4157
      %v4172 = vmul.f32 %v4012, %v4158
      %v4173 = vmul.f32 %v4013, %v4158
      %v4174 = vmul.f32 %v4014, %v4159
      %v4175 = vmul.f32 %v4015, %v4159
      %v4176 = vld [vmem:[%s10] sm:$0xff]
      %v4177 = vld [vmem:[%s10 + $0x8] sm:$0xff]
      %v4178 = vmul.f32 %v4160, %v4176
      %v4179 = vmul.f32 %v4161, %v4177
      %v4180 = vmul.f32 %v4162, %v4176
      %v4181 = vmul.f32 %v4163, %v4177
      %v4182 = vmul.f32 %v4164, %v4176
      %v4183 = vmul.f32 %v4165, %v4177
      %v4184 = vmul.f32 %v4166, %v4176
      %v4185 = vmul.f32 %v4167, %v4177
      %v4186 = vmul.f32 %v4168, %v4176
      %v4187 = vmul.f32 %v4169, %v4177
      %v4188 = vmul.f32 %v4170, %v4176
      %v4189 = vmul.f32 %v4171, %v4177
      %v4190 = vmul.f32 %v4172, %v4176
      %v4191 = vmul.f32 %v4173, %v4177
      %v4192 = vmul.f32 %v4174, %v4176
      %v4193 = vmul.f32 %v4175, %v4177
      %v4194 = vld [vmem:[%s11] sm:$0xff]
      %v4195 = vld [vmem:[%s11 + $0x8] sm:$0xff]
      %v4196 = vadd.f32 %v4178, %v4194
      %v4197 = vadd.f32 %v4179, %v4195
      %v4198 = vadd.f32 %v4180, %v4194
      %v4199 = vadd.f32 %v4181, %v4195
      %v4200 = vadd.f32 %v4182, %v4194
      %v4201 = vadd.f32 %v4183, %v4195
      %v4202 = vadd.f32 %v4184, %v4194
      %v4203 = vadd.f32 %v4185, %v4195
      %v4204 = vadd.f32 %v4186, %v4194
      %v4205 = vadd.f32 %v4187, %v4195
      %v4206 = vadd.f32 %v4188, %v4194
      %v4207 = vadd.f32 %v4189, %v4195
      %v4208 = vadd.f32 %v4190, %v4194
      %v4209 = vadd.f32 %v4191, %v4195
      %v4210 = vadd.f32 %v4192, %v4194
      %v4211 = vadd.f32 %v4193, %v4195
      %v4212 = vpack.c.bf16 %v4197, %v4196
      %v4213 = vpack.c.bf16 %v4199, %v4198
      %v4214 = vpack.c.bf16 %v4201, %v4200
      %v4215 = vpack.c.bf16 %v4203, %v4202
      %v4216 = vpack.c.bf16 %v4205, %v4204
      %v4217 = vpack.c.bf16 %v4207, %v4206
      %v4218 = vpack.c.bf16 %v4209, %v4208
      %v4219 = vpack.c.bf16 %v4211, %v4210
      %v4220 = vld [vmem:[%s12] sm:$0xf]
      %v4221 = vld [vmem:[%s12 + $0x4] sm:$0xf]
      %s4222 = scalar_lea.vmem %s12, 8
      %v4223 = vld [vmem:[%s4222] sm:$0xf]
      %v4224 = vld [vmem:[%s4222 + $0x4] sm:$0xf]
      %v4227 = vunpack.c.l.b16 %v4223
      %v4228 = vunpack.c.l.b16 %v4224
      %v4229 = vpack.c.b16 %v4228, %v4227
      %v4232 = vsel %vm1486, %v4213, 0
      %v4235 = vsel %vm1486, %v4217, 0
      %4237 = vmatprep.subr.bf16.mxu0 0
      %4238 = vmatpush1.bf16.msra.mxu0 %v4229
      %4239 = vmatprep.subr.bf16.mxu0 0
      %4240 = vmatpush1.bf16.msra.mxu0 0
      %4241 = vmatprep.subr.bf16.mxu0 0
      %4242 = vmatpush1.bf16.msra.mxu0 0
      %4243 = vmatprep.subr.bf16.mxu0 0
      %4244 = vmatpush1.bf16.msra.mxu0 0
      %4245 = vmatprep.subr.bf16.mxu0 0
      %4246 = vmatpush1.bf16.msra.mxu0 0
      %4247 = vmatprep.subr.bf16.mxu0 0
      %4248 = vmatpush1.bf16.msra.mxu0 0
      %4249 = vmatprep.subr.bf16.mxu0 0
      %4250 = vmatpush1.bf16.msra.mxu0 0
      %4251 = vmatprep.subr.bf16.mxu0 0
      %4252 = vmatpush1.bf16.msra.mxu0 0
      %4253 = vmatprep.subr.bf16.mxu0 0
      %4254 = vmatpush1.bf16.msra.mxu0 0
      %4255 = vmatprep.subr.bf16.mxu0 0
      %4256 = vmatpush1.bf16.msra.mxu0 0
      %4257 = vmatprep.subr.bf16.mxu0 0
      %4258 = vmatpush1.bf16.msra.mxu0 0
      %4259 = vmatprep.subr.bf16.mxu0 0
      %4260 = vmatpush1.bf16.msra.mxu0 0
      %4261 = vmatprep.subr.bf16.mxu0 0
      %4262 = vmatpush1.bf16.msra.mxu0 0
      %4263 = vmatprep.subr.bf16.mxu0 0
      %4264 = vmatpush1.bf16.msra.mxu0 0
      %4265 = vmatprep.subr.bf16.mxu0 0
      %4266 = vmatpush1.bf16.msra.mxu0 0
      %4267 = vmatprep.subr.bf16.mxu0 0
      %4268 = vmatpush1.bf16.msra.mxu0 0
      %4269 = vmatprep.mubr.bf16.mxu0 0
      %4270 = vmatmul.mubr.bf16.gmra.mrb[0].mxu0 %v4232
      %v4271 = vpop.f32.mrb[0].mxu0
      %v4272 = vadd.f32 0.0, %v4271
      %v4273 = vpop.f32.mrb[0].mxu0
      %v4274 = vpop.f32.mrb[0].mxu0
      %v4275 = vadd.f32 0.0, %v4274
      %v4276 = vpop.f32.mrb[0].mxu0
      %4277 = vmatprep.mubr.bf16.mxu0 0
      %4278 = vmatmul.mubr.bf16.gmra.mrb[0].mxu0 %v4235
      %v4279 = vpop.f32.mrb[0].mxu0
      %v4280 = vadd.f32 0.0, %v4279
      %v4281 = vpop.f32.mrb[0].mxu0
      %v4282 = vpop.f32.mrb[0].mxu0
      %v4283 = vadd.f32 0.0, %v4282
      %v4284 = vpop.f32.mrb[0].mxu0
      %4285 = vdwg.mxu0
      %v4288 = vunpack.c.l.b16 %v4220
      %v4289 = vunpack.c.l.b16 %v4221
      %v4290 = vpack.c.b16 %v4289, %v4288
      %v4293 = vsel %vm1486, %v4212, 0
      %v4296 = vsel %vm1486, %v4216, 0
      %4298 = vmatprep.subr.bf16.mxu0 0
      %4299 = vmatpush1.bf16.msra.mxu0 %v4290
      %4300 = vmatprep.subr.bf16.mxu0 0
      %4301 = vmatpush1.bf16.msra.mxu0 0
      %4302 = vmatprep.subr.bf16.mxu0 0
      %4303 = vmatpush1.bf16.msra.mxu0 0
      %4304 = vmatprep.subr.bf16.mxu0 0
      %4305 = vmatpush1.bf16.msra.mxu0 0
      %4306 = vmatprep.subr.bf16.mxu0 0
      %4307 = vmatpush1.bf16.msra.mxu0 0
      %4308 = vmatprep.subr.bf16.mxu0 0
      %4309 = vmatpush1.bf16.msra.mxu0 0
      %4310 = vmatprep.subr.bf16.mxu0 0
      %4311 = vmatpush1.bf16.msra.mxu0 0
      %4312 = vmatprep.subr.bf16.mxu0 0
      %4313 = vmatpush1.bf16.msra.mxu0 0
      %4314 = vmatprep.subr.bf16.mxu0 0
      %4315 = vmatpush1.bf16.msra.mxu0 0
      %4316 = vmatprep.subr.bf16.mxu0 0
      %4317 = vmatpush1.bf16.msra.mxu0 0
      %4318 = vmatprep.subr.bf16.mxu0 0
      %4319 = vmatpush1.bf16.msra.mxu0 0
      %4320 = vmatprep.subr.bf16.mxu0 0
      %4321 = vmatpush1.bf16.msra.mxu0 0
      %4322 = vmatprep.subr.bf16.mxu0 0
      %4323 = vmatpush1.bf16.msra.mxu0 0
      %4324 = vmatprep.subr.bf16.mxu0 0
      %4325 = vmatpush1.bf16.msra.mxu0 0
      %4326 = vmatprep.subr.bf16.mxu0 0
      %4327 = vmatpush1.bf16.msra.mxu0 0
      %4328 = vmatprep.subr.bf16.mxu0 0
      %4329 = vmatpush1.bf16.msra.mxu0 0
      %4330 = vmatprep.mubr.bf16.mxu0 0
      %4331 = vmatmul.mubr.bf16.gmra.mrb[0].mxu0 %v4293
      %v4332 = vpop.f32.mrb[0].mxu0
      %v4333 = vadd.f32 %v4272, %v4332
      %v4334 = vpop.f32.mrb[0].mxu0
      %v4335 = vpop.f32.mrb[0].mxu0
      %v4336 = vadd.f32 %v4275, %v4335
      %v4337 = vpop.f32.mrb[0].mxu0
      %4338 = vmatprep.mubr.bf16.mxu0 0
      %4339 = vmatmul.mubr.bf16.gmra.mrb[0].mxu0 %v4296
      %v4340 = vpop.f32.mrb[0].mxu0
      %v4341 = vadd.f32 %v4280, %v4340
      %v4342 = vpop.f32.mrb[0].mxu0
      %v4343 = vpop.f32.mrb[0].mxu0
      %v4344 = vadd.f32 %v4283, %v4343
      %v4345 = vpop.f32.mrb[0].mxu0
      %4346 = vdwg.mxu0
      %s4347 = scalar_lea.vmem %s12, 16
      %v4348 = vld [vmem:[%s4347] sm:$0xf]
      %v4349 = vld [vmem:[%s4347 + $0x4] sm:$0xf]
      %v4352 = vunpack.c.l.b16 %v4348
      %v4353 = vunpack.c.l.b16 %v4349
      %v4354 = vpack.c.b16 %v4353, %v4352
      %v4357 = vsel %vm1486, %v4214, 0
      %v4360 = vsel %vm1486, %v4218, 0
      %4362 = vmatprep.subr.bf16.mxu0 0
      %4363 = vmatpush1.bf16.msra.mxu0 %v4354
      %4364 = vmatprep.subr.bf16.mxu0 0
      %4365 = vmatpush1.bf16.msra.mxu0 0
      %4366 = vmatprep.subr.bf16.mxu0 0
      %4367 = vmatpush1.bf16.msra.mxu0 0
      %4368 = vmatprep.subr.bf16.mxu0 0
      %4369 = vmatpush1.bf16.msra.mxu0 0
      %4370 = vmatprep.subr.bf16.mxu0 0
      %4371 = vmatpush1.bf16.msra.mxu0 0
      %4372 = vmatprep.subr.bf16.mxu0 0
      %4373 = vmatpush1.bf16.msra.mxu0 0
      %4374 = vmatprep.subr.bf16.mxu0 0
      %4375 = vmatpush1.bf16.msra.mxu0 0
      %4376 = vmatprep.subr.bf16.mxu0 0
      %4377 = vmatpush1.bf16.msra.mxu0 0
      %4378 = vmatprep.subr.bf16.mxu0 0
      %4379 = vmatpush1.bf16.msra.mxu0 0
      %4380 = vmatprep.subr.bf16.mxu0 0
      %4381 = vmatpush1.bf16.msra.mxu0 0
      %4382 = vmatprep.subr.bf16.mxu0 0
      %4383 = vmatpush1.bf16.msra.mxu0 0
      %4384 = vmatprep.subr.bf16.mxu0 0
      %4385 = vmatpush1.bf16.msra.mxu0 0
      %4386 = vmatprep.subr.bf16.mxu0 0
      %4387 = vmatpush1.bf16.msra.mxu0 0
      %4388 = vmatprep.subr.bf16.mxu0 0
      %4389 = vmatpush1.bf16.msra.mxu0 0
      %4390 = vmatprep.subr.bf16.mxu0 0
      %4391 = vmatpush1.bf16.msra.mxu0 0
      %4392 = vmatprep.subr.bf16.mxu0 0
      %4393 = vmatpush1.bf16.msra.mxu0 0
      %4394 = vmatprep.mubr.bf16.mxu0 0
      %4395 = vmatmul.mubr.bf16.gmra.mrb[0].mxu0 %v4357
      %v4396 = vpop.f32.mrb[0].mxu0
      %v4397 = vadd.f32 0.0, %v4396
      %v4398 = vpop.f32.mrb[0].mxu0
      %v4399 = vpop.f32.mrb[0].mxu0
      %v4400 = vadd.f32 0.0, %v4399
      %v4401 = vpop.f32.mrb[0].mxu0
      %4402 = vmatprep.mubr.bf16.mxu0 0
      %4403 = vmatmul.mubr.bf16.gmra.mrb[0].mxu0 %v4360
      %v4404 = vpop.f32.mrb[0].mxu0
      %v4405 = vadd.f32 0.0, %v4404
      %v4406 = vpop.f32.mrb[0].mxu0
      %v4407 = vpop.f32.mrb[0].mxu0
      %v4408 = vadd.f32 0.0, %v4407
      %v4409 = vpop.f32.mrb[0].mxu0
      %4410 = vdwg.mxu0
      %v4411 = vadd.f32 %v4333, %v4397
      %v4412 = vadd.f32 %v4336, %v4400
      %v4413 = vadd.f32 %v4341, %v4405
      %v4414 = vadd.f32 %v4344, %v4408
      %s4415 = scalar_lea.vmem %s12, 24
      %v4416 = vld [vmem:[%s4415] sm:$0xf]
      %v4417 = vld [vmem:[%s4415 + $0x4] sm:$0xf]
      %v4420 = vunpack.c.l.b16 %v4416
      %v4421 = vunpack.c.l.b16 %v4417
      %v4422 = vpack.c.b16 %v4421, %v4420
      %v4425 = vsel %vm1486, %v4215, 0
      %v4428 = vsel %vm1486, %v4219, 0
      %4430 = vmatprep.subr.bf16.mxu0 0
      %4431 = vmatpush1.bf16.msra.mxu0 %v4422
      %4432 = vmatprep.subr.bf16.mxu0 0
      %4433 = vmatpush1.bf16.msra.mxu0 0
      %4434 = vmatprep.subr.bf16.mxu0 0
      %4435 = vmatpush1.bf16.msra.mxu0 0
      %4436 = vmatprep.subr.bf16.mxu0 0
      %4437 = vmatpush1.bf16.msra.mxu0 0
      %4438 = vmatprep.subr.bf16.mxu0 0
      %4439 = vmatpush1.bf16.msra.mxu0 0
      %4440 = vmatprep.subr.bf16.mxu0 0
      %4441 = vmatpush1.bf16.msra.mxu0 0
      %4442 = vmatprep.subr.bf16.mxu0 0
      %4443 = vmatpush1.bf16.msra.mxu0 0
      %4444 = vmatprep.subr.bf16.mxu0 0
      %4445 = vmatpush1.bf16.msra.mxu0 0
      %4446 = vmatprep.subr.bf16.mxu0 0
      %4447 = vmatpush1.bf16.msra.mxu0 0
      %4448 = vmatprep.subr.bf16.mxu0 0
      %4449 = vmatpush1.bf16.msra.mxu0 0
      %4450 = vmatprep.subr.bf16.mxu0 0
      %4451 = vmatpush1.bf16.msra.mxu0 0
      %4452 = vmatprep.subr.bf16.mxu0 0
      %4453 = vmatpush1.bf16.msra.mxu0 0
      %4454 = vmatprep.subr.bf16.mxu0 0
      %4455 = vmatpush1.bf16.msra.mxu0 0
      %4456 = vmatprep.subr.bf16.mxu0 0
      %4457 = vmatpush1.bf16.msra.mxu0 0
      %4458 = vmatprep.subr.bf16.mxu0 0
      %4459 = vmatpush1.bf16.msra.mxu0 0
      %4460 = vmatprep.subr.bf16.mxu0 0
      %4461 = vmatpush1.bf16.msra.mxu0 0
      %4462 = vmatprep.mubr.bf16.mxu0 0
      %4463 = vmatmul.mubr.bf16.gmra.mrb[0].mxu0 %v4425
      %v4464 = vpop.f32.mrb[0].mxu0
      %v4465 = vadd.f32 0.0, %v4464
      %v4466 = vpop.f32.mrb[0].mxu0
      %v4467 = vpop.f32.mrb[0].mxu0
      %v4468 = vadd.f32 0.0, %v4467
      %v4469 = vpop.f32.mrb[0].mxu0
      %4470 = vmatprep.mubr.bf16.mxu0 0
      %4471 = vmatmul.mubr.bf16.gmra.mrb[0].mxu0 %v4428
      %v4472 = vpop.f32.mrb[0].mxu0
      %v4473 = vadd.f32 0.0, %v4472
      %v4474 = vpop.f32.mrb[0].mxu0
      %v4475 = vpop.f32.mrb[0].mxu0
      %v4476 = vadd.f32 0.0, %v4475
      %v4477 = vpop.f32.mrb[0].mxu0
      %4478 = vdwg.mxu0
      %v4479 = vadd.f32 %v4411, %v4465
      %v4480 = vadd.f32 %v4412, %v4468
      %v4481 = vadd.f32 %v4413, %v4473
      %v4482 = vadd.f32 %v4414, %v4476
      %v4483 = vld [vmem:[%s13] sm:$0x1]
      %v4485 = vlaneseq
      %v4486 = vshrl.u32 %v4485, 7
      %v4487 = vsub.s32 0, %v4486
      %v4488 = vrot.slane %v4483, %v4487
      %v4490 = vadd.f32 %v4479, %v4488
      %v4491 = vadd.f32 %v4480, %v4488
      %v4492 = vadd.f32 %v4481, %v4488
      %v4493 = vadd.f32 %v4482, %v4488
      %v4494 = vxor.u32 %v4490, 2147483648
      %v4495 = vxor.u32 %v4491, 2147483648
      %v4496 = vxor.u32 %v4492, 2147483648
      %v4497 = vxor.u32 %v4493, 2147483648
      %v4498 = vmul.f32 %v4494, 1.442695
      %v4499 = vpow.pop %v4498
      %v4500 = vmul.f32 %v4495, 1.442695
      %v4501 = vpow.pop %v4500
      %v4502 = vmul.f32 %v4496, 1.442695
      %v4503 = vpow.pop %v4502
      %v4504 = vmul.f32 %v4497, 1.442695
      %v4505 = vpow.pop %v4504
      %v4506 = vadd.f32 %v4499, 1.0
      %v4507 = vadd.f32 %v4501, 1.0
      %v4508 = vadd.f32 %v4503, 1.0
      %v4509 = vadd.f32 %v4505, 1.0
      %v4510 = vrcp.pop %v4506
      %v4511 = vmul.f32 1.0, %v4510
      %v4512 = vrcp.pop %v4507
      %v4513 = vmul.f32 1.0, %v4512
      %v4514 = vrcp.pop %v4508
      %v4515 = vmul.f32 1.0, %v4514
      %v4516 = vrcp.pop %v4509
      %v4517 = vmul.f32 1.0, %v4516
      %4522 = vrot.lane.b32.xlu0 %v4511, 96
      %v4523 = vpop.permute.xlu0 %4522
      %4524 = vrot.lane.b32.xlu0 %v4513, 96
      %v4525 = vpop.permute.xlu0 %4524
      %4526 = vrot.lane.b32.xlu0 %v4515, 96
      %v4527 = vpop.permute.xlu0 %4526
      %4528 = vrot.lane.b32.xlu0 %v4517, 96
      %v4529 = vpop.permute.xlu0 %4528
      %v4534 = vmul.f32 %v4490, %v4523
      %v4535 = vmul.f32 %v4491, %v4525
      %v4536 = vmul.f32 %v4492, %v4527
      %v4537 = vmul.f32 %v4493, %v4529
      %vm4538 = vcmask 261120
      %v4539 = vsel %vm4538, %v4534, 0.0
      %4540 = vadd.xlane.f32.xlu0 %v4539
      %v4541 = vpop.xlane.xlu0 %4540
      %v4542 = vsel %vm4538, %v4535, 0.0
      %4543 = vadd.xlane.f32.xlu0 %v4542
      %v4544 = vpop.xlane.xlu0 %4543
      %v4545 = vsel %vm4538, %v4536, 0.0
      %4546 = vadd.xlane.f32.xlu0 %v4545
      %v4547 = vpop.xlane.xlu0 %4546
      %v4548 = vsel %vm4538, %v4537, 0.0
      %4549 = vadd.xlane.f32.xlu0 %v4548
      %v4550 = vpop.xlane.xlu0 %4549
      %v4551 = vadd.f32 %v4541, %v4544
      %v4552 = vrot.slane %v4551, 4
      %v4553 = vadd.f32 %v4551, %v4552
      %v4554 = vrot.slane %v4553, 2
      %v4555 = vadd.f32 %v4553, %v4554
      %v4556 = vrot.slane %v4555, 1
      %v4557 = vadd.f32 %v4555, %v4556
      %v4558 = vadd.f32 %v4547, %v4550
      %v4559 = vrot.slane %v4558, 4
      %v4560 = vadd.f32 %v4558, %v4559
      %v4561 = vrot.slane %v4560, 2
      %v4562 = vadd.f32 %v4560, %v4561
      %v4563 = vrot.slane %v4562, 1
      %v4564 = vadd.f32 %v4562, %v4563
      %v4565 = vmul.f32 %v4557, 0.001953125
      %v4566 = vmul.f32 %v4564, 0.001953125
      %v4567 = vsub.f32 %v4534, %v4565
      %v4568 = vsub.f32 %v4535, %v4565
      %v4569 = vsub.f32 %v4536, %v4566
      %v4570 = vsub.f32 %v4537, %v4566
      %v4571 = vmul.f32 %v4567, %v4567
      %v4572 = vmul.f32 %v4568, %v4568
      %v4573 = vmul.f32 %v4569, %v4569
      %v4574 = vmul.f32 %v4570, %v4570
      %v4575 = vsel %vm4538, %v4571, 0.0
      %4576 = vadd.xlane.f32.xlu0 %v4575
      %v4577 = vpop.xlane.xlu0 %4576
      %v4578 = vsel %vm4538, %v4572, 0.0
      %4579 = vadd.xlane.f32.xlu0 %v4578
      %v4580 = vpop.xlane.xlu0 %4579
      %v4581 = vsel %vm4538, %v4573, 0.0
      %4582 = vadd.xlane.f32.xlu0 %v4581
      %v4583 = vpop.xlane.xlu0 %4582
      %v4584 = vsel %vm4538, %v4574, 0.0
      %4585 = vadd.xlane.f32.xlu0 %v4584
      %v4586 = vpop.xlane.xlu0 %4585
      %v4587 = vadd.f32 %v4577, %v4580
      %v4588 = vrot.slane %v4587, 4
      %v4589 = vadd.f32 %v4587, %v4588
      %v4590 = vrot.slane %v4589, 2
      %v4591 = vadd.f32 %v4589, %v4590
      %v4592 = vrot.slane %v4591, 1
      %v4593 = vadd.f32 %v4591, %v4592
      %v4594 = vadd.f32 %v4583, %v4586
      %v4595 = vrot.slane %v4594, 4
      %v4596 = vadd.f32 %v4594, %v4595
      %v4597 = vrot.slane %v4596, 2
      %v4598 = vadd.f32 %v4596, %v4597
      %v4599 = vrot.slane %v4598, 1
      %v4600 = vadd.f32 %v4598, %v4599
      %v4601 = vmul.f32 %v4593, 0.001953125
      %v4602 = vmul.f32 %v4600, 0.001953125
      %v4603 = vadd.f32 %v4601, 1e-05
      %v4604 = vadd.f32 %v4602, 1e-05
      %v4605 = vrsqrt.pop %v4603
      %v4606 = vrsqrt.pop %v4604
      %v4607 = vmul.f32 %v4567, %v4605
      %v4608 = vmul.f32 %v4568, %v4605
      %v4609 = vmul.f32 %v4569, %v4606
      %v4610 = vmul.f32 %v4570, %v4606
      %v4611 = vld [vmem:[%s14] sm:$0xff]
      %v4612 = vld [vmem:[%s14 + $0x8] sm:$0xff]
      %v4613 = vmul.f32 %v4607, %v4611
      %v4614 = vmul.f32 %v4608, %v4612
      %v4615 = vmul.f32 %v4609, %v4611
      %v4616 = vmul.f32 %v4610, %v4612
      %v4617 = vld [vmem:[%s15] sm:$0xff]
      %v4618 = vld [vmem:[%s15 + $0x8] sm:$0xff]
      %v4619 = vadd.f32 %v4613, %v4617
      %v4620 = vadd.f32 %v4614, %v4618
      %v4621 = vadd.f32 %v4615, %v4617
      %v4622 = vadd.f32 %v4616, %v4618
      %v4623 = vpack.c.bf16 %v4620, %v4619
      %v4624 = vpack.c.bf16 %v4622, %v4621
      %v4625 = vld [vmem:[%s16] sm:$0xf]
      %v4626 = vld [vmem:[%s16 + $0x4] sm:$0xf]
      %v4627 = vld [vmem:[%s16 + $0x8] sm:$0xf]
      %v4628 = vld [vmem:[%s16 + $0xc] sm:$0xf]
      %v4629 = vld [vmem:[%s17] sm:$0x1]
      %v4631 = vlaneseq
      %v4632 = vshrl.u32 %v4631, 7
      %v4633 = vsub.s32 0, %v4632
      %v4634 = vrot.slane %v4629, %v4633
      %v4640 = vunpack.c.l.b16 %v4625
      %v4641 = vunpack.c.l.b16 %v4626
      %v4642 = vunpack.c.l.b16 %v4627
      %v4643 = vunpack.c.l.b16 %v4628
      %v4644 = vpack.c.b16 %v4641, %v4640
      %v4645 = vpack.c.b16 %v4643, %v4642
      %v4649 = vsel %vm4538, %v4623, 0
      %v4652 = vsel %vm4538, %v4624, 0
      %4654 = vmatprep.subr.bf16.mxu0 0
      %4655 = vmatpush1.bf16.msra.mxu0 %v4644
      %4656 = vmatprep.subr.bf16.mxu0 0
      %4657 = vmatpush1.bf16.msra.mxu0 %v4645
      %4658 = vmatprep.subr.bf16.mxu0 0
      %4659 = vmatpush1.bf16.msra.mxu0 0
      %4660 = vmatprep.subr.bf16.mxu0 0
      %4661 = vmatpush1.bf16.msra.mxu0 0
      %4662 = vmatprep.subr.bf16.mxu0 0
      %4663 = vmatpush1.bf16.msra.mxu0 0
      %4664 = vmatprep.subr.bf16.mxu0 0
      %4665 = vmatpush1.bf16.msra.mxu0 0
      %4666 = vmatprep.subr.bf16.mxu0 0
      %4667 = vmatpush1.bf16.msra.mxu0 0
      %4668 = vmatprep.subr.bf16.mxu0 0
      %4669 = vmatpush1.bf16.msra.mxu0 0
      %4670 = vmatprep.subr.bf16.mxu0 0
      %4671 = vmatpush1.bf16.msra.mxu0 0
      %4672 = vmatprep.subr.bf16.mxu0 0
      %4673 = vmatpush1.bf16.msra.mxu0 0
      %4674 = vmatprep.subr.bf16.mxu0 0
      %4675 = vmatpush1.bf16.msra.mxu0 0
      %4676 = vmatprep.subr.bf16.mxu0 0
      %4677 = vmatpush1.bf16.msra.mxu0 0
      %4678 = vmatprep.subr.bf16.mxu0 0
      %4679 = vmatpush1.bf16.msra.mxu0 0
      %4680 = vmatprep.subr.bf16.mxu0 0
      %4681 = vmatpush1.bf16.msra.mxu0 0
      %4682 = vmatprep.subr.bf16.mxu0 0
      %4683 = vmatpush1.bf16.msra.mxu0 0
      %4684 = vmatprep.subr.bf16.mxu0 0
      %4685 = vmatpush1.bf16.msra.mxu0 0
      %4686 = vmatprep.mubr.bf16.mxu0 0
      %4687 = vmatmul.mubr.bf16.gmra.mrb[0].mxu0 %v4649
      %v4688 = vpop.f32.mrb[0].mxu0
      %v4689 = vadd.f32 %v4634, %v4688
      %v4690 = vpop.f32.mrb[0].mxu0
      %v4691 = vpop.f32.mrb[0].mxu0
      %v4692 = vadd.f32 %v4634, %v4691
      %v4693 = vpop.f32.mrb[0].mxu0
      %4694 = vmatprep.mubr.bf16.mxu0 0
      %4695 = vmatmul.mubr.bf16.gmra.mrb[0].mxu0 %v4652
      %v4696 = vpop.f32.mrb[0].mxu0
      %v4697 = vadd.f32 %v4634, %v4696
      %v4698 = vpop.f32.mrb[0].mxu0
      %v4699 = vpop.f32.mrb[0].mxu0
      %v4700 = vadd.f32 %v4634, %v4699
      %v4701 = vpop.f32.mrb[0].mxu0
      %4702 = vdwg.mxu0
      %v4703 = vmax.f32 %v4689, 0.0
      %v4704 = vmax.f32 %v4692, 0.0
      %v4705 = vmax.f32 %v4697, 0.0
      %v4706 = vmax.f32 %v4700, 0.0
      %v4707 = vpack.c.bf16 %v4704, %v4703
      %v4708 = vpack.c.bf16 %v4706, %v4705
      %v4709 = vld [vmem:[%s18] sm:$0xf]
      %v4710 = vld [vmem:[%s18 + $0x4] sm:$0xf]
      %v4711 = vld [vmem:[%s18 + $0x8] sm:$0xf]
      %v4712 = vld [vmem:[%s18 + $0xc] sm:$0xf]
      %v4713 = vld [vmem:[#allocation2] sm:$0x1]
      %v4715 = vlaneseq
      %v4716 = vshrl.u32 %v4715, 7
      %v4717 = vsub.s32 0, %v4716
      %v4718 = vrot.slane %v4713, %v4717
      %v4724 = vunpack.c.l.b16 %v4709
      %v4725 = vunpack.c.l.b16 %v4710
      %v4726 = vunpack.c.l.b16 %v4711
      %v4727 = vunpack.c.l.b16 %v4712
      %v4728 = vpack.c.b16 %v4725, %v4724
      %v4729 = vpack.c.b16 %v4727, %v4726
      %v4733 = vsel %vm4538, %v4707, 0
      %v4736 = vsel %vm4538, %v4708, 0
      %4738 = vmatprep.subr.bf16.mxu0 0
      %4739 = vmatpush1.bf16.msra.mxu0 %v4728
      %4740 = vmatprep.subr.bf16.mxu0 0
      %4741 = vmatpush1.bf16.msra.mxu0 %v4729
      %4742 = vmatprep.subr.bf16.mxu0 0
      %4743 = vmatpush1.bf16.msra.mxu0 0
      %4744 = vmatprep.subr.bf16.mxu0 0
      %4745 = vmatpush1.bf16.msra.mxu0 0
      %4746 = vmatprep.subr.bf16.mxu0 0
      %4747 = vmatpush1.bf16.msra.mxu0 0
      %4748 = vmatprep.subr.bf16.mxu0 0
      %4749 = vmatpush1.bf16.msra.mxu0 0
      %4750 = vmatprep.subr.bf16.mxu0 0
      %4751 = vmatpush1.bf16.msra.mxu0 0
      %4752 = vmatprep.subr.bf16.mxu0 0
      %4753 = vmatpush1.bf16.msra.mxu0 0
      %4754 = vmatprep.subr.bf16.mxu0 0
      %4755 = vmatpush1.bf16.msra.mxu0 0
      %4756 = vmatprep.subr.bf16.mxu0 0
      %4757 = vmatpush1.bf16.msra.mxu0 0
      %4758 = vmatprep.subr.bf16.mxu0 0
      %4759 = vmatpush1.bf16.msra.mxu0 0
      %4760 = vmatprep.subr.bf16.mxu0 0
      %4761 = vmatpush1.bf16.msra.mxu0 0
      %4762 = vmatprep.subr.bf16.mxu0 0
      %4763 = vmatpush1.bf16.msra.mxu0 0
      %4764 = vmatprep.subr.bf16.mxu0 0
      %4765 = vmatpush1.bf16.msra.mxu0 0
      %4766 = vmatprep.subr.bf16.mxu0 0
      %4767 = vmatpush1.bf16.msra.mxu0 0
      %4768 = vmatprep.subr.bf16.mxu0 0
      %4769 = vmatpush1.bf16.msra.mxu0 0
      %4770 = vmatprep.mubr.bf16.mxu0 0
      %4771 = vmatmul.mubr.bf16.gmra.mrb[0].mxu0 %v4733
      %v4772 = vpop.f32.mrb[0].mxu0
      %v4773 = vadd.f32 %v4718, %v4772
      %v4774 = vpop.f32.mrb[0].mxu0
      %v4775 = vpop.f32.mrb[0].mxu0
      %v4776 = vadd.f32 %v4718, %v4775
      %v4777 = vpop.f32.mrb[0].mxu0
      %4778 = vmatprep.mubr.bf16.mxu0 0
      %4779 = vmatmul.mubr.bf16.gmra.mrb[0].mxu0 %v4736
      %v4780 = vpop.f32.mrb[0].mxu0
      %v4781 = vadd.f32 %v4718, %v4780
      %v4782 = vpop.f32.mrb[0].mxu0
      %v4783 = vpop.f32.mrb[0].mxu0
      %v4784 = vadd.f32 %v4718, %v4783
      %v4785 = vpop.f32.mrb[0].mxu0
      %4786 = vdwg.mxu0
      %vm4787 = vcmask 7168
      %4788 = vst.msk [vmem:[%s638] sm:$0xff] %vm4787, %v4773
      %4789 = vst.msk [vmem:[%s638 + $0x8] sm:$0xff] %vm4787, %v4776
      %4790 = vst.msk [vmem:[%s638 + $0x10] sm:$0xff] %vm4787, %v4781
      %4791 = vst.msk [vmem:[%s638 + $0x18] sm:$0xff] %vm4787, %v4784
      %s4792 = smul.u32 2, %s33
      %p4793 = scmp.lt.s32.totalorder %s4792, 3
      %s4794 = scalar_select %p4793, %s4792, 3
      %s4795 = smul.addr %s4794, 2
      %s4796 = smul.addr %s4795, 8
      %s4797 = scalar_lea.vmem %s20, %s4796
      // Predicated region
      $region101: #{_lambda_.1} parent=99 // pred_check
        %p4798 = pneg %p476
      $region102: #{_lambda_.1} parent=99 // pred_check_branch
        %4800 = sbr.rel (%p4798) target = $region104
      $region103: #{_lambda_.1} parent=99 // pred_region
        %s4801 = smul.u32 2, %s33
      $region104: #{_lambda_.1} parent=99 // pred_fallthru
        _
    $region100: #{_lambda_.1} parent=5 // pred_fallthru
      _
    %p4802 = scmp.le.s32.totalorder 2, %s28
    // Predicated region
    $region105: #{_lambda_.1} parent=5 // pred_check
      %p4803 = pneg %p4802
    $region106: #{_lambda_.1} parent=5 // pred_check_branch
      %4805 = sbr.rel (%p4803) target = $region108
    $region107: #{_lambda_.1} parent=5 // pred_region
      %s4806 = ssub.s32 %s28, 2
      // Predicated region
      $region109: #{_lambda_.1} parent=107 // pred_check
        %p4807 = pneg %p482
      $region110: #{_lambda_.1} parent=107 // pred_check_branch
        %4809 = sbr.rel (%p4807) target = $region112
      $region111: #{_lambda_.1} parent=107 // pred_region
        %s4810 = smul.u32 2, %s34
        %p4811 = scmp.lt.s32.totalorder %s4810, 3
        %s4812 = scalar_select %p4811, %s4810, 3
        %s4813 = smul.addr %s4812, 2
        %s4814 = smul.addr %s4813, 8
        %s4815 = scalar_lea.vmem %s20, %s4814
      $region112: #{_lambda_.1} parent=107 // pred_fallthru
        _
    $region108: #{_lambda_.1} parent=5 // pred_fallthru
      _
  $region6: #{_lambda_.1} parent=0 // loop_footer
    %s32 = sadd.s32 1, %s28
  $region7: #{_lambda_.1} parent=0 // loop_footer_branch
    %27 = sbr.rel target = $region3
  $region8: #{_lambda_.1} parent=0 // loop_exit
    _

</llo_original>
